<compile_context>
chip_gen: v7x
topology: tpu7x:2x2x1
jax: 0.10.0
libtpu: 0.0.40
codegen_flags: <defaults>
</compile_context>

<pallas_src>
import functools

import numpy as np

import jax
import jax.numpy as jnp
from jax.experimental import pallas as pl
from jax.experimental.pallas import tpu as pltpu


# ---------------------------------------------------------------------------
# Fused Pallas kernel: conv + maxpool + GRU stack + FC head
# ---------------------------------------------------------------------------

def _cnn_gru_kernel(*refs, T, B, S, H, L):
    """refs = [patches, conv_w2d, conv_b2d, sel,
               (w_ih, w_hh, b_ih, b_hh) * L, fc_w, fc_b, out, gi_scratch].

    patches : (4, Cin*K*K, B*S)   im2col columns, one slab per 2x2-pool offset,
                                  lane index = b*S + s (batch-major lanes).
    conv_w2d: (T, Cin*K*K)        C_out == T: each conv channel == one GRU step.
    conv_b2d: (T, B*S)            conv bias pre-broadcast along lanes.
    sel     : (B, T*B, T)         0/1 selectors, sel[b, t*B+b, t] = 1 (batch
                                  lanes -> sublanes relayout done on the MXU).
    gi_scratch (VMEM): (T*B, 3H)  hoisted layer-0 gate pre-activations.
    """
    f32 = jnp.float32
    p_ref, wc_ref, cb_ref, sel_ref = refs[0], refs[1], refs[2], refs[3]
    lref = refs[4:4 + 4 * L]
    fcw_ref = refs[4 + 4 * L]
    fcb_ref = refs[5 + 4 * L]
    out_ref = refs[6 + 4 * L]
    gi_ref = refs[7 + 4 * L]

    # ---- Conv2d as channel-major matmuls fused with the 2x2 max-pool --------
    # 4 dots (T,P)x(P,B*S) + elementwise max over pool offsets (VPU).
    # NOTE: on v6e/v7x the dot operands could be cast to bf16 (keep f32 accum);
    # kept f32 here so the reference check stays tight (v5e elementwise must
    # stay f32 regardless).
    wc = wc_ref[...]                                            # (T, P)
    y = jnp.dot(wc, p_ref[0], preferred_element_type=f32)
    for q in range(1, 4):
        y = jnp.maximum(y, jnp.dot(wc, p_ref[q], preferred_element_type=f32))
    pooled = y + cb_ref[...]                                    # (T, B*S); row t == GRU step t

    # ---- GRU weights / biases loaded & broadcast once ------------------------
    wih = [lref[4 * l][...] for l in range(L)]                  # (D_l, 3H)
    whh = [lref[4 * l + 1][...] for l in range(L)]              # (H, 3H)
    bih_b = [None] + [jnp.broadcast_to(lref[4 * l + 2][...], (B, 3 * H))
                      for l in range(1, L)]
    bhh_b = [jnp.broadcast_to(lref[4 * l + 3][...], (B, 3 * H)) for l in range(L)]
    b0i = lref[2][...]                                          # (1, 3H) layer-0 input bias

    # ---- Layer-0 input projection hoisted over all T steps -------------------
    # Relayout batch from lanes to sublanes ONCE via 0/1 selection matmuls
    # (pooled_tb[t*B+b, s] = pooled[t, b*S+s]), then a single stacked
    # (T*B,S)x(S,3H) projection.  Parked in VMEM scratch so the recurrence reads
    # each step with a plain contiguous slice — no per-step shuffles/concat.
    pooled_tb = jnp.dot(sel_ref[0], pooled[:, :S], preferred_element_type=f32)
    for b in range(1, B):
        pooled_tb = pooled_tb + jnp.dot(
            sel_ref[b], pooled[:, b * S:(b + 1) * S], preferred_element_type=f32)
    gi_ref[...] = jnp.dot(pooled_tb, wih[0], preferred_element_type=f32) + b0i

    def gru_cell(gi, h, w_hh, b_hh):
        # PyTorch gate columns: [r | z | n];  n = tanh(gi_n + r * (W_hn h + b_hn))
        gh = jnp.dot(h, w_hh, preferred_element_type=f32) + b_hh
        rz = jax.nn.sigmoid(gi[:, :2 * H] + gh[:, :2 * H])
        n = jnp.tanh(gi[:, 2 * H:] + rz[:, :H] * gh[:, 2 * H:])
        z = rz[:, H:]
        return (1.0 - z) * n + z * h

    # ---- Time recurrence: statically unrolled (T=10), layers per step --------
    # (Layer-1 gi/gh dots kept separate on purpose: they are data-independent so
    # fusing them would not shorten the chain but would serialize gh on hs[0].)
    # TODO(synk): switch to lax.fori_loop reading gi_ref if T/L ever grow.
    hs = [jnp.zeros((B, H), f32) for _ in range(L)]
    for t in range(T):
        gi = gi_ref[pl.ds(t * B, B), :]                         # (B, 3H) contiguous load
        hs[0] = gru_cell(gi, hs[0], whh[0], bhh_b[0])
        for l in range(1, L):
            gi = jnp.dot(hs[l - 1], wih[l], preferred_element_type=f32) + bih_b[l]
            hs[l] = gru_cell(gi, hs[l], whh[l], bhh_b[l])

    # ---- FC head on the last timestep of the top layer -----------------------
    out_ref[...] = (jnp.dot(hs[L - 1], fcw_ref[...], preferred_element_type=f32)
                    + fcb_ref[...])


# ---------------------------------------------------------------------------
# JAX glue
# ---------------------------------------------------------------------------

def _im2col_pool_patches(x, K, Hp, Wp):
    """(B, Cin, H, W) -> (4, Cin*K*K, B*Hp*Wp); one im2col slab per 2x2-pool
    offset, lane index = b*S + s (batch-major lanes)."""
    B, Cin, _, _ = x.shape
    S = Hp * Wp
    slabs = []
    for dy in range(2):
        for dx in range(2):
            rows = []
            for ci in range(Cin):
                for ky in range(K):
                    for kx in range(K):
                        sl = x[:, ci,
                               dy + ky: dy + ky + 2 * Hp: 2,
                               dx + kx: dx + kx + 2 * Wp: 2]     # (B, Hp, Wp)
                        rows.append(sl.reshape(B * S))
            slabs.append(jnp.stack(rows, axis=0))                # (P, B*S)
    return jnp.stack(slabs, axis=0)                              # (4, P, B*S)


def _batch_interleave_selectors(T, B):
    """0/1 matrices sel[b] (T*B, T) with sel[b, t*B + b, t] = 1: used in-kernel to
    move the batch axis from lanes to sublanes with MXU matmuls."""
    sel = np.zeros((B, T * B, T), np.float32)
    for b in range(B):
        sel[b, np.arange(T) * B + b, np.arange(T)] = 1.0
    return jnp.asarray(sel)


def cnn_gru_forward(x, params):
    """Equivalent of CNNGRU.forward. x: (B, Cin, Hin, Win) float32."""
    conv_w = params["conv_w"]                 # (Cout, Cin, K, K)
    conv_b = params["conv_b"]                 # (Cout,)
    Cout, Cin, K, _ = conv_w.shape
    x = x.astype(jnp.float32)
    Bsz, _, Hin, Win = x.shape
    Ho, Wo = Hin - K + 1, Win - K + 1
    Hp, Wp = Ho // 2, Wo // 2
    S = Hp * Wp
    T = 10                                    # x.view(in_size, 10, -1) in the PyTorch module
    assert Cout == T, "kernel maps each conv channel to one GRU timestep (needs out_channels == 10)"
    Hhid = params["gru"][0][1].shape[0]
    L = len(params["gru"])
    C = params["fc_w"].shape[1]
    assert params["gru"][0][0].shape[0] == S, "GRU input_size must equal pooled spatial size"

    patches = _im2col_pool_patches(x, K, Hp, Wp)                  # (4, Cin*K*K, B*S)
    wc = conv_w.reshape(Cout, Cin * K * K)
    cb = jnp.broadcast_to(conv_b.reshape(Cout, 1), (Cout, Bsz * S))
    sel = _batch_interleave_selectors(T, Bsz)                     # (B, T*B, T)

    args = [patches, wc, cb, sel]
    for (w_ih, w_hh, b_ih, b_hh) in params["gru"]:
        args += [w_ih, w_hh, b_ih, b_hh]
    args += [params["fc_w"], params["fc_b"]]

    kernel = functools.partial(_cnn_gru_kernel, T=T, B=Bsz, S=S, H=Hhid, L=L)
    vmem = pltpu.MemorySpace.VMEM
    # No grid: whole-array VMEM operands, single kernel invocation (nothing to
    # pipeline at this footprint).  A parallel batch grid axis only pays off on
    # v7x if the batch grows well past this toy size.
    return pl.pallas_call(
        kernel,
        out_shape=jax.ShapeDtypeStruct((Bsz, C), jnp.float32),
        in_specs=[pl.BlockSpec(memory_space=vmem) for _ in args],
        out_specs=pl.BlockSpec(memory_space=vmem),
        scratch_shapes=[pltpu.VMEM((T * Bsz, 3 * Hhid), jnp.float32)],
    )(*args)


# ---------------------------------------------------------------------------
# Parameters (deterministic uniform init, PyTorch-style bounds)
# ---------------------------------------------------------------------------

def init_params(key, *, in_channels, out_channels, kernel_size, input_size,
                hidden_size, num_layers, num_classes):
    def u(k, shape, bound):
        return jax.random.uniform(k, shape, jnp.float32, -bound, bound)

    keys = iter(jax.random.split(key, 2 + 4 * num_layers + 2))
    kc = (in_channels * kernel_size * kernel_size) ** -0.5
    params = {
        "conv_w": u(next(keys), (out_channels, in_channels, kernel_size, kernel_size), kc),
        "conv_b": u(next(keys), (out_channels,), kc),
        "gru": [],
    }
    kh = hidden_size ** -0.5
    for layer in range(num_layers):
        d_in = input_size if layer == 0 else hidden_size
        w_ih = u(next(keys), (d_in, 3 * hidden_size), kh)        # transposed vs PyTorch (3H, D)
        w_hh = u(next(keys), (hidden_size, 3 * hidden_size), kh)
        b_ih = u(next(keys), (1, 3 * hidden_size), kh)
        b_hh = u(next(keys), (1, 3 * hidden_size), kh)
        params["gru"].append((w_ih, w_hh, b_ih, b_hh))
    kf = hidden_size ** -0.5
    params["fc_w"] = u(next(keys), (hidden_size, num_classes), kf)
    params["fc_b"] = u(next(keys), (1, num_classes), kf)
    return params


# ---------------------------------------------------------------------------
# Pure-JAX reference (silent correctness check)
# ---------------------------------------------------------------------------

def _ref_forward(x, params):
    x = x.astype(jnp.float32)
    y = jax.lax.conv_general_dilated(
        x, params["conv_w"], window_strides=(1, 1), padding="VALID",
        dimension_numbers=("NCHW", "OIHW", "NCHW"))
    y = y + params["conv_b"].reshape(1, -1, 1, 1)
    B, C, Ho, Wo = y.shape
    Hp, Wp = Ho // 2, Wo // 2
    y = y[:, :, :2 * Hp, :2 * Wp].reshape(B, C, Hp, 2, Wp, 2).max(axis=(3, 5))
    h = y.reshape(B, 10, -1)                                   # x.view(in_size, 10, -1)
    Hd = params["gru"][0][1].shape[0]
    for (w_ih, w_hh, b_ih, b_hh) in params["gru"]:
        def step(hprev, xt):
            gi = xt @ w_ih + b_ih[0]
            gh = hprev @ w_hh + b_hh[0]
            r = jax.nn.sigmoid(gi[:, :Hd] + gh[:, :Hd])
            z = jax.nn.sigmoid(gi[:, Hd:2 * Hd] + gh[:, Hd:2 * Hd])
            n = jnp.tanh(gi[:, 2 * Hd:] + r * gh[:, 2 * Hd:])
            hn = (1.0 - z) * n + z * hprev
            return hn, hn
        init = jnp.zeros((B, Hd), jnp.float32)
        _, outs = jax.lax.scan(step, init, jnp.transpose(h, (1, 0, 2)))
        h = jnp.transpose(outs, (1, 0, 2))
    return h[:, -1, :] @ params["fc_w"] + params["fc_b"]


# ---------------------------------------------------------------------------
# Main
# ---------------------------------------------------------------------------

if __name__ == "__main__":
    batch = 2
    in_channels = 4
    spatial = 16
    out_channels = 10          # must be 10 so x.view(B, 10, -1) == one channel per step
    kernel_size = 5
    hidden_size = 32
    num_layers = 2
    num_classes = 10
    # conv: 16 -> 12, pool: 12 -> 6  =>  per-step feature size = 6*6 = 36
    input_size = ((spatial - kernel_size + 1) // 2) ** 2

    key = jax.random.PRNGKey(0)
    pkey, xkey = jax.random.split(key)
    params = init_params(pkey, in_channels=in_channels, out_channels=out_channels,
                         kernel_size=kernel_size, input_size=input_size,
                         hidden_size=hidden_size, num_layers=num_layers,
                         num_classes=num_classes)
    x = jax.random.normal(xkey, (batch, in_channels, spatial, spatial), jnp.float32)

    out = jax.block_until_ready(jax.jit(cnn_gru_forward)(x, params))
    ref = _ref_forward(x, params)

    assert out.shape == (batch, num_classes)
    assert jnp.allclose(out, ref, rtol=2e-2, atol=2e-2), "mismatch vs JAX reference"

    print("KERNEL_OK")
</pallas_src>

<mosaic_0001>
module attributes {stable_mosaic.version = 11 : i64} {
  func.func @_cnn_gru_kernel(%arg0: memref<4x100x72xf32, #tpu.memory_space<vmem>>, %arg1: memref<10x100xf32, #tpu.memory_space<vmem>>, %arg2: memref<10x72xf32, #tpu.memory_space<vmem>>, %arg3: memref<2x20x10xf32, #tpu.memory_space<vmem>>, %arg4: memref<36x96xf32, #tpu.memory_space<vmem>>, %arg5: memref<32x96xf32, #tpu.memory_space<vmem>>, %arg6: memref<1x96xf32, #tpu.memory_space<vmem>>, %arg7: memref<1x96xf32, #tpu.memory_space<vmem>>, %arg8: memref<32x96xf32, #tpu.memory_space<vmem>>, %arg9: memref<32x96xf32, #tpu.memory_space<vmem>>, %arg10: memref<1x96xf32, #tpu.memory_space<vmem>>, %arg11: memref<1x96xf32, #tpu.memory_space<vmem>>, %arg12: memref<32x10xf32, #tpu.memory_space<vmem>>, %arg13: memref<1x10xf32, #tpu.memory_space<vmem>>, %arg14: memref<2x10xf32, #tpu.memory_space<vmem>>, %arg15: memref<20x96xf32, #tpu.memory_space<vmem>>) attributes {dimension_semantics = [], scalar_prefetch = 0 : i64, scratch_operands = 1 : i64, tpu.core_type = #tpu.core_type<tc>} {
    %c0 = arith.constant 0 : index
    %c0_0 = arith.constant 0 : index
    %0 = vector.load %arg1[%c0, %c0_0] : memref<10x100xf32, #tpu.memory_space<vmem>>, vector<10x100xf32>
    %c0_1 = arith.constant 0 : index
    %c0_2 = arith.constant 0 : index
    %c0_3 = arith.constant 0 : index
    %1 = vector.load %arg0[%c0_1, %c0_2, %c0_3] : memref<4x100x72xf32, #tpu.memory_space<vmem>>, vector<1x100x72xf32>
    %2 = vector.shape_cast %1 : vector<1x100x72xf32> to vector<100x72xf32>
    %cst = arith.constant dense<0.000000e+00> : vector<10x72xf32>
    %3 = tpu.matmul %0, %2, %cst {dimension_numbers = #tpu.dot_dimension_numbers<[1], [0], [0], [1], [0, 0, 1, 1], [], []>} : vector<10x100xf32>, vector<100x72xf32>, vector<10x72xf32> -> vector<10x72xf32>
    %c1 = arith.constant 1 : index
    %c0_4 = arith.constant 0 : index
    %c0_5 = arith.constant 0 : index
    %4 = vector.load %arg0[%c1, %c0_4, %c0_5] : memref<4x100x72xf32, #tpu.memory_space<vmem>>, vector<1x100x72xf32>
    %5 = vector.shape_cast %4 : vector<1x100x72xf32> to vector<100x72xf32>
    %cst_6 = arith.constant dense<0.000000e+00> : vector<10x72xf32>
    %6 = tpu.matmul %0, %5, %cst_6 {dimension_numbers = #tpu.dot_dimension_numbers<[1], [0], [0], [1], [0, 0, 1, 1], [], []>} : vector<10x100xf32>, vector<100x72xf32>, vector<10x72xf32> -> vector<10x72xf32>
    %7 = arith.maximumf %3, %6 : vector<10x72xf32>
    %c2 = arith.constant 2 : index
    %c0_7 = arith.constant 0 : index
    %c0_8 = arith.constant 0 : index
    %8 = vector.load %arg0[%c2, %c0_7, %c0_8] : memref<4x100x72xf32, #tpu.memory_space<vmem>>, vector<1x100x72xf32>
    %9 = vector.shape_cast %8 : vector<1x100x72xf32> to vector<100x72xf32>
    %cst_9 = arith.constant dense<0.000000e+00> : vector<10x72xf32>
    %10 = tpu.matmul %0, %9, %cst_9 {dimension_numbers = #tpu.dot_dimension_numbers<[1], [0], [0], [1], [0, 0, 1, 1], [], []>} : vector<10x100xf32>, vector<100x72xf32>, vector<10x72xf32> -> vector<10x72xf32>
    %11 = arith.maximumf %7, %10 : vector<10x72xf32>
    %c3 = arith.constant 3 : index
    %c0_10 = arith.constant 0 : index
    %c0_11 = arith.constant 0 : index
    %12 = vector.load %arg0[%c3, %c0_10, %c0_11] : memref<4x100x72xf32, #tpu.memory_space<vmem>>, vector<1x100x72xf32>
    %13 = vector.shape_cast %12 : vector<1x100x72xf32> to vector<100x72xf32>
    %cst_12 = arith.constant dense<0.000000e+00> : vector<10x72xf32>
    %14 = tpu.matmul %0, %13, %cst_12 {dimension_numbers = #tpu.dot_dimension_numbers<[1], [0], [0], [1], [0, 0, 1, 1], [], []>} : vector<10x100xf32>, vector<100x72xf32>, vector<10x72xf32> -> vector<10x72xf32>
    %15 = arith.maximumf %11, %14 : vector<10x72xf32>
    %c0_13 = arith.constant 0 : index
    %c0_14 = arith.constant 0 : index
    %16 = vector.load %arg2[%c0_13, %c0_14] : memref<10x72xf32, #tpu.memory_space<vmem>>, vector<10x72xf32>
    %17 = arith.addf %15, %16 : vector<10x72xf32>
    %c0_15 = arith.constant 0 : index
    %c0_16 = arith.constant 0 : index
    %18 = vector.load %arg4[%c0_15, %c0_16] : memref<36x96xf32, #tpu.memory_space<vmem>>, vector<36x96xf32>
    %c0_17 = arith.constant 0 : index
    %c0_18 = arith.constant 0 : index
    %19 = vector.load %arg8[%c0_17, %c0_18] : memref<32x96xf32, #tpu.memory_space<vmem>>, vector<32x96xf32>
    %c0_19 = arith.constant 0 : index
    %c0_20 = arith.constant 0 : index
    %20 = vector.load %arg5[%c0_19, %c0_20] : memref<32x96xf32, #tpu.memory_space<vmem>>, vector<32x96xf32>
    %c0_21 = arith.constant 0 : index
    %c0_22 = arith.constant 0 : index
    %21 = vector.load %arg9[%c0_21, %c0_22] : memref<32x96xf32, #tpu.memory_space<vmem>>, vector<32x96xf32>
    %c0_23 = arith.constant 0 : index
    %c0_24 = arith.constant 0 : index
    %22 = vector.load %arg10[%c0_23, %c0_24] : memref<1x96xf32, #tpu.memory_space<vmem>>, vector<1x96xf32>
    %23 = vector.shape_cast %22 : vector<1x96xf32> to vector<1x96xf32>
    %24 = vector.broadcast %23 : vector<1x96xf32> to vector<2x96xf32>
    %c0_25 = arith.constant 0 : index
    %c0_26 = arith.constant 0 : index
    %25 = vector.load %arg7[%c0_25, %c0_26] : memref<1x96xf32, #tpu.memory_space<vmem>>, vector<1x96xf32>
    %26 = vector.shape_cast %25 : vector<1x96xf32> to vector<1x96xf32>
    %27 = vector.broadcast %26 : vector<1x96xf32> to vector<2x96xf32>
    %c0_27 = arith.constant 0 : index
    %c0_28 = arith.constant 0 : index
    %28 = vector.load %arg11[%c0_27, %c0_28] : memref<1x96xf32, #tpu.memory_space<vmem>>, vector<1x96xf32>
    %29 = vector.shape_cast %28 : vector<1x96xf32> to vector<1x96xf32>
    %30 = vector.broadcast %29 : vector<1x96xf32> to vector<2x96xf32>
    %c0_29 = arith.constant 0 : index
    %c0_30 = arith.constant 0 : index
    %31 = vector.load %arg6[%c0_29, %c0_30] : memref<1x96xf32, #tpu.memory_space<vmem>>, vector<1x96xf32>
    %c0_31 = arith.constant 0 : index
    %c0_32 = arith.constant 0 : index
    %c0_33 = arith.constant 0 : index
    %32 = vector.load %arg3[%c0_31, %c0_32, %c0_33] : memref<2x20x10xf32, #tpu.memory_space<vmem>>, vector<1x20x10xf32>
    %33 = vector.shape_cast %32 : vector<1x20x10xf32> to vector<20x10xf32>
    %34 = vector.extract_strided_slice %17 {offsets = [0, 0], sizes = [10, 36], strides = [1, 1]} : vector<10x72xf32> to vector<10x36xf32>
    %cst_34 = arith.constant dense<0.000000e+00> : vector<20x36xf32>
    %35 = tpu.matmul %33, %34, %cst_34 {dimension_numbers = #tpu.dot_dimension_numbers<[1], [0], [0], [1], [0, 0, 1, 1], [], []>} : vector<20x10xf32>, vector<10x36xf32>, vector<20x36xf32> -> vector<20x36xf32>
    %c1_35 = arith.constant 1 : index
    %c0_36 = arith.constant 0 : index
    %c0_37 = arith.constant 0 : index
    %36 = vector.load %arg3[%c1_35, %c0_36, %c0_37] : memref<2x20x10xf32, #tpu.memory_space<vmem>>, vector<1x20x10xf32>
    %37 = vector.shape_cast %36 : vector<1x20x10xf32> to vector<20x10xf32>
    %38 = vector.extract_strided_slice %17 {offsets = [0, 36], sizes = [10, 36], strides = [1, 1]} : vector<10x72xf32> to vector<10x36xf32>
    %cst_38 = arith.constant dense<0.000000e+00> : vector<20x36xf32>
    %39 = tpu.matmul %37, %38, %cst_38 {dimension_numbers = #tpu.dot_dimension_numbers<[1], [0], [0], [1], [0, 0, 1, 1], [], []>} : vector<20x10xf32>, vector<10x36xf32>, vector<20x36xf32> -> vector<20x36xf32>
    %40 = arith.addf %35, %39 : vector<20x36xf32>
    %cst_39 = arith.constant dense<0.000000e+00> : vector<20x96xf32>
    %41 = tpu.matmul %40, %18, %cst_39 {dimension_numbers = #tpu.dot_dimension_numbers<[1], [0], [0], [1], [0, 0, 1, 1], [], []>} : vector<20x36xf32>, vector<36x96xf32>, vector<20x96xf32> -> vector<20x96xf32>
    %42 = vector.broadcast %31 : vector<1x96xf32> to vector<20x96xf32>
    %43 = arith.addf %41, %42 : vector<20x96xf32>
    %c0_40 = arith.constant 0 : index
    %c0_41 = arith.constant 0 : index
    %44 = vector.load %arg15[%c0_40, %c0_41] : memref<20x96xf32, #tpu.memory_space<vmem>>, vector<20x96xf32>
    tpu.vector_store %arg15[%c0_40, %c0_41], %43 {strides = array<i32>} : memref<20x96xf32, #tpu.memory_space<vmem>>, vector<20x96xf32>,
    %cst_42 = arith.constant 0.000000e+00 : f32
    %45 = vector.broadcast %cst_42 : f32 to vector<2x32xf32>
    %cst_43 = arith.constant 0.000000e+00 : f32
    %46 = vector.broadcast %cst_43 : f32 to vector<2x32xf32>
    %c0_44 = arith.constant 0 : index
    %c0_45 = arith.constant 0 : index
    %47 = vector.load %arg15[%c0_44, %c0_45] : memref<20x96xf32, #tpu.memory_space<vmem>>, vector<2x96xf32>
    %cst_46 = arith.constant dense<0.000000e+00> : vector<2x96xf32>
    %48 = tpu.matmul %45, %20, %cst_46 {dimension_numbers = #tpu.dot_dimension_numbers<[1], [0], [0], [1], [0, 0, 1, 1], [], []>} : vector<2x32xf32>, vector<32x96xf32>, vector<2x96xf32> -> vector<2x96xf32>
    %49 = arith.addf %48, %27 : vector<2x96xf32>
    %50 = vector.extract_strided_slice %47 {offsets = [0, 0], sizes = [2, 64], strides = [1, 1]} : vector<2x96xf32> to vector<2x64xf32>
    %51 = vector.extract_strided_slice %49 {offsets = [0, 0], sizes = [2, 64], strides = [1, 1]} : vector<2x96xf32> to vector<2x64xf32>
    %52 = arith.addf %50, %51 : vector<2x64xf32>
    %53 = arith.negf %52 : vector<2x64xf32>
    %54 = math.exp %53 : vector<2x64xf32>
    %cst_47 = arith.constant 1.000000e+00 : f32
    %55 = vector.broadcast %cst_47 : f32 to vector<2x64xf32>
    %56 = arith.addf %55, %54 : vector<2x64xf32>
    %57 = arith.divf %55, %56 : vector<2x64xf32>
    %58 = vector.extract_strided_slice %47 {offsets = [0, 64], sizes = [2, 32], strides = [1, 1]} : vector<2x96xf32> to vector<2x32xf32>
    %59 = vector.extract_strided_slice %57 {offsets = [0, 0], sizes = [2, 32], strides = [1, 1]} : vector<2x64xf32> to vector<2x32xf32>
    %60 = vector.extract_strided_slice %49 {offsets = [0, 64], sizes = [2, 32], strides = [1, 1]} : vector<2x96xf32> to vector<2x32xf32>
    %61 = arith.mulf %59, %60 : vector<2x32xf32>
    %62 = arith.addf %58, %61 : vector<2x32xf32>
    %63 = math.tanh %62 : vector<2x32xf32>
    %64 = vector.extract_strided_slice %57 {offsets = [0, 32], sizes = [2, 32], strides = [1, 1]} : vector<2x64xf32> to vector<2x32xf32>
    %cst_48 = arith.constant 1.000000e+00 : f32
    %65 = vector.broadcast %cst_48 : f32 to vector<2x32xf32>
    %66 = arith.subf %65, %64 : vector<2x32xf32>
    %67 = arith.mulf %66, %63 : vector<2x32xf32>
    %68 = arith.mulf %64, %45 : vector<2x32xf32>
    %69 = arith.addf %67, %68 : vector<2x32xf32>
    %cst_49 = arith.constant dense<0.000000e+00> : vector<2x96xf32>
    %70 = tpu.matmul %69, %19, %cst_49 {dimension_numbers = #tpu.dot_dimension_numbers<[1], [0], [0], [1], [0, 0, 1, 1], [], []>} : vector<2x32xf32>, vector<32x96xf32>, vector<2x96xf32> -> vector<2x96xf32>
    %71 = arith.addf %70, %24 : vector<2x96xf32>
    %cst_50 = arith.constant dense<0.000000e+00> : vector<2x96xf32>
    %72 = tpu.matmul %46, %21, %cst_50 {dimension_numbers = #tpu.dot_dimension_numbers<[1], [0], [0], [1], [0, 0, 1, 1], [], []>} : vector<2x32xf32>, vector<32x96xf32>, vector<2x96xf32> -> vector<2x96xf32>
    %73 = arith.addf %72, %30 : vector<2x96xf32>
    %74 = vector.extract_strided_slice %71 {offsets = [0, 0], sizes = [2, 64], strides = [1, 1]} : vector<2x96xf32> to vector<2x64xf32>
    %75 = vector.extract_strided_slice %73 {offsets = [0, 0], sizes = [2, 64], strides = [1, 1]} : vector<2x96xf32> to vector<2x64xf32>
    %76 = arith.addf %74, %75 : vector<2x64xf32>
    %77 = arith.negf %76 : vector<2x64xf32>
    %78 = math.exp %77 : vector<2x64xf32>
    %cst_51 = arith.constant 1.000000e+00 : f32
    %79 = vector.broadcast %cst_51 : f32 to vector<2x64xf32>
    %80 = arith.addf %79, %78 : vector<2x64xf32>
    %81 = arith.divf %79, %80 : vector<2x64xf32>
    %82 = vector.extract_strided_slice %71 {offsets = [0, 64], sizes = [2, 32], strides = [1, 1]} : vector<2x96xf32> to vector<2x32xf32>
    %83 = vector.extract_strided_slice %81 {offsets = [0, 0], sizes = [2, 32], strides = [1, 1]} : vector<2x64xf32> to vector<2x32xf32>
    %84 = vector.extract_strided_slice %73 {offsets = [0, 64], sizes = [2, 32], strides = [1, 1]} : vector<2x96xf32> to vector<2x32xf32>
    %85 = arith.mulf %83, %84 : vector<2x32xf32>
    %86 = arith.addf %82, %85 : vector<2x32xf32>
    %87 = math.tanh %86 : vector<2x32xf32>
    %88 = vector.extract_strided_slice %81 {offsets = [0, 32], sizes = [2, 32], strides = [1, 1]} : vector<2x64xf32> to vector<2x32xf32>
    %cst_52 = arith.constant 1.000000e+00 : f32
    %89 = vector.broadcast %cst_52 : f32 to vector<2x32xf32>
    %90 = arith.subf %89, %88 : vector<2x32xf32>
    %91 = arith.mulf %90, %87 : vector<2x32xf32>
    %92 = arith.mulf %88, %46 : vector<2x32xf32>
    %93 = arith.addf %91, %92 : vector<2x32xf32>
    %c2_53 = arith.constant 2 : index
    %c0_54 = arith.constant 0 : index
    %94 = vector.load %arg15[%c2_53, %c0_54] : memref<20x96xf32, #tpu.memory_space<vmem>>, vector<2x96xf32>
    %cst_55 = arith.constant dense<0.000000e+00> : vector<2x96xf32>
    %95 = tpu.matmul %69, %20, %cst_55 {dimension_numbers = #tpu.dot_dimension_numbers<[1], [0], [0], [1], [0, 0, 1, 1], [], []>} : vector<2x32xf32>, vector<32x96xf32>, vector<2x96xf32> -> vector<2x96xf32>
    %96 = arith.addf %95, %27 : vector<2x96xf32>
    %97 = vector.extract_strided_slice %94 {offsets = [0, 0], sizes = [2, 64], strides = [1, 1]} : vector<2x96xf32> to vector<2x64xf32>
    %98 = vector.extract_strided_slice %96 {offsets = [0, 0], sizes = [2, 64], strides = [1, 1]} : vector<2x96xf32> to vector<2x64xf32>
    %99 = arith.addf %97, %98 : vector<2x64xf32>
    %100 = arith.negf %99 : vector<2x64xf32>
    %101 = math.exp %100 : vector<2x64xf32>
    %cst_56 = arith.constant 1.000000e+00 : f32
    %102 = vector.broadcast %cst_56 : f32 to vector<2x64xf32>
    %103 = arith.addf %102, %101 : vector<2x64xf32>
    %104 = arith.divf %102, %103 : vector<2x64xf32>
    %105 = vector.extract_strided_slice %94 {offsets = [0, 64], sizes = [2, 32], strides = [1, 1]} : vector<2x96xf32> to vector<2x32xf32>
    %106 = vector.extract_strided_slice %104 {offsets = [0, 0], sizes = [2, 32], strides = [1, 1]} : vector<2x64xf32> to vector<2x32xf32>
    %107 = vector.extract_strided_slice %96 {offsets = [0, 64], sizes = [2, 32], strides = [1, 1]} : vector<2x96xf32> to vector<2x32xf32>
    %108 = arith.mulf %106, %107 : vector<2x32xf32>
    %109 = arith.addf %105, %108 : vector<2x32xf32>
    %110 = math.tanh %109 : vector<2x32xf32>
    %111 = vector.extract_strided_slice %104 {offsets = [0, 32], sizes = [2, 32], strides = [1, 1]} : vector<2x64xf32> to vector<2x32xf32>
    %cst_57 = arith.constant 1.000000e+00 : f32
    %112 = vector.broadcast %cst_57 : f32 to vector<2x32xf32>
    %113 = arith.subf %112, %111 : vector<2x32xf32>
    %114 = arith.mulf %113, %110 : vector<2x32xf32>
    %115 = arith.mulf %111, %69 : vector<2x32xf32>
    %116 = arith.addf %114, %115 : vector<2x32xf32>
    %cst_58 = arith.constant dense<0.000000e+00> : vector<2x96xf32>
    %117 = tpu.matmul %116, %19, %cst_58 {dimension_numbers = #tpu.dot_dimension_numbers<[1], [0], [0], [1], [0, 0, 1, 1], [], []>} : vector<2x32xf32>, vector<32x96xf32>, vector<2x96xf32> -> vector<2x96xf32>
    %118 = arith.addf %117, %24 : vector<2x96xf32>
    %cst_59 = arith.constant dense<0.000000e+00> : vector<2x96xf32>
    %119 = tpu.matmul %93, %21, %cst_59 {dimension_numbers = #tpu.dot_dimension_numbers<[1], [0], [0], [1], [0, 0, 1, 1], [], []>} : vector<2x32xf32>, vector<32x96xf32>, vector<2x96xf32> -> vector<2x96xf32>
    %120 = arith.addf %119, %30 : vector<2x96xf32>
    %121 = vector.extract_strided_slice %118 {offsets = [0, 0], sizes = [2, 64], strides = [1, 1]} : vector<2x96xf32> to vector<2x64xf32>
    %122 = vector.extract_strided_slice %120 {offsets = [0, 0], sizes = [2, 64], strides = [1, 1]} : vector<2x96xf32> to vector<2x64xf32>
    %123 = arith.addf %121, %122 : vector<2x64xf32>
    %124 = arith.negf %123 : vector<2x64xf32>
    %125 = math.exp %124 : vector<2x64xf32>
    %cst_60 = arith.constant 1.000000e+00 : f32
    %126 = vector.broadcast %cst_60 : f32 to vector<2x64xf32>
    %127 = arith.addf %126, %125 : vector<2x64xf32>
    %128 = arith.divf %126, %127 : vector<2x64xf32>
    %129 = vector.extract_strided_slice %118 {offsets = [0, 64], sizes = [2, 32], strides = [1, 1]} : vector<2x96xf32> to vector<2x32xf32>
    %130 = vector.extract_strided_slice %128 {offsets = [0, 0], sizes = [2, 32], strides = [1, 1]} : vector<2x64xf32> to vector<2x32xf32>
    %131 = vector.extract_strided_slice %120 {offsets = [0, 64], sizes = [2, 32], strides = [1, 1]} : vector<2x96xf32> to vector<2x32xf32>
    %132 = arith.mulf %130, %131 : vector<2x32xf32>
    %133 = arith.addf %129, %132 : vector<2x32xf32>
    %134 = math.tanh %133 : vector<2x32xf32>
    %135 = vector.extract_strided_slice %128 {offsets = [0, 32], sizes = [2, 32], strides = [1, 1]} : vector<2x64xf32> to vector<2x32xf32>
    %cst_61 = arith.constant 1.000000e+00 : f32
    %136 = vector.broadcast %cst_61 : f32 to vector<2x32xf32>
    %137 = arith.subf %136, %135 : vector<2x32xf32>
    %138 = arith.mulf %137, %134 : vector<2x32xf32>
    %139 = arith.mulf %135, %93 : vector<2x32xf32>
    %140 = arith.addf %138, %139 : vector<2x32xf32>
    %c4 = arith.constant 4 : index
    %c0_62 = arith.constant 0 : index
    %141 = vector.load %arg15[%c4, %c0_62] : memref<20x96xf32, #tpu.memory_space<vmem>>, vector<2x96xf32>
    %cst_63 = arith.constant dense<0.000000e+00> : vector<2x96xf32>
    %142 = tpu.matmul %116, %20, %cst_63 {dimension_numbers = #tpu.dot_dimension_numbers<[1], [0], [0], [1], [0, 0, 1, 1], [], []>} : vector<2x32xf32>, vector<32x96xf32>, vector<2x96xf32> -> vector<2x96xf32>
    %143 = arith.addf %142, %27 : vector<2x96xf32>
    %144 = vector.extract_strided_slice %141 {offsets = [0, 0], sizes = [2, 64], strides = [1, 1]} : vector<2x96xf32> to vector<2x64xf32>
    %145 = vector.extract_strided_slice %143 {offsets = [0, 0], sizes = [2, 64], strides = [1, 1]} : vector<2x96xf32> to vector<2x64xf32>
    %146 = arith.addf %144, %145 : vector<2x64xf32>
    %147 = arith.negf %146 : vector<2x64xf32>
    %148 = math.exp %147 : vector<2x64xf32>
    %cst_64 = arith.constant 1.000000e+00 : f32
    %149 = vector.broadcast %cst_64 : f32 to vector<2x64xf32>
    %150 = arith.addf %149, %148 : vector<2x64xf32>
    %151 = arith.divf %149, %150 : vector<2x64xf32>
    %152 = vector.extract_strided_slice %141 {offsets = [0, 64], sizes = [2, 32], strides = [1, 1]} : vector<2x96xf32> to vector<2x32xf32>
    %153 = vector.extract_strided_slice %151 {offsets = [0, 0], sizes = [2, 32], strides = [1, 1]} : vector<2x64xf32> to vector<2x32xf32>
    %154 = vector.extract_strided_slice %143 {offsets = [0, 64], sizes = [2, 32], strides = [1, 1]} : vector<2x96xf32> to vector<2x32xf32>
    %155 = arith.mulf %153, %154 : vector<2x32xf32>
    %156 = arith.addf %152, %155 : vector<2x32xf32>
    %157 = math.tanh %156 : vector<2x32xf32>
    %158 = vector.extract_strided_slice %151 {offsets = [0, 32], sizes = [2, 32], strides = [1, 1]} : vector<2x64xf32> to vector<2x32xf32>
    %cst_65 = arith.constant 1.000000e+00 : f32
    %159 = vector.broadcast %cst_65 : f32 to vector<2x32xf32>
    %160 = arith.subf %159, %158 : vector<2x32xf32>
    %161 = arith.mulf %160, %157 : vector<2x32xf32>
    %162 = arith.mulf %158, %116 : vector<2x32xf32>
    %163 = arith.addf %161, %162 : vector<2x32xf32>
    %cst_66 = arith.constant dense<0.000000e+00> : vector<2x96xf32>
    %164 = tpu.matmul %163, %19, %cst_66 {dimension_numbers = #tpu.dot_dimension_numbers<[1], [0], [0], [1], [0, 0, 1, 1], [], []>} : vector<2x32xf32>, vector<32x96xf32>, vector<2x96xf32> -> vector<2x96xf32>
    %165 = arith.addf %164, %24 : vector<2x96xf32>
    %cst_67 = arith.constant dense<0.000000e+00> : vector<2x96xf32>
    %166 = tpu.matmul %140, %21, %cst_67 {dimension_numbers = #tpu.dot_dimension_numbers<[1], [0], [0], [1], [0, 0, 1, 1], [], []>} : vector<2x32xf32>, vector<32x96xf32>, vector<2x96xf32> -> vector<2x96xf32>
    %167 = arith.addf %166, %30 : vector<2x96xf32>
    %168 = vector.extract_strided_slice %165 {offsets = [0, 0], sizes = [2, 64], strides = [1, 1]} : vector<2x96xf32> to vector<2x64xf32>
    %169 = vector.extract_strided_slice %167 {offsets = [0, 0], sizes = [2, 64], strides = [1, 1]} : vector<2x96xf32> to vector<2x64xf32>
    %170 = arith.addf %168, %169 : vector<2x64xf32>
    %171 = arith.negf %170 : vector<2x64xf32>
    %172 = math.exp %171 : vector<2x64xf32>
    %cst_68 = arith.constant 1.000000e+00 : f32
    %173 = vector.broadcast %cst_68 : f32 to vector<2x64xf32>
    %174 = arith.addf %173, %172 : vector<2x64xf32>
    %175 = arith.divf %173, %174 : vector<2x64xf32>
    %176 = vector.extract_strided_slice %165 {offsets = [0, 64], sizes = [2, 32], strides = [1, 1]} : vector<2x96xf32> to vector<2x32xf32>
    %177 = vector.extract_strided_slice %175 {offsets = [0, 0], sizes = [2, 32], strides = [1, 1]} : vector<2x64xf32> to vector<2x32xf32>
    %178 = vector.extract_strided_slice %167 {offsets = [0, 64], sizes = [2, 32], strides = [1, 1]} : vector<2x96xf32> to vector<2x32xf32>
    %179 = arith.mulf %177, %178 : vector<2x32xf32>
    %180 = arith.addf %176, %179 : vector<2x32xf32>
    %181 = math.tanh %180 : vector<2x32xf32>
    %182 = vector.extract_strided_slice %175 {offsets = [0, 32], sizes = [2, 32], strides = [1, 1]} : vector<2x64xf32> to vector<2x32xf32>
    %cst_69 = arith.constant 1.000000e+00 : f32
    %183 = vector.broadcast %cst_69 : f32 to vector<2x32xf32>
    %184 = arith.subf %183, %182 : vector<2x32xf32>
    %185 = arith.mulf %184, %181 : vector<2x32xf32>
    %186 = arith.mulf %182, %140 : vector<2x32xf32>
    %187 = arith.addf %185, %186 : vector<2x32xf32>
    %c6 = arith.constant 6 : index
    %c0_70 = arith.constant 0 : index
    %188 = vector.load %arg15[%c6, %c0_70] : memref<20x96xf32, #tpu.memory_space<vmem>>, vector<2x96xf32>
    %cst_71 = arith.constant dense<0.000000e+00> : vector<2x96xf32>
    %189 = tpu.matmul %163, %20, %cst_71 {dimension_numbers = #tpu.dot_dimension_numbers<[1], [0], [0], [1], [0, 0, 1, 1], [], []>} : vector<2x32xf32>, vector<32x96xf32>, vector<2x96xf32> -> vector<2x96xf32>
    %190 = arith.addf %189, %27 : vector<2x96xf32>
    %191 = vector.extract_strided_slice %188 {offsets = [0, 0], sizes = [2, 64], strides = [1, 1]} : vector<2x96xf32> to vector<2x64xf32>
    %192 = vector.extract_strided_slice %190 {offsets = [0, 0], sizes = [2, 64], strides = [1, 1]} : vector<2x96xf32> to vector<2x64xf32>
    %193 = arith.addf %191, %192 : vector<2x64xf32>
    %194 = arith.negf %193 : vector<2x64xf32>
    %195 = math.exp %194 : vector<2x64xf32>
    %cst_72 = arith.constant 1.000000e+00 : f32
    %196 = vector.broadcast %cst_72 : f32 to vector<2x64xf32>
    %197 = arith.addf %196, %195 : vector<2x64xf32>
    %198 = arith.divf %196, %197 : vector<2x64xf32>
    %199 = vector.extract_strided_slice %188 {offsets = [0, 64], sizes = [2, 32], strides = [1, 1]} : vector<2x96xf32> to vector<2x32xf32>
    %200 = vector.extract_strided_slice %198 {offsets = [0, 0], sizes = [2, 32], strides = [1, 1]} : vector<2x64xf32> to vector<2x32xf32>
    %201 = vector.extract_strided_slice %190 {offsets = [0, 64], sizes = [2, 32], strides = [1, 1]} : vector<2x96xf32> to vector<2x32xf32>
    %202 = arith.mulf %200, %201 : vector<2x32xf32>
    %203 = arith.addf %199, %202 : vector<2x32xf32>
    %204 = math.tanh %203 : vector<2x32xf32>
    %205 = vector.extract_strided_slice %198 {offsets = [0, 32], sizes = [2, 32], strides = [1, 1]} : vector<2x64xf32> to vector<2x32xf32>
    %cst_73 = arith.constant 1.000000e+00 : f32
    %206 = vector.broadcast %cst_73 : f32 to vector<2x32xf32>
    %207 = arith.subf %206, %205 : vector<2x32xf32>
    %208 = arith.mulf %207, %204 : vector<2x32xf32>
    %209 = arith.mulf %205, %163 : vector<2x32xf32>
    %210 = arith.addf %208, %209 : vector<2x32xf32>
    %cst_74 = arith.constant dense<0.000000e+00> : vector<2x96xf32>
    %211 = tpu.matmul %210, %19, %cst_74 {dimension_numbers = #tpu.dot_dimension_numbers<[1], [0], [0], [1], [0, 0, 1, 1], [], []>} : vector<2x32xf32>, vector<32x96xf32>, vector<2x96xf32> -> vector<2x96xf32>
    %212 = arith.addf %211, %24 : vector<2x96xf32>
    %cst_75 = arith.constant dense<0.000000e+00> : vector<2x96xf32>
    %213 = tpu.matmul %187, %21, %cst_75 {dimension_numbers = #tpu.dot_dimension_numbers<[1], [0], [0], [1], [0, 0, 1, 1], [], []>} : vector<2x32xf32>, vector<32x96xf32>, vector<2x96xf32> -> vector<2x96xf32>
    %214 = arith.addf %213, %30 : vector<2x96xf32>
    %215 = vector.extract_strided_slice %212 {offsets = [0, 0], sizes = [2, 64], strides = [1, 1]} : vector<2x96xf32> to vector<2x64xf32>
    %216 = vector.extract_strided_slice %214 {offsets = [0, 0], sizes = [2, 64], strides = [1, 1]} : vector<2x96xf32> to vector<2x64xf32>
    %217 = arith.addf %215, %216 : vector<2x64xf32>
    %218 = arith.negf %217 : vector<2x64xf32>
    %219 = math.exp %218 : vector<2x64xf32>
    %cst_76 = arith.constant 1.000000e+00 : f32
    %220 = vector.broadcast %cst_76 : f32 to vector<2x64xf32>
    %221 = arith.addf %220, %219 : vector<2x64xf32>
    %222 = arith.divf %220, %221 : vector<2x64xf32>
    %223 = vector.extract_strided_slice %212 {offsets = [0, 64], sizes = [2, 32], strides = [1, 1]} : vector<2x96xf32> to vector<2x32xf32>
    %224 = vector.extract_strided_slice %222 {offsets = [0, 0], sizes = [2, 32], strides = [1, 1]} : vector<2x64xf32> to vector<2x32xf32>
    %225 = vector.extract_strided_slice %214 {offsets = [0, 64], sizes = [2, 32], strides = [1, 1]} : vector<2x96xf32> to vector<2x32xf32>
    %226 = arith.mulf %224, %225 : vector<2x32xf32>
    %227 = arith.addf %223, %226 : vector<2x32xf32>
    %228 = math.tanh %227 : vector<2x32xf32>
    %229 = vector.extract_strided_slice %222 {offsets = [0, 32], sizes = [2, 32], strides = [1, 1]} : vector<2x64xf32> to vector<2x32xf32>
    %cst_77 = arith.constant 1.000000e+00 : f32
    %230 = vector.broadcast %cst_77 : f32 to vector<2x32xf32>
    %231 = arith.subf %230, %229 : vector<2x32xf32>
    %232 = arith.mulf %231, %228 : vector<2x32xf32>
    %233 = arith.mulf %229, %187 : vector<2x32xf32>
    %234 = arith.addf %232, %233 : vector<2x32xf32>
    %c8 = arith.constant 8 : index
    %c0_78 = arith.constant 0 : index
    %235 = vector.load %arg15[%c8, %c0_78] : memref<20x96xf32, #tpu.memory_space<vmem>>, vector<2x96xf32>
    %cst_79 = arith.constant dense<0.000000e+00> : vector<2x96xf32>
    %236 = tpu.matmul %210, %20, %cst_79 {dimension_numbers = #tpu.dot_dimension_numbers<[1], [0], [0], [1], [0, 0, 1, 1], [], []>} : vector<2x32xf32>, vector<32x96xf32>, vector<2x96xf32> -> vector<2x96xf32>
    %237 = arith.addf %236, %27 : vector<2x96xf32>
    %238 = vector.extract_strided_slice %235 {offsets = [0, 0], sizes = [2, 64], strides = [1, 1]} : vector<2x96xf32> to vector<2x64xf32>
    %239 = vector.extract_strided_slice %237 {offsets = [0, 0], sizes = [2, 64], strides = [1, 1]} : vector<2x96xf32> to vector<2x64xf32>
    %240 = arith.addf %238, %239 : vector<2x64xf32>
    %241 = arith.negf %240 : vector<2x64xf32>
    %242 = math.exp %241 : vector<2x64xf32>
    %cst_80 = arith.constant 1.000000e+00 : f32
    %243 = vector.broadcast %cst_80 : f32 to vector<2x64xf32>
    %244 = arith.addf %243, %242 : vector<2x64xf32>
    %245 = arith.divf %243, %244 : vector<2x64xf32>
    %246 = vector.extract_strided_slice %235 {offsets = [0, 64], sizes = [2, 32], strides = [1, 1]} : vector<2x96xf32> to vector<2x32xf32>
    %247 = vector.extract_strided_slice %245 {offsets = [0, 0], sizes = [2, 32], strides = [1, 1]} : vector<2x64xf32> to vector<2x32xf32>
    %248 = vector.extract_strided_slice %237 {offsets = [0, 64], sizes = [2, 32], strides = [1, 1]} : vector<2x96xf32> to vector<2x32xf32>
    %249 = arith.mulf %247, %248 : vector<2x32xf32>
    %250 = arith.addf %246, %249 : vector<2x32xf32>
    %251 = math.tanh %250 : vector<2x32xf32>
    %252 = vector.extract_strided_slice %245 {offsets = [0, 32], sizes = [2, 32], strides = [1, 1]} : vector<2x64xf32> to vector<2x32xf32>
    %cst_81 = arith.constant 1.000000e+00 : f32
    %253 = vector.broadcast %cst_81 : f32 to vector<2x32xf32>
    %254 = arith.subf %253, %252 : vector<2x32xf32>
    %255 = arith.mulf %254, %251 : vector<2x32xf32>
    %256 = arith.mulf %252, %210 : vector<2x32xf32>
    %257 = arith.addf %255, %256 : vector<2x32xf32>
    %cst_82 = arith.constant dense<0.000000e+00> : vector<2x96xf32>
    %258 = tpu.matmul %257, %19, %cst_82 {dimension_numbers = #tpu.dot_dimension_numbers<[1], [0], [0], [1], [0, 0, 1, 1], [], []>} : vector<2x32xf32>, vector<32x96xf32>, vector<2x96xf32> -> vector<2x96xf32>
    %259 = arith.addf %258, %24 : vector<2x96xf32>
    %cst_83 = arith.constant dense<0.000000e+00> : vector<2x96xf32>
    %260 = tpu.matmul %234, %21, %cst_83 {dimension_numbers = #tpu.dot_dimension_numbers<[1], [0], [0], [1], [0, 0, 1, 1], [], []>} : vector<2x32xf32>, vector<32x96xf32>, vector<2x96xf32> -> vector<2x96xf32>
    %261 = arith.addf %260, %30 : vector<2x96xf32>
    %262 = vector.extract_strided_slice %259 {offsets = [0, 0], sizes = [2, 64], strides = [1, 1]} : vector<2x96xf32> to vector<2x64xf32>
    %263 = vector.extract_strided_slice %261 {offsets = [0, 0], sizes = [2, 64], strides = [1, 1]} : vector<2x96xf32> to vector<2x64xf32>
    %264 = arith.addf %262, %263 : vector<2x64xf32>
    %265 = arith.negf %264 : vector<2x64xf32>
    %266 = math.exp %265 : vector<2x64xf32>
    %cst_84 = arith.constant 1.000000e+00 : f32
    %267 = vector.broadcast %cst_84 : f32 to vector<2x64xf32>
    %268 = arith.addf %267, %266 : vector<2x64xf32>
    %269 = arith.divf %267, %268 : vector<2x64xf32>
    %270 = vector.extract_strided_slice %259 {offsets = [0, 64], sizes = [2, 32], strides = [1, 1]} : vector<2x96xf32> to vector<2x32xf32>
    %271 = vector.extract_strided_slice %269 {offsets = [0, 0], sizes = [2, 32], strides = [1, 1]} : vector<2x64xf32> to vector<2x32xf32>
    %272 = vector.extract_strided_slice %261 {offsets = [0, 64], sizes = [2, 32], strides = [1, 1]} : vector<2x96xf32> to vector<2x32xf32>
    %273 = arith.mulf %271, %272 : vector<2x32xf32>
    %274 = arith.addf %270, %273 : vector<2x32xf32>
    %275 = math.tanh %274 : vector<2x32xf32>
    %276 = vector.extract_strided_slice %269 {offsets = [0, 32], sizes = [2, 32], strides = [1, 1]} : vector<2x64xf32> to vector<2x32xf32>
    %cst_85 = arith.constant 1.000000e+00 : f32
    %277 = vector.broadcast %cst_85 : f32 to vector<2x32xf32>
    %278 = arith.subf %277, %276 : vector<2x32xf32>
    %279 = arith.mulf %278, %275 : vector<2x32xf32>
    %280 = arith.mulf %276, %234 : vector<2x32xf32>
    %281 = arith.addf %279, %280 : vector<2x32xf32>
    %c10 = arith.constant 10 : index
    %c0_86 = arith.constant 0 : index
    %282 = vector.load %arg15[%c10, %c0_86] : memref<20x96xf32, #tpu.memory_space<vmem>>, vector<2x96xf32>
    %cst_87 = arith.constant dense<0.000000e+00> : vector<2x96xf32>
    %283 = tpu.matmul %257, %20, %cst_87 {dimension_numbers = #tpu.dot_dimension_numbers<[1], [0], [0], [1], [0, 0, 1, 1], [], []>} : vector<2x32xf32>, vector<32x96xf32>, vector<2x96xf32> -> vector<2x96xf32>
    %284 = arith.addf %283, %27 : vector<2x96xf32>
    %285 = vector.extract_strided_slice %282 {offsets = [0, 0], sizes = [2, 64], strides = [1, 1]} : vector<2x96xf32> to vector<2x64xf32>
    %286 = vector.extract_strided_slice %284 {offsets = [0, 0], sizes = [2, 64], strides = [1, 1]} : vector<2x96xf32> to vector<2x64xf32>
    %287 = arith.addf %285, %286 : vector<2x64xf32>
    %288 = arith.negf %287 : vector<2x64xf32>
    %289 = math.exp %288 : vector<2x64xf32>
    %cst_88 = arith.constant 1.000000e+00 : f32
    %290 = vector.broadcast %cst_88 : f32 to vector<2x64xf32>
    %291 = arith.addf %290, %289 : vector<2x64xf32>
    %292 = arith.divf %290, %291 : vector<2x64xf32>
    %293 = vector.extract_strided_slice %282 {offsets = [0, 64], sizes = [2, 32], strides = [1, 1]} : vector<2x96xf32> to vector<2x32xf32>
    %294 = vector.extract_strided_slice %292 {offsets = [0, 0], sizes = [2, 32], strides = [1, 1]} : vector<2x64xf32> to vector<2x32xf32>
    %295 = vector.extract_strided_slice %284 {offsets = [0, 64], sizes = [2, 32], strides = [1, 1]} : vector<2x96xf32> to vector<2x32xf32>
    %296 = arith.mulf %294, %295 : vector<2x32xf32>
    %297 = arith.addf %293, %296 : vector<2x32xf32>
    %298 = math.tanh %297 : vector<2x32xf32>
    %299 = vector.extract_strided_slice %292 {offsets = [0, 32], sizes = [2, 32], strides = [1, 1]} : vector<2x64xf32> to vector<2x32xf32>
    %cst_89 = arith.constant 1.000000e+00 : f32
    %300 = vector.broadcast %cst_89 : f32 to vector<2x32xf32>
    %301 = arith.subf %300, %299 : vector<2x32xf32>
    %302 = arith.mulf %301, %298 : vector<2x32xf32>
    %303 = arith.mulf %299, %257 : vector<2x32xf32>
    %304 = arith.addf %302, %303 : vector<2x32xf32>
    %cst_90 = arith.constant dense<0.000000e+00> : vector<2x96xf32>
    %305 = tpu.matmul %304, %19, %cst_90 {dimension_numbers = #tpu.dot_dimension_numbers<[1], [0], [0], [1], [0, 0, 1, 1], [], []>} : vector<2x32xf32>, vector<32x96xf32>, vector<2x96xf32> -> vector<2x96xf32>
    %306 = arith.addf %305, %24 : vector<2x96xf32>
    %cst_91 = arith.constant dense<0.000000e+00> : vector<2x96xf32>
    %307 = tpu.matmul %281, %21, %cst_91 {dimension_numbers = #tpu.dot_dimension_numbers<[1], [0], [0], [1], [0, 0, 1, 1], [], []>} : vector<2x32xf32>, vector<32x96xf32>, vector<2x96xf32> -> vector<2x96xf32>
    %308 = arith.addf %307, %30 : vector<2x96xf32>
    %309 = vector.extract_strided_slice %306 {offsets = [0, 0], sizes = [2, 64], strides = [1, 1]} : vector<2x96xf32> to vector<2x64xf32>
    %310 = vector.extract_strided_slice %308 {offsets = [0, 0], sizes = [2, 64], strides = [1, 1]} : vector<2x96xf32> to vector<2x64xf32>
    %311 = arith.addf %309, %310 : vector<2x64xf32>
    %312 = arith.negf %311 : vector<2x64xf32>
    %313 = math.exp %312 : vector<2x64xf32>
    %cst_92 = arith.constant 1.000000e+00 : f32
    %314 = vector.broadcast %cst_92 : f32 to vector<2x64xf32>
    %315 = arith.addf %314, %313 : vector<2x64xf32>
    %316 = arith.divf %314, %315 : vector<2x64xf32>
    %317 = vector.extract_strided_slice %306 {offsets = [0, 64], sizes = [2, 32], strides = [1, 1]} : vector<2x96xf32> to vector<2x32xf32>
    %318 = vector.extract_strided_slice %316 {offsets = [0, 0], sizes = [2, 32], strides = [1, 1]} : vector<2x64xf32> to vector<2x32xf32>
    %319 = vector.extract_strided_slice %308 {offsets = [0, 64], sizes = [2, 32], strides = [1, 1]} : vector<2x96xf32> to vector<2x32xf32>
    %320 = arith.mulf %318, %319 : vector<2x32xf32>
    %321 = arith.addf %317, %320 : vector<2x32xf32>
    %322 = math.tanh %321 : vector<2x32xf32>
    %323 = vector.extract_strided_slice %316 {offsets = [0, 32], sizes = [2, 32], strides = [1, 1]} : vector<2x64xf32> to vector<2x32xf32>
    %cst_93 = arith.constant 1.000000e+00 : f32
    %324 = vector.broadcast %cst_93 : f32 to vector<2x32xf32>
    %325 = arith.subf %324, %323 : vector<2x32xf32>
    %326 = arith.mulf %325, %322 : vector<2x32xf32>
    %327 = arith.mulf %323, %281 : vector<2x32xf32>
    %328 = arith.addf %326, %327 : vector<2x32xf32>
    %c12 = arith.constant 12 : index
    %c0_94 = arith.constant 0 : index
    %329 = vector.load %arg15[%c12, %c0_94] : memref<20x96xf32, #tpu.memory_space<vmem>>, vector<2x96xf32>
    %cst_95 = arith.constant dense<0.000000e+00> : vector<2x96xf32>
    %330 = tpu.matmul %304, %20, %cst_95 {dimension_numbers = #tpu.dot_dimension_numbers<[1], [0], [0], [1], [0, 0, 1, 1], [], []>} : vector<2x32xf32>, vector<32x96xf32>, vector<2x96xf32> -> vector<2x96xf32>
    %331 = arith.addf %330, %27 : vector<2x96xf32>
    %332 = vector.extract_strided_slice %329 {offsets = [0, 0], sizes = [2, 64], strides = [1, 1]} : vector<2x96xf32> to vector<2x64xf32>
    %333 = vector.extract_strided_slice %331 {offsets = [0, 0], sizes = [2, 64], strides = [1, 1]} : vector<2x96xf32> to vector<2x64xf32>
    %334 = arith.addf %332, %333 : vector<2x64xf32>
    %335 = arith.negf %334 : vector<2x64xf32>
    %336 = math.exp %335 : vector<2x64xf32>
    %cst_96 = arith.constant 1.000000e+00 : f32
    %337 = vector.broadcast %cst_96 : f32 to vector<2x64xf32>
    %338 = arith.addf %337, %336 : vector<2x64xf32>
    %339 = arith.divf %337, %338 : vector<2x64xf32>
    %340 = vector.extract_strided_slice %329 {offsets = [0, 64], sizes = [2, 32], strides = [1, 1]} : vector<2x96xf32> to vector<2x32xf32>
    %341 = vector.extract_strided_slice %339 {offsets = [0, 0], sizes = [2, 32], strides = [1, 1]} : vector<2x64xf32> to vector<2x32xf32>
    %342 = vector.extract_strided_slice %331 {offsets = [0, 64], sizes = [2, 32], strides = [1, 1]} : vector<2x96xf32> to vector<2x32xf32>
    %343 = arith.mulf %341, %342 : vector<2x32xf32>
    %344 = arith.addf %340, %343 : vector<2x32xf32>
    %345 = math.tanh %344 : vector<2x32xf32>
    %346 = vector.extract_strided_slice %339 {offsets = [0, 32], sizes = [2, 32], strides = [1, 1]} : vector<2x64xf32> to vector<2x32xf32>
    %cst_97 = arith.constant 1.000000e+00 : f32
    %347 = vector.broadcast %cst_97 : f32 to vector<2x32xf32>
    %348 = arith.subf %347, %346 : vector<2x32xf32>
    %349 = arith.mulf %348, %345 : vector<2x32xf32>
    %350 = arith.mulf %346, %304 : vector<2x32xf32>
    %351 = arith.addf %349, %350 : vector<2x32xf32>
    %cst_98 = arith.constant dense<0.000000e+00> : vector<2x96xf32>
    %352 = tpu.matmul %351, %19, %cst_98 {dimension_numbers = #tpu.dot_dimension_numbers<[1], [0], [0], [1], [0, 0, 1, 1], [], []>} : vector<2x32xf32>, vector<32x96xf32>, vector<2x96xf32> -> vector<2x96xf32>
    %353 = arith.addf %352, %24 : vector<2x96xf32>
    %cst_99 = arith.constant dense<0.000000e+00> : vector<2x96xf32>
    %354 = tpu.matmul %328, %21, %cst_99 {dimension_numbers = #tpu.dot_dimension_numbers<[1], [0], [0], [1], [0, 0, 1, 1], [], []>} : vector<2x32xf32>, vector<32x96xf32>, vector<2x96xf32> -> vector<2x96xf32>
    %355 = arith.addf %354, %30 : vector<2x96xf32>
    %356 = vector.extract_strided_slice %353 {offsets = [0, 0], sizes = [2, 64], strides = [1, 1]} : vector<2x96xf32> to vector<2x64xf32>
    %357 = vector.extract_strided_slice %355 {offsets = [0, 0], sizes = [2, 64], strides = [1, 1]} : vector<2x96xf32> to vector<2x64xf32>
    %358 = arith.addf %356, %357 : vector<2x64xf32>
    %359 = arith.negf %358 : vector<2x64xf32>
    %360 = math.exp %359 : vector<2x64xf32>
    %cst_100 = arith.constant 1.000000e+00 : f32
    %361 = vector.broadcast %cst_100 : f32 to vector<2x64xf32>
    %362 = arith.addf %361, %360 : vector<2x64xf32>
    %363 = arith.divf %361, %362 : vector<2x64xf32>
    %364 = vector.extract_strided_slice %353 {offsets = [0, 64], sizes = [2, 32], strides = [1, 1]} : vector<2x96xf32> to vector<2x32xf32>
    %365 = vector.extract_strided_slice %363 {offsets = [0, 0], sizes = [2, 32], strides = [1, 1]} : vector<2x64xf32> to vector<2x32xf32>
    %366 = vector.extract_strided_slice %355 {offsets = [0, 64], sizes = [2, 32], strides = [1, 1]} : vector<2x96xf32> to vector<2x32xf32>
    %367 = arith.mulf %365, %366 : vector<2x32xf32>
    %368 = arith.addf %364, %367 : vector<2x32xf32>
    %369 = math.tanh %368 : vector<2x32xf32>
    %370 = vector.extract_strided_slice %363 {offsets = [0, 32], sizes = [2, 32], strides = [1, 1]} : vector<2x64xf32> to vector<2x32xf32>
    %cst_101 = arith.constant 1.000000e+00 : f32
    %371 = vector.broadcast %cst_101 : f32 to vector<2x32xf32>
    %372 = arith.subf %371, %370 : vector<2x32xf32>
    %373 = arith.mulf %372, %369 : vector<2x32xf32>
    %374 = arith.mulf %370, %328 : vector<2x32xf32>
    %375 = arith.addf %373, %374 : vector<2x32xf32>
    %c14 = arith.constant 14 : index
    %c0_102 = arith.constant 0 : index
    %376 = vector.load %arg15[%c14, %c0_102] : memref<20x96xf32, #tpu.memory_space<vmem>>, vector<2x96xf32>
    %cst_103 = arith.constant dense<0.000000e+00> : vector<2x96xf32>
    %377 = tpu.matmul %351, %20, %cst_103 {dimension_numbers = #tpu.dot_dimension_numbers<[1], [0], [0], [1], [0, 0, 1, 1], [], []>} : vector<2x32xf32>, vector<32x96xf32>, vector<2x96xf32> -> vector<2x96xf32>
    %378 = arith.addf %377, %27 : vector<2x96xf32>
    %379 = vector.extract_strided_slice %376 {offsets = [0, 0], sizes = [2, 64], strides = [1, 1]} : vector<2x96xf32> to vector<2x64xf32>
    %380 = vector.extract_strided_slice %378 {offsets = [0, 0], sizes = [2, 64], strides = [1, 1]} : vector<2x96xf32> to vector<2x64xf32>
    %381 = arith.addf %379, %380 : vector<2x64xf32>
    %382 = arith.negf %381 : vector<2x64xf32>
    %383 = math.exp %382 : vector<2x64xf32>
    %cst_104 = arith.constant 1.000000e+00 : f32
    %384 = vector.broadcast %cst_104 : f32 to vector<2x64xf32>
    %385 = arith.addf %384, %383 : vector<2x64xf32>
    %386 = arith.divf %384, %385 : vector<2x64xf32>
    %387 = vector.extract_strided_slice %376 {offsets = [0, 64], sizes = [2, 32], strides = [1, 1]} : vector<2x96xf32> to vector<2x32xf32>
    %388 = vector.extract_strided_slice %386 {offsets = [0, 0], sizes = [2, 32], strides = [1, 1]} : vector<2x64xf32> to vector<2x32xf32>
    %389 = vector.extract_strided_slice %378 {offsets = [0, 64], sizes = [2, 32], strides = [1, 1]} : vector<2x96xf32> to vector<2x32xf32>
    %390 = arith.mulf %388, %389 : vector<2x32xf32>
    %391 = arith.addf %387, %390 : vector<2x32xf32>
    %392 = math.tanh %391 : vector<2x32xf32>
    %393 = vector.extract_strided_slice %386 {offsets = [0, 32], sizes = [2, 32], strides = [1, 1]} : vector<2x64xf32> to vector<2x32xf32>
    %cst_105 = arith.constant 1.000000e+00 : f32
    %394 = vector.broadcast %cst_105 : f32 to vector<2x32xf32>
    %395 = arith.subf %394, %393 : vector<2x32xf32>
    %396 = arith.mulf %395, %392 : vector<2x32xf32>
    %397 = arith.mulf %393, %351 : vector<2x32xf32>
    %398 = arith.addf %396, %397 : vector<2x32xf32>
    %cst_106 = arith.constant dense<0.000000e+00> : vector<2x96xf32>
    %399 = tpu.matmul %398, %19, %cst_106 {dimension_numbers = #tpu.dot_dimension_numbers<[1], [0], [0], [1], [0, 0, 1, 1], [], []>} : vector<2x32xf32>, vector<32x96xf32>, vector<2x96xf32> -> vector<2x96xf32>
    %400 = arith.addf %399, %24 : vector<2x96xf32>
    %cst_107 = arith.constant dense<0.000000e+00> : vector<2x96xf32>
    %401 = tpu.matmul %375, %21, %cst_107 {dimension_numbers = #tpu.dot_dimension_numbers<[1], [0], [0], [1], [0, 0, 1, 1], [], []>} : vector<2x32xf32>, vector<32x96xf32>, vector<2x96xf32> -> vector<2x96xf32>
    %402 = arith.addf %401, %30 : vector<2x96xf32>
    %403 = vector.extract_strided_slice %400 {offsets = [0, 0], sizes = [2, 64], strides = [1, 1]} : vector<2x96xf32> to vector<2x64xf32>
    %404 = vector.extract_strided_slice %402 {offsets = [0, 0], sizes = [2, 64], strides = [1, 1]} : vector<2x96xf32> to vector<2x64xf32>
    %405 = arith.addf %403, %404 : vector<2x64xf32>
    %406 = arith.negf %405 : vector<2x64xf32>
    %407 = math.exp %406 : vector<2x64xf32>
    %cst_108 = arith.constant 1.000000e+00 : f32
    %408 = vector.broadcast %cst_108 : f32 to vector<2x64xf32>
    %409 = arith.addf %408, %407 : vector<2x64xf32>
    %410 = arith.divf %408, %409 : vector<2x64xf32>
    %411 = vector.extract_strided_slice %400 {offsets = [0, 64], sizes = [2, 32], strides = [1, 1]} : vector<2x96xf32> to vector<2x32xf32>
    %412 = vector.extract_strided_slice %410 {offsets = [0, 0], sizes = [2, 32], strides = [1, 1]} : vector<2x64xf32> to vector<2x32xf32>
    %413 = vector.extract_strided_slice %402 {offsets = [0, 64], sizes = [2, 32], strides = [1, 1]} : vector<2x96xf32> to vector<2x32xf32>
    %414 = arith.mulf %412, %413 : vector<2x32xf32>
    %415 = arith.addf %411, %414 : vector<2x32xf32>
    %416 = math.tanh %415 : vector<2x32xf32>
    %417 = vector.extract_strided_slice %410 {offsets = [0, 32], sizes = [2, 32], strides = [1, 1]} : vector<2x64xf32> to vector<2x32xf32>
    %cst_109 = arith.constant 1.000000e+00 : f32
    %418 = vector.broadcast %cst_109 : f32 to vector<2x32xf32>
    %419 = arith.subf %418, %417 : vector<2x32xf32>
    %420 = arith.mulf %419, %416 : vector<2x32xf32>
    %421 = arith.mulf %417, %375 : vector<2x32xf32>
    %422 = arith.addf %420, %421 : vector<2x32xf32>
    %c16 = arith.constant 16 : index
    %c0_110 = arith.constant 0 : index
    %423 = vector.load %arg15[%c16, %c0_110] : memref<20x96xf32, #tpu.memory_space<vmem>>, vector<2x96xf32>
    %cst_111 = arith.constant dense<0.000000e+00> : vector<2x96xf32>
    %424 = tpu.matmul %398, %20, %cst_111 {dimension_numbers = #tpu.dot_dimension_numbers<[1], [0], [0], [1], [0, 0, 1, 1], [], []>} : vector<2x32xf32>, vector<32x96xf32>, vector<2x96xf32> -> vector<2x96xf32>
    %425 = arith.addf %424, %27 : vector<2x96xf32>
    %426 = vector.extract_strided_slice %423 {offsets = [0, 0], sizes = [2, 64], strides = [1, 1]} : vector<2x96xf32> to vector<2x64xf32>
    %427 = vector.extract_strided_slice %425 {offsets = [0, 0], sizes = [2, 64], strides = [1, 1]} : vector<2x96xf32> to vector<2x64xf32>
    %428 = arith.addf %426, %427 : vector<2x64xf32>
    %429 = arith.negf %428 : vector<2x64xf32>
    %430 = math.exp %429 : vector<2x64xf32>
    %cst_112 = arith.constant 1.000000e+00 : f32
    %431 = vector.broadcast %cst_112 : f32 to vector<2x64xf32>
    %432 = arith.addf %431, %430 : vector<2x64xf32>
    %433 = arith.divf %431, %432 : vector<2x64xf32>
    %434 = vector.extract_strided_slice %423 {offsets = [0, 64], sizes = [2, 32], strides = [1, 1]} : vector<2x96xf32> to vector<2x32xf32>
    %435 = vector.extract_strided_slice %433 {offsets = [0, 0], sizes = [2, 32], strides = [1, 1]} : vector<2x64xf32> to vector<2x32xf32>
    %436 = vector.extract_strided_slice %425 {offsets = [0, 64], sizes = [2, 32], strides = [1, 1]} : vector<2x96xf32> to vector<2x32xf32>
    %437 = arith.mulf %435, %436 : vector<2x32xf32>
    %438 = arith.addf %434, %437 : vector<2x32xf32>
    %439 = math.tanh %438 : vector<2x32xf32>
    %440 = vector.extract_strided_slice %433 {offsets = [0, 32], sizes = [2, 32], strides = [1, 1]} : vector<2x64xf32> to vector<2x32xf32>
    %cst_113 = arith.constant 1.000000e+00 : f32
    %441 = vector.broadcast %cst_113 : f32 to vector<2x32xf32>
    %442 = arith.subf %441, %440 : vector<2x32xf32>
    %443 = arith.mulf %442, %439 : vector<2x32xf32>
    %444 = arith.mulf %440, %398 : vector<2x32xf32>
    %445 = arith.addf %443, %444 : vector<2x32xf32>
    %cst_114 = arith.constant dense<0.000000e+00> : vector<2x96xf32>
    %446 = tpu.matmul %445, %19, %cst_114 {dimension_numbers = #tpu.dot_dimension_numbers<[1], [0], [0], [1], [0, 0, 1, 1], [], []>} : vector<2x32xf32>, vector<32x96xf32>, vector<2x96xf32> -> vector<2x96xf32>
    %447 = arith.addf %446, %24 : vector<2x96xf32>
    %cst_115 = arith.constant dense<0.000000e+00> : vector<2x96xf32>
    %448 = tpu.matmul %422, %21, %cst_115 {dimension_numbers = #tpu.dot_dimension_numbers<[1], [0], [0], [1], [0, 0, 1, 1], [], []>} : vector<2x32xf32>, vector<32x96xf32>, vector<2x96xf32> -> vector<2x96xf32>
    %449 = arith.addf %448, %30 : vector<2x96xf32>
    %450 = vector.extract_strided_slice %447 {offsets = [0, 0], sizes = [2, 64], strides = [1, 1]} : vector<2x96xf32> to vector<2x64xf32>
    %451 = vector.extract_strided_slice %449 {offsets = [0, 0], sizes = [2, 64], strides = [1, 1]} : vector<2x96xf32> to vector<2x64xf32>
    %452 = arith.addf %450, %451 : vector<2x64xf32>
    %453 = arith.negf %452 : vector<2x64xf32>
    %454 = math.exp %453 : vector<2x64xf32>
    %cst_116 = arith.constant 1.000000e+00 : f32
    %455 = vector.broadcast %cst_116 : f32 to vector<2x64xf32>
    %456 = arith.addf %455, %454 : vector<2x64xf32>
    %457 = arith.divf %455, %456 : vector<2x64xf32>
    %458 = vector.extract_strided_slice %447 {offsets = [0, 64], sizes = [2, 32], strides = [1, 1]} : vector<2x96xf32> to vector<2x32xf32>
    %459 = vector.extract_strided_slice %457 {offsets = [0, 0], sizes = [2, 32], strides = [1, 1]} : vector<2x64xf32> to vector<2x32xf32>
    %460 = vector.extract_strided_slice %449 {offsets = [0, 64], sizes = [2, 32], strides = [1, 1]} : vector<2x96xf32> to vector<2x32xf32>
    %461 = arith.mulf %459, %460 : vector<2x32xf32>
    %462 = arith.addf %458, %461 : vector<2x32xf32>
    %463 = math.tanh %462 : vector<2x32xf32>
    %464 = vector.extract_strided_slice %457 {offsets = [0, 32], sizes = [2, 32], strides = [1, 1]} : vector<2x64xf32> to vector<2x32xf32>
    %cst_117 = arith.constant 1.000000e+00 : f32
    %465 = vector.broadcast %cst_117 : f32 to vector<2x32xf32>
    %466 = arith.subf %465, %464 : vector<2x32xf32>
    %467 = arith.mulf %466, %463 : vector<2x32xf32>
    %468 = arith.mulf %464, %422 : vector<2x32xf32>
    %469 = arith.addf %467, %468 : vector<2x32xf32>
    %c18 = arith.constant 18 : index
    %c0_118 = arith.constant 0 : index
    %470 = vector.load %arg15[%c18, %c0_118] : memref<20x96xf32, #tpu.memory_space<vmem>>, vector<2x96xf32>
    %cst_119 = arith.constant dense<0.000000e+00> : vector<2x96xf32>
    %471 = tpu.matmul %445, %20, %cst_119 {dimension_numbers = #tpu.dot_dimension_numbers<[1], [0], [0], [1], [0, 0, 1, 1], [], []>} : vector<2x32xf32>, vector<32x96xf32>, vector<2x96xf32> -> vector<2x96xf32>
    %472 = arith.addf %471, %27 : vector<2x96xf32>
    %473 = vector.extract_strided_slice %470 {offsets = [0, 0], sizes = [2, 64], strides = [1, 1]} : vector<2x96xf32> to vector<2x64xf32>
    %474 = vector.extract_strided_slice %472 {offsets = [0, 0], sizes = [2, 64], strides = [1, 1]} : vector<2x96xf32> to vector<2x64xf32>
    %475 = arith.addf %473, %474 : vector<2x64xf32>
    %476 = arith.negf %475 : vector<2x64xf32>
    %477 = math.exp %476 : vector<2x64xf32>
    %cst_120 = arith.constant 1.000000e+00 : f32
    %478 = vector.broadcast %cst_120 : f32 to vector<2x64xf32>
    %479 = arith.addf %478, %477 : vector<2x64xf32>
    %480 = arith.divf %478, %479 : vector<2x64xf32>
    %481 = vector.extract_strided_slice %470 {offsets = [0, 64], sizes = [2, 32], strides = [1, 1]} : vector<2x96xf32> to vector<2x32xf32>
    %482 = vector.extract_strided_slice %480 {offsets = [0, 0], sizes = [2, 32], strides = [1, 1]} : vector<2x64xf32> to vector<2x32xf32>
    %483 = vector.extract_strided_slice %472 {offsets = [0, 64], sizes = [2, 32], strides = [1, 1]} : vector<2x96xf32> to vector<2x32xf32>
    %484 = arith.mulf %482, %483 : vector<2x32xf32>
    %485 = arith.addf %481, %484 : vector<2x32xf32>
    %486 = math.tanh %485 : vector<2x32xf32>
    %487 = vector.extract_strided_slice %480 {offsets = [0, 32], sizes = [2, 32], strides = [1, 1]} : vector<2x64xf32> to vector<2x32xf32>
    %cst_121 = arith.constant 1.000000e+00 : f32
    %488 = vector.broadcast %cst_121 : f32 to vector<2x32xf32>
    %489 = arith.subf %488, %487 : vector<2x32xf32>
    %490 = arith.mulf %489, %486 : vector<2x32xf32>
    %491 = arith.mulf %487, %445 : vector<2x32xf32>
    %492 = arith.addf %490, %491 : vector<2x32xf32>
    %cst_122 = arith.constant dense<0.000000e+00> : vector<2x96xf32>
    %493 = tpu.matmul %492, %19, %cst_122 {dimension_numbers = #tpu.dot_dimension_numbers<[1], [0], [0], [1], [0, 0, 1, 1], [], []>} : vector<2x32xf32>, vector<32x96xf32>, vector<2x96xf32> -> vector<2x96xf32>
    %494 = arith.addf %493, %24 : vector<2x96xf32>
    %cst_123 = arith.constant dense<0.000000e+00> : vector<2x96xf32>
    %495 = tpu.matmul %469, %21, %cst_123 {dimension_numbers = #tpu.dot_dimension_numbers<[1], [0], [0], [1], [0, 0, 1, 1], [], []>} : vector<2x32xf32>, vector<32x96xf32>, vector<2x96xf32> -> vector<2x96xf32>
    %496 = arith.addf %495, %30 : vector<2x96xf32>
    %497 = vector.extract_strided_slice %494 {offsets = [0, 0], sizes = [2, 64], strides = [1, 1]} : vector<2x96xf32> to vector<2x64xf32>
    %498 = vector.extract_strided_slice %496 {offsets = [0, 0], sizes = [2, 64], strides = [1, 1]} : vector<2x96xf32> to vector<2x64xf32>
    %499 = arith.addf %497, %498 : vector<2x64xf32>
    %500 = arith.negf %499 : vector<2x64xf32>
    %501 = math.exp %500 : vector<2x64xf32>
    %cst_124 = arith.constant 1.000000e+00 : f32
    %502 = vector.broadcast %cst_124 : f32 to vector<2x64xf32>
    %503 = arith.addf %502, %501 : vector<2x64xf32>
    %504 = arith.divf %502, %503 : vector<2x64xf32>
    %505 = vector.extract_strided_slice %494 {offsets = [0, 64], sizes = [2, 32], strides = [1, 1]} : vector<2x96xf32> to vector<2x32xf32>
    %506 = vector.extract_strided_slice %504 {offsets = [0, 0], sizes = [2, 32], strides = [1, 1]} : vector<2x64xf32> to vector<2x32xf32>
    %507 = vector.extract_strided_slice %496 {offsets = [0, 64], sizes = [2, 32], strides = [1, 1]} : vector<2x96xf32> to vector<2x32xf32>
    %508 = arith.mulf %506, %507 : vector<2x32xf32>
    %509 = arith.addf %505, %508 : vector<2x32xf32>
    %510 = math.tanh %509 : vector<2x32xf32>
    %511 = vector.extract_strided_slice %504 {offsets = [0, 32], sizes = [2, 32], strides = [1, 1]} : vector<2x64xf32> to vector<2x32xf32>
    %cst_125 = arith.constant 1.000000e+00 : f32
    %512 = vector.broadcast %cst_125 : f32 to vector<2x32xf32>
    %513 = arith.subf %512, %511 : vector<2x32xf32>
    %514 = arith.mulf %513, %510 : vector<2x32xf32>
    %515 = arith.mulf %511, %469 : vector<2x32xf32>
    %516 = arith.addf %514, %515 : vector<2x32xf32>
    %c0_126 = arith.constant 0 : index
    %c0_127 = arith.constant 0 : index
    %517 = vector.load %arg12[%c0_126, %c0_127] : memref<32x10xf32, #tpu.memory_space<vmem>>, vector<32x10xf32>
    %cst_128 = arith.constant dense<0.000000e+00> : vector<2x10xf32>
    %518 = tpu.matmul %516, %517, %cst_128 {dimension_numbers = #tpu.dot_dimension_numbers<[1], [0], [0], [1], [0, 0, 1, 1], [], []>} : vector<2x32xf32>, vector<32x10xf32>, vector<2x10xf32> -> vector<2x10xf32>
    %c0_129 = arith.constant 0 : index
    %c0_130 = arith.constant 0 : index
    %519 = vector.load %arg13[%c0_129, %c0_130] : memref<1x10xf32, #tpu.memory_space<vmem>>, vector<1x10xf32>
    %520 = vector.broadcast %519 : vector<1x10xf32> to vector<2x10xf32>
    %521 = arith.addf %518, %520 : vector<2x10xf32>
    %c0_131 = arith.constant 0 : index
    %c0_132 = arith.constant 0 : index
    %522 = vector.load %arg14[%c0_131, %c0_132] : memref<2x10xf32, #tpu.memory_space<vmem>>, vector<2x10xf32>
    tpu.vector_store %arg14[%c0_131, %c0_132], %521 {strides = array<i32>} : memref<2x10xf32, #tpu.memory_space<vmem>>, vector<2x10xf32>,
    return
  }
}

</mosaic_0001>

<llo_original>
// kernel: squeeze.406
$region0: #{squeeze.406}
  %s0 = inlined_call_operand.vmem [shape: f32[2,1,6,6], index: 0, kind: input, shape index: {}]
  %s1 = inlined_call_operand.vmem [shape: f32[1,72], index: 1, kind: output, shape index: {}]
  $region1: #{squeeze.406} parent=0
    #allocation0 [shape = 'u8[4096]{0}', space=vmem, size = 0x1000, scoped, tag = 'scoped mem for output reshape']
    %v2 = vld [vmem:[%s0] sm:$0x1]
    %vm3 = vcmask 48128
    %4 = vst.msk [vmem:[#allocation0] sm:$0x1] %vm3, %v2
    %s5 = scalar_lea.vmem %s0, 13
    %v6 = vld [vmem:[%s5] sm:$0x1]
    %7 = vrot.lane.b32.xlu0 %v6, 66
    %v8 = vpop.permute.xlu0 %7
    %vm9 = vcmask 589328
    %10 = vst.msk [vmem:[#allocation0] sm:$0x1] %vm9, %v8
    %s11 = scalar_lea.vmem %s0, 12
    %v12 = vld [vmem:[%s11] sm:$0x1]
    %13 = vrot.lane.b32.xlu0 %v12, 60
    %v14 = vpop.permute.xlu0 %13
    %vm15 = vcmask 540128
    %16 = vst.msk [vmem:[#allocation0] sm:$0x1] %vm15, %v14
    %s17 = scalar_lea.vmem %s0, 11
    %v18 = vld [vmem:[%s17] sm:$0x1]
    %19 = vrot.lane.b32.xlu0 %v18, 54
    %v20 = vpop.permute.xlu0 %19
    %vm21 = vcmask 490928
    %22 = vst.msk [vmem:[#allocation0] sm:$0x1] %vm21, %v20
    %s23 = scalar_lea.vmem %s0, 10
    %v24 = vld [vmem:[%s23] sm:$0x1]
    %25 = vrot.lane.b32.xlu0 %v24, 48
    %v26 = vpop.permute.xlu0 %25
    %vm27 = vcmask 441728
    %28 = vst.msk [vmem:[#allocation0] sm:$0x1] %vm27, %v26
    %s29 = scalar_lea.vmem %s0, 9
    %v30 = vld [vmem:[%s29] sm:$0x1]
    %31 = vrot.lane.b32.xlu0 %v30, 42
    %v32 = vpop.permute.xlu0 %31
    %vm33 = vcmask 392528
    %34 = vst.msk [vmem:[#allocation0] sm:$0x1] %vm33, %v32
    %s35 = scalar_lea.vmem %s0, 8
    %v36 = vld [vmem:[%s35] sm:$0x1]
    %37 = vrot.lane.b32.xlu0 %v36, 36
    %v38 = vpop.permute.xlu0 %37
    %vm39 = vcmask 343328
    %40 = vst.msk [vmem:[#allocation0] sm:$0x1] %vm39, %v38
    %s41 = scalar_lea.vmem %s0, 5
    %v42 = vld [vmem:[%s41] sm:$0x1]
    %43 = vrot.lane.b32.xlu0 %v42, 30
    %v44 = vpop.permute.xlu0 %43
    %vm45 = vcmask 294128
    %46 = vst.msk [vmem:[#allocation0] sm:$0x1] %vm45, %v44
    %s47 = scalar_lea.vmem %s0, 4
    %v48 = vld [vmem:[%s47] sm:$0x1]
    %49 = vrot.lane.b32.xlu0 %v48, 24
    %v50 = vpop.permute.xlu0 %49
    %vm51 = vcmask 244928
    %52 = vst.msk [vmem:[#allocation0] sm:$0x1] %vm51, %v50
    %s53 = scalar_lea.vmem %s0, 3
    %v54 = vld [vmem:[%s53] sm:$0x1]
    %55 = vrot.lane.b32.xlu0 %v54, 18
    %v56 = vpop.permute.xlu0 %55
    %vm57 = vcmask 195728
    %58 = vst.msk [vmem:[#allocation0] sm:$0x1] %vm57, %v56
    %s59 = scalar_lea.vmem %s0, 2
    %v60 = vld [vmem:[%s59] sm:$0x1]
    %61 = vrot.lane.b32.xlu0 %v60, 12
    %v62 = vpop.permute.xlu0 %61
    %vm63 = vcmask 146528
    %64 = vst.msk [vmem:[#allocation0] sm:$0x1] %vm63, %v62
    %s65 = scalar_lea.vmem %s0, 1
    %v66 = vld [vmem:[%s65] sm:$0x1]
    %67 = vrot.lane.b32.xlu0 %v66, 6
    %v68 = vpop.permute.xlu0 %67
    %vm69 = vcmask 97328
    %70 = vst.msk [vmem:[#allocation0] sm:$0x1] %vm69, %v68
    %s72 = sshllo.u32 0, 1
    %v74 = vld [vmem:[#allocation0] sm:%s72]
    %s75 = sshllo.u32 0, 1
    %76 = vst [vmem:[%s1] sm:%s75] %v74

// kernel: cnn_gru_forward.1
$region0: #{cnn_gru_forward.1}
  #allocation0 [shape = 'u32[]', space=smem, size = 0x4, offset = 0x4, fixed_abs, tag = 'smem constant byte address 0x4 - core index']
  #allocation1 [shape = 'u32[144,128]{1,0:T(1,128)}', space=vmem, size = 0x12000, scoped, tag = 'internal scratch']
  #allocation2 [shape = 'f32[20,96]{1,0:T(8,128)}', space=vmem, size = 0x3000, scoped, tag = 'scratch operand']
  %s0 = inlined_call_operand.vmem [shape: f32[4,100,72], index: 0, kind: input, shape index: {}]
  %s1 = inlined_call_operand.vmem [shape: f32[10,100], index: 1, kind: input, shape index: {}]
  %s2 = inlined_call_operand.vmem [shape: f32[10,72], index: 2, kind: input, shape index: {}]
  %s3 = inlined_call_operand.vmem [shape: f32[2,20,10], index: 3, kind: input, shape index: {}]
  %s4 = inlined_call_operand.vmem [shape: f32[36,96], index: 4, kind: input, shape index: {}]
  %s5 = inlined_call_operand.vmem [shape: f32[32,96], index: 5, kind: input, shape index: {}]
  %s6 = inlined_call_operand.vmem [shape: f32[1,96], index: 6, kind: input, shape index: {}]
  %s7 = inlined_call_operand.vmem [shape: f32[1,96], index: 7, kind: input, shape index: {}]
  %s8 = inlined_call_operand.vmem [shape: f32[32,96], index: 8, kind: input, shape index: {}]
  %s9 = inlined_call_operand.vmem [shape: f32[32,96], index: 9, kind: input, shape index: {}]
  %s10 = inlined_call_operand.vmem [shape: f32[1,96], index: 10, kind: input, shape index: {}]
  %s11 = inlined_call_operand.vmem [shape: f32[1,96], index: 11, kind: input, shape index: {}]
  %s12 = inlined_call_operand.vmem [shape: f32[32,10], index: 12, kind: input, shape index: {}]
  %s13 = inlined_call_operand.vmem [shape: f32[1,10], index: 13, kind: input, shape index: {}]
  %s14 = inlined_call_operand.hbm [shape: f32[2,10], index: 14, kind: output, shape index: {}]
  %s15 = sld [smem:[#allocation0]]
  $region66: #{cnn_gru_forward.1} parent=0
    _
  %s17 = ssub.s32 1, %s15
  %s18 = scalar_select 0, %s17, %s15
  $region1: #{cnn_gru_forward.1} parent=0
    #allocation3 [shape = 'u8[1024]{0}', space=vmem, size = 0x400, scoped, tag = 'output window, operand 0, single buffered']
    #allocation4 [shape = 's32[1]{0}', space=sflag, size = 0x4, scoped, tag = 'scoped memory for cnn_gru_forward.1']
    %19 = vsyncpa [#allocation4], 0
    // Predicated region
    $region2: #{cnn_gru_forward.1} parent=1 // pred_check
      _
    $region3: #{cnn_gru_forward.1} parent=1 // pred_check_branch
      %21 = sbr.rel (0) target = $region5
    $region4: #{cnn_gru_forward.1} parent=1 // pred_region
      _
    $region5: #{cnn_gru_forward.1} parent=1 // pred_fallthru
      _
    // Predicated region
    $region6: #{cnn_gru_forward.1} parent=1 // pred_check
      _
    $region7: #{cnn_gru_forward.1} parent=1 // pred_check_branch
      %23 = sbr.rel (0) target = $region9
    $region8: #{cnn_gru_forward.1} parent=1 // pred_region
      _
    $region9: #{cnn_gru_forward.1} parent=1 // pred_fallthru
      _
    // Predicated region
    $region10: #{cnn_gru_forward.1} parent=1 // pred_check
      _
    $region11: #{cnn_gru_forward.1} parent=1 // pred_check_branch
      %25 = sbr.rel (0) target = $region13
    $region12: #{cnn_gru_forward.1} parent=1 // pred_region
      _
    $region13: #{cnn_gru_forward.1} parent=1 // pred_fallthru
      _
    // Predicated region
    $region14: #{cnn_gru_forward.1} parent=1 // pred_check
      _
    $region15: #{cnn_gru_forward.1} parent=1 // pred_check_branch
      %27 = sbr.rel (0) target = $region17
    $region16: #{cnn_gru_forward.1} parent=1 // pred_region
      _
    $region17: #{cnn_gru_forward.1} parent=1 // pred_fallthru
      _
    // Predicated region
    $region18: #{cnn_gru_forward.1} parent=1 // pred_check
      _
    $region19: #{cnn_gru_forward.1} parent=1 // pred_check_branch
      %29 = sbr.rel (0) target = $region21
    $region20: #{cnn_gru_forward.1} parent=1 // pred_region
      _
    $region21: #{cnn_gru_forward.1} parent=1 // pred_fallthru
      _
    // Predicated region
    $region22: #{cnn_gru_forward.1} parent=1 // pred_check
      _
    $region23: #{cnn_gru_forward.1} parent=1 // pred_check_branch
      %31 = sbr.rel (0) target = $region25
    $region24: #{cnn_gru_forward.1} parent=1 // pred_region
      _
    $region25: #{cnn_gru_forward.1} parent=1 // pred_fallthru
      _
    // Predicated region
    $region26: #{cnn_gru_forward.1} parent=1 // pred_check
      _
    $region27: #{cnn_gru_forward.1} parent=1 // pred_check_branch
      %33 = sbr.rel (0) target = $region29
    $region28: #{cnn_gru_forward.1} parent=1 // pred_region
      _
    $region29: #{cnn_gru_forward.1} parent=1 // pred_fallthru
      _
    // Predicated region
    $region30: #{cnn_gru_forward.1} parent=1 // pred_check
      _
    $region31: #{cnn_gru_forward.1} parent=1 // pred_check_branch
      %35 = sbr.rel (0) target = $region33
    $region32: #{cnn_gru_forward.1} parent=1 // pred_region
      _
    $region33: #{cnn_gru_forward.1} parent=1 // pred_fallthru
      _
    // Predicated region
    $region34: #{cnn_gru_forward.1} parent=1 // pred_check
      _
    $region35: #{cnn_gru_forward.1} parent=1 // pred_check_branch
      %37 = sbr.rel (0) target = $region37
    $region36: #{cnn_gru_forward.1} parent=1 // pred_region
      _
    $region37: #{cnn_gru_forward.1} parent=1 // pred_fallthru
      _
    // Predicated region
    $region38: #{cnn_gru_forward.1} parent=1 // pred_check
      _
    $region39: #{cnn_gru_forward.1} parent=1 // pred_check_branch
      %39 = sbr.rel (0) target = $region41
    $region40: #{cnn_gru_forward.1} parent=1 // pred_region
      _
    $region41: #{cnn_gru_forward.1} parent=1 // pred_fallthru
      _
    // Predicated region
    $region42: #{cnn_gru_forward.1} parent=1 // pred_check
      _
    $region43: #{cnn_gru_forward.1} parent=1 // pred_check_branch
      %41 = sbr.rel (0) target = $region45
    $region44: #{cnn_gru_forward.1} parent=1 // pred_region
      _
    $region45: #{cnn_gru_forward.1} parent=1 // pred_fallthru
      _
    // Predicated region
    $region46: #{cnn_gru_forward.1} parent=1 // pred_check
      _
    $region47: #{cnn_gru_forward.1} parent=1 // pred_check_branch
      %43 = sbr.rel (0) target = $region49
    $region48: #{cnn_gru_forward.1} parent=1 // pred_region
      _
    $region49: #{cnn_gru_forward.1} parent=1 // pred_fallthru
      _
    // Predicated region
    $region50: #{cnn_gru_forward.1} parent=1 // pred_check
      _
    $region51: #{cnn_gru_forward.1} parent=1 // pred_check_branch
      %45 = sbr.rel (0) target = $region53
    $region52: #{cnn_gru_forward.1} parent=1 // pred_region
      _
    $region53: #{cnn_gru_forward.1} parent=1 // pred_fallthru
      _
    // Predicated region
    $region54: #{cnn_gru_forward.1} parent=1 // pred_check
      _
    $region55: #{cnn_gru_forward.1} parent=1 // pred_check_branch
      %47 = sbr.rel (0) target = $region57
    $region56: #{cnn_gru_forward.1} parent=1 // pred_region
      _
    $region57: #{cnn_gru_forward.1} parent=1 // pred_fallthru
      _
    %v48 = vld [vmem:[%s1] sm:$0xff]
    %v49 = vld [vmem:[%s1 + $0x8] sm:$0x3]
    %v50 = vld [vmem:[%s0] sm:$0xff]
    %v51 = vld [vmem:[%s0 + $0x8] sm:$0xff]
    %v52 = vld [vmem:[%s0 + $0x10] sm:$0xff]
    %v53 = vld [vmem:[%s0 + $0x18] sm:$0xff]
    %v54 = vld [vmem:[%s0 + $0x20] sm:$0xff]
    %v55 = vld [vmem:[%s0 + $0x28] sm:$0xff]
    %v56 = vld [vmem:[%s0 + $0x30] sm:$0xff]
    %v57 = vld [vmem:[%s0 + $0x38] sm:$0xff]
    %v58 = vld [vmem:[%s0 + $0x40] sm:$0xff]
    %v59 = vld [vmem:[%s0 + $0x48] sm:$0xff]
    %v60 = vld [vmem:[%s0 + $0x50] sm:$0xff]
    %v61 = vld [vmem:[%s0 + $0x58] sm:$0xff]
    %v62 = vld [vmem:[%s0 + $0x60] sm:$0xf]
    %vm63 = vcmask 818176
    %v65 = vsel %vm63, %v48, 0
    %v68 = vsel %vm63, %v49, 0
    %vm70 = vcmask 1043456
    %v72 = vsel %vm70, %v62, 0
    %74 = vmatprep.subr.mxu0 0.0
    %75 = vmatpush1.msra.mxu0 %v50
    %76 = vmatprep.subr.mxu0 0.0
    %77 = vmatpush1.msra.mxu0 %v51
    %78 = vmatprep.subr.mxu0 0.0
    %79 = vmatpush1.msra.mxu0 %v52
    %80 = vmatprep.subr.mxu0 0.0
    %81 = vmatpush1.msra.mxu0 %v53
    %82 = vmatprep.subr.mxu0 0.0
    %83 = vmatpush1.msra.mxu0 %v54
    %84 = vmatprep.subr.mxu0 0.0
    %85 = vmatpush1.msra.mxu0 %v55
    %86 = vmatprep.subr.mxu0 0.0
    %87 = vmatpush1.msra.mxu0 %v56
    %88 = vmatprep.subr.mxu0 0.0
    %89 = vmatpush1.msra.mxu0 %v57
    %90 = vmatprep.subr.mxu0 0.0
    %91 = vmatpush1.msra.mxu0 %v58
    %92 = vmatprep.subr.mxu0 0.0
    %93 = vmatpush1.msra.mxu0 %v59
    %94 = vmatprep.subr.mxu0 0.0
    %95 = vmatpush1.msra.mxu0 %v60
    %96 = vmatprep.subr.mxu0 0.0
    %97 = vmatpush1.msra.mxu0 %v61
    %98 = vmatprep.subr.mxu0 0.0
    %99 = vmatpush1.msra.mxu0 %v72
    %100 = vmatprep.subr.mxu0 0.0
    %101 = vmatpush1.msra.mxu0 0.0
    %102 = vmatprep.subr.mxu0 0.0
    %103 = vmatpush1.msra.mxu0 0.0
    %104 = vmatprep.subr.mxu0 0.0
    %105 = vmatpush1.msra.mxu0 0.0
    %106 = vmatprep.subr.mxu0 0.0
    %107 = vmatpush1.msra.mxu0 0.0
    %108 = vmatprep.subr.mxu0 0.0
    %109 = vmatpush1.msra.mxu0 0.0
    %110 = vmatprep.subr.mxu0 0.0
    %111 = vmatpush1.msra.mxu0 0.0
    %112 = vmatprep.subr.mxu0 0.0
    %113 = vmatpush1.msra.mxu0 0.0
    %114 = vmatprep.subr.mxu0 0.0
    %115 = vmatpush1.msra.mxu0 0.0
    %116 = vmatprep.subr.mxu0 0.0
    %117 = vmatpush1.msra.mxu0 0.0
    %118 = vmatprep.subr.mxu0 0.0
    %119 = vmatpush1.msra.mxu0 0.0
    %120 = vmatprep.subr.mxu0 0.0
    %121 = vmatpush1.msra.mxu0 0.0
    %122 = vmatprep.subr.mxu0 0.0
    %123 = vmatpush1.msra.mxu0 0.0
    %124 = vmatprep.subr.mxu0 0.0
    %125 = vmatpush1.msra.mxu0 0.0
    %126 = vmatprep.subr.mxu0 0.0
    %127 = vmatpush1.msra.mxu0 0.0
    %128 = vmatprep.subr.mxu0 0.0
    %129 = vmatpush1.msra.mxu0 0.0
    %130 = vmatprep.subr.mxu0 0.0
    %131 = vmatpush1.msra.mxu0 0.0
    %132 = vmatprep.subr.mxu0 0.0
    %133 = vmatpush1.msra.mxu0 0.0
    %134 = vmatprep.subr.mxu0 0.0
    %135 = vmatpush1.msra.mxu0 0.0
    %136 = vmatprep.subr.mxu0 0.0
    %137 = vmatpush1.msra.mxu0 0.0
    %138 = vmatprep.mubr.f32.mxu0 0.0
    %139 = vmatmul.mubr.f32.gmra.mrb[0].mxu0 %v65
    %v140 = vpop.f32.mrb[0].mxu0
    %v141 = vadd.f32 0.0, %v140
    %v142 = vpop.f32.mrb[0].mxu0
    %143 = vmatprep.mubr.f32.mxu0 0.0
    %144 = vmatmul.mubr.f32.gmra.mrb[0].mxu0 %v68
    %v145 = vpop.f32.mrb[0].mxu0
    %v146 = vadd.f32 0.0, %v145
    %v147 = vpop.f32.mrb[0].mxu0
    %148 = vdwg.mxu0
    %s149 = scalar_lea.vmem %s0, 104
    %v150 = vld [vmem:[%s149] sm:$0xff]
    %v151 = vld [vmem:[%s149 + $0x8] sm:$0xff]
    %v152 = vld [vmem:[%s149 + $0x10] sm:$0xff]
    %v153 = vld [vmem:[%s149 + $0x18] sm:$0xff]
    %v154 = vld [vmem:[%s149 + $0x20] sm:$0xff]
    %v155 = vld [vmem:[%s149 + $0x28] sm:$0xff]
    %v156 = vld [vmem:[%s149 + $0x30] sm:$0xff]
    %v157 = vld [vmem:[%s149 + $0x38] sm:$0xff]
    %v158 = vld [vmem:[%s149 + $0x40] sm:$0xff]
    %v159 = vld [vmem:[%s149 + $0x48] sm:$0xff]
    %v160 = vld [vmem:[%s149 + $0x50] sm:$0xff]
    %v161 = vld [vmem:[%s149 + $0x58] sm:$0xff]
    %v162 = vld [vmem:[%s149 + $0x60] sm:$0xf]
    %v164 = vsel %vm70, %v162, 0
    %166 = vmatprep.subr.mxu0 0.0
    %167 = vmatpush1.msra.mxu0 %v150
    %168 = vmatprep.subr.mxu0 0.0
    %169 = vmatpush1.msra.mxu0 %v151
    %170 = vmatprep.subr.mxu0 0.0
    %171 = vmatpush1.msra.mxu0 %v152
    %172 = vmatprep.subr.mxu0 0.0
    %173 = vmatpush1.msra.mxu0 %v153
    %174 = vmatprep.subr.mxu0 0.0
    %175 = vmatpush1.msra.mxu0 %v154
    %176 = vmatprep.subr.mxu0 0.0
    %177 = vmatpush1.msra.mxu0 %v155
    %178 = vmatprep.subr.mxu0 0.0
    %179 = vmatpush1.msra.mxu0 %v156
    %180 = vmatprep.subr.mxu0 0.0
    %181 = vmatpush1.msra.mxu0 %v157
    %182 = vmatprep.subr.mxu0 0.0
    %183 = vmatpush1.msra.mxu0 %v158
    %184 = vmatprep.subr.mxu0 0.0
    %185 = vmatpush1.msra.mxu0 %v159
    %186 = vmatprep.subr.mxu0 0.0
    %187 = vmatpush1.msra.mxu0 %v160
    %188 = vmatprep.subr.mxu0 0.0
    %189 = vmatpush1.msra.mxu0 %v161
    %190 = vmatprep.subr.mxu0 0.0
    %191 = vmatpush1.msra.mxu0 %v164
    %192 = vmatprep.subr.mxu0 0.0
    %193 = vmatpush1.msra.mxu0 0.0
    %194 = vmatprep.subr.mxu0 0.0
    %195 = vmatpush1.msra.mxu0 0.0
    %196 = vmatprep.subr.mxu0 0.0
    %197 = vmatpush1.msra.mxu0 0.0
    %198 = vmatprep.subr.mxu0 0.0
    %199 = vmatpush1.msra.mxu0 0.0
    %200 = vmatprep.subr.mxu0 0.0
    %201 = vmatpush1.msra.mxu0 0.0
    %202 = vmatprep.subr.mxu0 0.0
    %203 = vmatpush1.msra.mxu0 0.0
    %204 = vmatprep.subr.mxu0 0.0
    %205 = vmatpush1.msra.mxu0 0.0
    %206 = vmatprep.subr.mxu0 0.0
    %207 = vmatpush1.msra.mxu0 0.0
    %208 = vmatprep.subr.mxu0 0.0
    %209 = vmatpush1.msra.mxu0 0.0
    %210 = vmatprep.subr.mxu0 0.0
    %211 = vmatpush1.msra.mxu0 0.0
    %212 = vmatprep.subr.mxu0 0.0
    %213 = vmatpush1.msra.mxu0 0.0
    %214 = vmatprep.subr.mxu0 0.0
    %215 = vmatpush1.msra.mxu0 0.0
    %216 = vmatprep.subr.mxu0 0.0
    %217 = vmatpush1.msra.mxu0 0.0
    %218 = vmatprep.subr.mxu0 0.0
    %219 = vmatpush1.msra.mxu0 0.0
    %220 = vmatprep.subr.mxu0 0.0
    %221 = vmatpush1.msra.mxu0 0.0
    %222 = vmatprep.subr.mxu0 0.0
    %223 = vmatpush1.msra.mxu0 0.0
    %224 = vmatprep.subr.mxu0 0.0
    %225 = vmatpush1.msra.mxu0 0.0
    %226 = vmatprep.subr.mxu0 0.0
    %227 = vmatpush1.msra.mxu0 0.0
    %228 = vmatprep.subr.mxu0 0.0
    %229 = vmatpush1.msra.mxu0 0.0
    %230 = vmatprep.mubr.f32.mxu0 0.0
    %231 = vmatmul.mubr.f32.gmra.mrb[0].mxu0 %v65
    %v232 = vpop.f32.mrb[0].mxu0
    %v233 = vadd.f32 0.0, %v232
    %v234 = vpop.f32.mrb[0].mxu0
    %235 = vmatprep.mubr.f32.mxu0 0.0
    %236 = vmatmul.mubr.f32.gmra.mrb[0].mxu0 %v68
    %v237 = vpop.f32.mrb[0].mxu0
    %v238 = vadd.f32 0.0, %v237
    %v239 = vpop.f32.mrb[0].mxu0
    %240 = vdwg.mxu0
    %v241 = vmax.f32 %v141, %v233
    %v242 = vmax.f32 %v146, %v238
    %s243 = scalar_lea.vmem %s0, 208
    %v244 = vld [vmem:[%s243] sm:$0xff]
    %v245 = vld [vmem:[%s243 + $0x8] sm:$0xff]
    %v246 = vld [vmem:[%s243 + $0x10] sm:$0xff]
    %v247 = vld [vmem:[%s243 + $0x18] sm:$0xff]
    %v248 = vld [vmem:[%s243 + $0x20] sm:$0xff]
    %v249 = vld [vmem:[%s243 + $0x28] sm:$0xff]
    %v250 = vld [vmem:[%s243 + $0x30] sm:$0xff]
    %v251 = vld [vmem:[%s243 + $0x38] sm:$0xff]
    %v252 = vld [vmem:[%s243 + $0x40] sm:$0xff]
    %v253 = vld [vmem:[%s243 + $0x48] sm:$0xff]
    %v254 = vld [vmem:[%s243 + $0x50] sm:$0xff]
    %v255 = vld [vmem:[%s243 + $0x58] sm:$0xff]
    %v256 = vld [vmem:[%s243 + $0x60] sm:$0xf]
    %v258 = vsel %vm70, %v256, 0
    %260 = vmatprep.subr.mxu0 0.0
    %261 = vmatpush1.msra.mxu0 %v244
    %262 = vmatprep.subr.mxu0 0.0
    %263 = vmatpush1.msra.mxu0 %v245
    %264 = vmatprep.subr.mxu0 0.0
    %265 = vmatpush1.msra.mxu0 %v246
    %266 = vmatprep.subr.mxu0 0.0
    %267 = vmatpush1.msra.mxu0 %v247
    %268 = vmatprep.subr.mxu0 0.0
    %269 = vmatpush1.msra.mxu0 %v248
    %270 = vmatprep.subr.mxu0 0.0
    %271 = vmatpush1.msra.mxu0 %v249
    %272 = vmatprep.subr.mxu0 0.0
    %273 = vmatpush1.msra.mxu0 %v250
    %274 = vmatprep.subr.mxu0 0.0
    %275 = vmatpush1.msra.mxu0 %v251
    %276 = vmatprep.subr.mxu0 0.0
    %277 = vmatpush1.msra.mxu0 %v252
    %278 = vmatprep.subr.mxu0 0.0
    %279 = vmatpush1.msra.mxu0 %v253
    %280 = vmatprep.subr.mxu0 0.0
    %281 = vmatpush1.msra.mxu0 %v254
    %282 = vmatprep.subr.mxu0 0.0
    %283 = vmatpush1.msra.mxu0 %v255
    %284 = vmatprep.subr.mxu0 0.0
    %285 = vmatpush1.msra.mxu0 %v258
    %286 = vmatprep.subr.mxu0 0.0
    %287 = vmatpush1.msra.mxu0 0.0
    %288 = vmatprep.subr.mxu0 0.0
    %289 = vmatpush1.msra.mxu0 0.0
    %290 = vmatprep.subr.mxu0 0.0
    %291 = vmatpush1.msra.mxu0 0.0
    %292 = vmatprep.subr.mxu0 0.0
    %293 = vmatpush1.msra.mxu0 0.0
    %294 = vmatprep.subr.mxu0 0.0
    %295 = vmatpush1.msra.mxu0 0.0
    %296 = vmatprep.subr.mxu0 0.0
    %297 = vmatpush1.msra.mxu0 0.0
    %298 = vmatprep.subr.mxu0 0.0
    %299 = vmatpush1.msra.mxu0 0.0
    %300 = vmatprep.subr.mxu0 0.0
    %301 = vmatpush1.msra.mxu0 0.0
    %302 = vmatprep.subr.mxu0 0.0
    %303 = vmatpush1.msra.mxu0 0.0
    %304 = vmatprep.subr.mxu0 0.0
    %305 = vmatpush1.msra.mxu0 0.0
    %306 = vmatprep.subr.mxu0 0.0
    %307 = vmatpush1.msra.mxu0 0.0
    %308 = vmatprep.subr.mxu0 0.0
    %309 = vmatpush1.msra.mxu0 0.0
    %310 = vmatprep.subr.mxu0 0.0
    %311 = vmatpush1.msra.mxu0 0.0
    %312 = vmatprep.subr.mxu0 0.0
    %313 = vmatpush1.msra.mxu0 0.0
    %314 = vmatprep.subr.mxu0 0.0
    %315 = vmatpush1.msra.mxu0 0.0
    %316 = vmatprep.subr.mxu0 0.0
    %317 = vmatpush1.msra.mxu0 0.0
    %318 = vmatprep.subr.mxu0 0.0
    %319 = vmatpush1.msra.mxu0 0.0
    %320 = vmatprep.subr.mxu0 0.0
    %321 = vmatpush1.msra.mxu0 0.0
    %322 = vmatprep.subr.mxu0 0.0
    %323 = vmatpush1.msra.mxu0 0.0
    %324 = vmatprep.mubr.f32.mxu0 0.0
    %325 = vmatmul.mubr.f32.gmra.mrb[0].mxu0 %v65
    %v326 = vpop.f32.mrb[0].mxu0
    %v327 = vadd.f32 0.0, %v326
    %v328 = vpop.f32.mrb[0].mxu0
    %329 = vmatprep.mubr.f32.mxu0 0.0
    %330 = vmatmul.mubr.f32.gmra.mrb[0].mxu0 %v68
    %v331 = vpop.f32.mrb[0].mxu0
    %v332 = vadd.f32 0.0, %v331
    %v333 = vpop.f32.mrb[0].mxu0
    %334 = vdwg.mxu0
    %v335 = vmax.f32 %v241, %v327
    %v336 = vmax.f32 %v242, %v332
    %s337 = scalar_lea.vmem %s0, 312
    %v338 = vld [vmem:[%s337] sm:$0xff]
    %v339 = vld [vmem:[%s337 + $0x8] sm:$0xff]
    %v340 = vld [vmem:[%s337 + $0x10] sm:$0xff]
    %v341 = vld [vmem:[%s337 + $0x18] sm:$0xff]
    %v342 = vld [vmem:[%s337 + $0x20] sm:$0xff]
    %v343 = vld [vmem:[%s337 + $0x28] sm:$0xff]
    %v344 = vld [vmem:[%s337 + $0x30] sm:$0xff]
    %v345 = vld [vmem:[%s337 + $0x38] sm:$0xff]
    %v346 = vld [vmem:[%s337 + $0x40] sm:$0xff]
    %v347 = vld [vmem:[%s337 + $0x48] sm:$0xff]
    %v348 = vld [vmem:[%s337 + $0x50] sm:$0xff]
    %v349 = vld [vmem:[%s337 + $0x58] sm:$0xff]
    %v350 = vld [vmem:[%s337 + $0x60] sm:$0xf]
    %v352 = vsel %vm70, %v350, 0
    %354 = vmatprep.subr.mxu0 0.0
    %355 = vmatpush1.msra.mxu0 %v338
    %356 = vmatprep.subr.mxu0 0.0
    %357 = vmatpush1.msra.mxu0 %v339
    %358 = vmatprep.subr.mxu0 0.0
    %359 = vmatpush1.msra.mxu0 %v340
    %360 = vmatprep.subr.mxu0 0.0
    %361 = vmatpush1.msra.mxu0 %v341
    %362 = vmatprep.subr.mxu0 0.0
    %363 = vmatpush1.msra.mxu0 %v342
    %364 = vmatprep.subr.mxu0 0.0
    %365 = vmatpush1.msra.mxu0 %v343
    %366 = vmatprep.subr.mxu0 0.0
    %367 = vmatpush1.msra.mxu0 %v344
    %368 = vmatprep.subr.mxu0 0.0
    %369 = vmatpush1.msra.mxu0 %v345
    %370 = vmatprep.subr.mxu0 0.0
    %371 = vmatpush1.msra.mxu0 %v346
    %372 = vmatprep.subr.mxu0 0.0
    %373 = vmatpush1.msra.mxu0 %v347
    %374 = vmatprep.subr.mxu0 0.0
    %375 = vmatpush1.msra.mxu0 %v348
    %376 = vmatprep.subr.mxu0 0.0
    %377 = vmatpush1.msra.mxu0 %v349
    %378 = vmatprep.subr.mxu0 0.0
    %379 = vmatpush1.msra.mxu0 %v352
    %380 = vmatprep.subr.mxu0 0.0
    %381 = vmatpush1.msra.mxu0 0.0
    %382 = vmatprep.subr.mxu0 0.0
    %383 = vmatpush1.msra.mxu0 0.0
    %384 = vmatprep.subr.mxu0 0.0
    %385 = vmatpush1.msra.mxu0 0.0
    %386 = vmatprep.subr.mxu0 0.0
    %387 = vmatpush1.msra.mxu0 0.0
    %388 = vmatprep.subr.mxu0 0.0
    %389 = vmatpush1.msra.mxu0 0.0
    %390 = vmatprep.subr.mxu0 0.0
    %391 = vmatpush1.msra.mxu0 0.0
    %392 = vmatprep.subr.mxu0 0.0
    %393 = vmatpush1.msra.mxu0 0.0
    %394 = vmatprep.subr.mxu0 0.0
    %395 = vmatpush1.msra.mxu0 0.0
    %396 = vmatprep.subr.mxu0 0.0
    %397 = vmatpush1.msra.mxu0 0.0
    %398 = vmatprep.subr.mxu0 0.0
    %399 = vmatpush1.msra.mxu0 0.0
    %400 = vmatprep.subr.mxu0 0.0
    %401 = vmatpush1.msra.mxu0 0.0
    %402 = vmatprep.subr.mxu0 0.0
    %403 = vmatpush1.msra.mxu0 0.0
    %404 = vmatprep.subr.mxu0 0.0
    %405 = vmatpush1.msra.mxu0 0.0
    %406 = vmatprep.subr.mxu0 0.0
    %407 = vmatpush1.msra.mxu0 0.0
    %408 = vmatprep.subr.mxu0 0.0
    %409 = vmatpush1.msra.mxu0 0.0
    %410 = vmatprep.subr.mxu0 0.0
    %411 = vmatpush1.msra.mxu0 0.0
    %412 = vmatprep.subr.mxu0 0.0
    %413 = vmatpush1.msra.mxu0 0.0
    %414 = vmatprep.subr.mxu0 0.0
    %415 = vmatpush1.msra.mxu0 0.0
    %416 = vmatprep.subr.mxu0 0.0
    %417 = vmatpush1.msra.mxu0 0.0
    %418 = vmatprep.mubr.f32.mxu0 0.0
    %419 = vmatmul.mubr.f32.gmra.mrb[0].mxu0 %v65
    %v420 = vpop.f32.mrb[0].mxu0
    %v421 = vadd.f32 0.0, %v420
    %v422 = vpop.f32.mrb[0].mxu0
    %423 = vmatprep.mubr.f32.mxu0 0.0
    %424 = vmatmul.mubr.f32.gmra.mrb[0].mxu0 %v68
    %v425 = vpop.f32.mrb[0].mxu0
    %v426 = vadd.f32 0.0, %v425
    %v427 = vpop.f32.mrb[0].mxu0
    %428 = vdwg.mxu0
    %v429 = vmax.f32 %v335, %v421
    %v430 = vmax.f32 %v336, %v426
    %v431 = vld [vmem:[%s2] sm:$0xff]
    %v432 = vld [vmem:[%s2 + $0x8] sm:$0x3]
    %v433 = vadd.f32 %v429, %v431
    %v434 = vadd.f32 %v430, %v432
    %v435 = vld [vmem:[%s4] sm:$0xff]
    %v436 = vld [vmem:[%s4 + $0x8] sm:$0xff]
    %v437 = vld [vmem:[%s4 + $0x10] sm:$0xff]
    %v438 = vld [vmem:[%s4 + $0x18] sm:$0xff]
    %v439 = vld [vmem:[%s4 + $0x20] sm:$0xf]
    %v440 = vld [vmem:[%s8] sm:$0xff]
    %v441 = vld [vmem:[%s8 + $0x8] sm:$0xff]
    %v442 = vld [vmem:[%s8 + $0x10] sm:$0xff]
    %v443 = vld [vmem:[%s8 + $0x18] sm:$0xff]
    %v444 = vld [vmem:[%s5] sm:$0xff]
    %v445 = vld [vmem:[%s5 + $0x8] sm:$0xff]
    %v446 = vld [vmem:[%s5 + $0x10] sm:$0xff]
    %v447 = vld [vmem:[%s5 + $0x18] sm:$0xff]
    %v448 = vld [vmem:[%s9] sm:$0xff]
    %v449 = vld [vmem:[%s9 + $0x8] sm:$0xff]
    %v450 = vld [vmem:[%s9 + $0x10] sm:$0xff]
    %v451 = vld [vmem:[%s9 + $0x18] sm:$0xff]
    %v452 = vld [vmem:[%s10] sm:$0x1]
    %v454 = vlaneseq
    %v455 = vshrl.u32 %v454, 7
    %v456 = vsub.s32 0, %v455
    %v457 = vrot.slane %v452, %v456
    %v459 = vld [vmem:[%s7] sm:$0x1]
    %v461 = vlaneseq
    %v462 = vshrl.u32 %v461, 7
    %v463 = vsub.s32 0, %v462
    %v464 = vrot.slane %v459, %v463
    %v466 = vld [vmem:[%s11] sm:$0x1]
    %v468 = vlaneseq
    %v469 = vshrl.u32 %v468, 7
    %v470 = vsub.s32 0, %v469
    %v471 = vrot.slane %v466, %v470
    %v473 = vld [vmem:[%s6] sm:$0x1]
    %v474 = vld [vmem:[%s3] sm:$0xff]
    %v475 = vld [vmem:[%s3 + $0x8] sm:$0xff]
    %v476 = vld [vmem:[%s3 + $0x10] sm:$0xf]
    %s477 = scalar_lea.vmem %s3, 24
    %v478 = vld [vmem:[%s477] sm:$0xff]
    %v479 = vld [vmem:[%s477 + $0x8] sm:$0xff]
    %v480 = vld [vmem:[%s477 + $0x10] sm:$0xf]
    %483 = vrot.lane.b32.xlu0 %v433, 92
    %v484 = vpop.permute.xlu0 %483
    %485 = vrot.lane.b32.xlu0 %v434, 92
    %v486 = vpop.permute.xlu0 %485
    %vm488 = vcmask 80896
    %v490 = vsel %vm488, %v478, 0
    %v493 = vsel %vm488, %v479, 0
    %v496 = vsel %vm488, %v480, 0
    %vm498 = vcmask 1041408
    %v499 = vsel %vm498, %v486, 0
    %501 = vmatprep.subr.mxu0 0.0
    %502 = vmatpush1.msra.mxu0 %v484
    %503 = vmatprep.subr.mxu0 0.0
    %504 = vmatpush1.msra.mxu0 %v499
    %505 = vmatprep.subr.mxu0 0.0
    %506 = vmatpush1.msra.mxu0 0.0
    %507 = vmatprep.subr.mxu0 0.0
    %508 = vmatpush1.msra.mxu0 0.0
    %509 = vmatprep.subr.mxu0 0.0
    %510 = vmatpush1.msra.mxu0 0.0
    %511 = vmatprep.subr.mxu0 0.0
    %512 = vmatpush1.msra.mxu0 0.0
    %513 = vmatprep.subr.mxu0 0.0
    %514 = vmatpush1.msra.mxu0 0.0
    %515 = vmatprep.subr.mxu0 0.0
    %516 = vmatpush1.msra.mxu0 0.0
    %517 = vmatprep.subr.mxu0 0.0
    %518 = vmatpush1.msra.mxu0 0.0
    %519 = vmatprep.subr.mxu0 0.0
    %520 = vmatpush1.msra.mxu0 0.0
    %521 = vmatprep.subr.mxu0 0.0
    %522 = vmatpush1.msra.mxu0 0.0
    %523 = vmatprep.subr.mxu0 0.0
    %524 = vmatpush1.msra.mxu0 0.0
    %525 = vmatprep.subr.mxu0 0.0
    %526 = vmatpush1.msra.mxu0 0.0
    %527 = vmatprep.subr.mxu0 0.0
    %528 = vmatpush1.msra.mxu0 0.0
    %529 = vmatprep.subr.mxu0 0.0
    %530 = vmatpush1.msra.mxu0 0.0
    %531 = vmatprep.subr.mxu0 0.0
    %532 = vmatpush1.msra.mxu0 0.0
    %533 = vmatprep.subr.mxu0 0.0
    %534 = vmatpush1.msra.mxu0 0.0
    %535 = vmatprep.subr.mxu0 0.0
    %536 = vmatpush1.msra.mxu0 0.0
    %537 = vmatprep.subr.mxu0 0.0
    %538 = vmatpush1.msra.mxu0 0.0
    %539 = vmatprep.subr.mxu0 0.0
    %540 = vmatpush1.msra.mxu0 0.0
    %541 = vmatprep.subr.mxu0 0.0
    %542 = vmatpush1.msra.mxu0 0.0
    %543 = vmatprep.subr.mxu0 0.0
    %544 = vmatpush1.msra.mxu0 0.0
    %545 = vmatprep.subr.mxu0 0.0
    %546 = vmatpush1.msra.mxu0 0.0
    %547 = vmatprep.subr.mxu0 0.0
    %548 = vmatpush1.msra.mxu0 0.0
    %549 = vmatprep.subr.mxu0 0.0
    %550 = vmatpush1.msra.mxu0 0.0
    %551 = vmatprep.subr.mxu0 0.0
    %552 = vmatpush1.msra.mxu0 0.0
    %553 = vmatprep.subr.mxu0 0.0
    %554 = vmatpush1.msra.mxu0 0.0
    %555 = vmatprep.subr.mxu0 0.0
    %556 = vmatpush1.msra.mxu0 0.0
    %557 = vmatprep.subr.mxu0 0.0
    %558 = vmatpush1.msra.mxu0 0.0
    %559 = vmatprep.subr.mxu0 0.0
    %560 = vmatpush1.msra.mxu0 0.0
    %561 = vmatprep.subr.mxu0 0.0
    %562 = vmatpush1.msra.mxu0 0.0
    %563 = vmatprep.subr.mxu0 0.0
    %564 = vmatpush1.msra.mxu0 0.0
    %565 = vmatprep.mubr.f32.mxu0 0.0
    %566 = vmatmul.mubr.f32.gmra.mrb[0].mxu0 %v490
    %v567 = vpop.f32.mrb[0].mxu0
    %v568 = vadd.f32 0.0, %v567
    %v569 = vpop.f32.mrb[0].mxu0
    %570 = vmatprep.mubr.f32.mxu0 0.0
    %571 = vmatmul.mubr.f32.gmra.mrb[0].mxu0 %v493
    %v572 = vpop.f32.mrb[0].mxu0
    %v573 = vadd.f32 0.0, %v572
    %v574 = vpop.f32.mrb[0].mxu0
    %575 = vmatprep.mubr.f32.mxu0 0.0
    %576 = vmatmul.mubr.f32.gmra.mrb[0].mxu0 %v496
    %v577 = vpop.f32.mrb[0].mxu0
    %v578 = vadd.f32 0.0, %v577
    %v579 = vpop.f32.mrb[0].mxu0
    %580 = vdwg.mxu0
    %v582 = vsel %vm488, %v474, 0
    %v585 = vsel %vm488, %v475, 0
    %v588 = vsel %vm488, %v476, 0
    %v590 = vsel %vm498, %v434, 0
    %592 = vmatprep.subr.mxu0 0.0
    %593 = vmatpush1.msra.mxu0 %v433
    %594 = vmatprep.subr.mxu0 0.0
    %595 = vmatpush1.msra.mxu0 %v590
    %596 = vmatprep.subr.mxu0 0.0
    %597 = vmatpush1.msra.mxu0 0.0
    %598 = vmatprep.subr.mxu0 0.0
    %599 = vmatpush1.msra.mxu0 0.0
    %600 = vmatprep.subr.mxu0 0.0
    %601 = vmatpush1.msra.mxu0 0.0
    %602 = vmatprep.subr.mxu0 0.0
    %603 = vmatpush1.msra.mxu0 0.0
    %604 = vmatprep.subr.mxu0 0.0
    %605 = vmatpush1.msra.mxu0 0.0
    %606 = vmatprep.subr.mxu0 0.0
    %607 = vmatpush1.msra.mxu0 0.0
    %608 = vmatprep.subr.mxu0 0.0
    %609 = vmatpush1.msra.mxu0 0.0
    %610 = vmatprep.subr.mxu0 0.0
    %611 = vmatpush1.msra.mxu0 0.0
    %612 = vmatprep.subr.mxu0 0.0
    %613 = vmatpush1.msra.mxu0 0.0
    %614 = vmatprep.subr.mxu0 0.0
    %615 = vmatpush1.msra.mxu0 0.0
    %616 = vmatprep.subr.mxu0 0.0
    %617 = vmatpush1.msra.mxu0 0.0
    %618 = vmatprep.subr.mxu0 0.0
    %619 = vmatpush1.msra.mxu0 0.0
    %620 = vmatprep.subr.mxu0 0.0
    %621 = vmatpush1.msra.mxu0 0.0
    %622 = vmatprep.subr.mxu0 0.0
    %623 = vmatpush1.msra.mxu0 0.0
    %624 = vmatprep.subr.mxu0 0.0
    %625 = vmatpush1.msra.mxu0 0.0
    %626 = vmatprep.subr.mxu0 0.0
    %627 = vmatpush1.msra.mxu0 0.0
    %628 = vmatprep.subr.mxu0 0.0
    %629 = vmatpush1.msra.mxu0 0.0
    %630 = vmatprep.subr.mxu0 0.0
    %631 = vmatpush1.msra.mxu0 0.0
    %632 = vmatprep.subr.mxu0 0.0
    %633 = vmatpush1.msra.mxu0 0.0
    %634 = vmatprep.subr.mxu0 0.0
    %635 = vmatpush1.msra.mxu0 0.0
    %636 = vmatprep.subr.mxu0 0.0
    %637 = vmatpush1.msra.mxu0 0.0
    %638 = vmatprep.subr.mxu0 0.0
    %639 = vmatpush1.msra.mxu0 0.0
    %640 = vmatprep.subr.mxu0 0.0
    %641 = vmatpush1.msra.mxu0 0.0
    %642 = vmatprep.subr.mxu0 0.0
    %643 = vmatpush1.msra.mxu0 0.0
    %644 = vmatprep.subr.mxu0 0.0
    %645 = vmatpush1.msra.mxu0 0.0
    %646 = vmatprep.subr.mxu0 0.0
    %647 = vmatpush1.msra.mxu0 0.0
    %648 = vmatprep.subr.mxu0 0.0
    %649 = vmatpush1.msra.mxu0 0.0
    %650 = vmatprep.subr.mxu0 0.0
    %651 = vmatpush1.msra.mxu0 0.0
    %652 = vmatprep.subr.mxu0 0.0
    %653 = vmatpush1.msra.mxu0 0.0
    %654 = vmatprep.subr.mxu0 0.0
    %655 = vmatpush1.msra.mxu0 0.0
    %656 = vmatprep.mubr.f32.mxu0 0.0
    %657 = vmatmul.mubr.f32.gmra.mrb[0].mxu0 %v582
    %v658 = vpop.f32.mrb[0].mxu0
    %v659 = vadd.f32 %v568, %v658
    %v660 = vpop.f32.mrb[0].mxu0
    %661 = vmatprep.mubr.f32.mxu0 0.0
    %662 = vmatmul.mubr.f32.gmra.mrb[0].mxu0 %v585
    %v663 = vpop.f32.mrb[0].mxu0
    %v664 = vadd.f32 %v573, %v663
    %v665 = vpop.f32.mrb[0].mxu0
    %666 = vmatprep.mubr.f32.mxu0 0.0
    %667 = vmatmul.mubr.f32.gmra.mrb[0].mxu0 %v588
    %v668 = vpop.f32.mrb[0].mxu0
    %v669 = vadd.f32 %v578, %v668
    %v670 = vpop.f32.mrb[0].mxu0
    %671 = vdwg.mxu0
    %v673 = vlaneseq
    %v674 = vshrl.u32 %v673, 7
    %v675 = vsub.s32 0, %v674
    %v676 = vrot.slane %v473, %v675
    %vm678 = vcmask 293888
    %v680 = vsel %vm678, %v659, 0
    %v683 = vsel %vm678, %v664, 0
    %v686 = vsel %vm678, %v669, 0
    %v689 = vsel %vm70, %v439, 0
    %691 = vmatprep.subr.mxu0 0.0
    %692 = vmatpush1.msra.mxu0 %v435
    %693 = vmatprep.subr.mxu0 0.0
    %694 = vmatpush1.msra.mxu0 %v436
    %695 = vmatprep.subr.mxu0 0.0
    %696 = vmatpush1.msra.mxu0 %v437
    %697 = vmatprep.subr.mxu0 0.0
    %698 = vmatpush1.msra.mxu0 %v438
    %699 = vmatprep.subr.mxu0 0.0
    %700 = vmatpush1.msra.mxu0 %v689
    %701 = vmatprep.subr.mxu0 0.0
    %702 = vmatpush1.msra.mxu0 0.0
    %703 = vmatprep.subr.mxu0 0.0
    %704 = vmatpush1.msra.mxu0 0.0
    %705 = vmatprep.subr.mxu0 0.0
    %706 = vmatpush1.msra.mxu0 0.0
    %707 = vmatprep.subr.mxu0 0.0
    %708 = vmatpush1.msra.mxu0 0.0
    %709 = vmatprep.subr.mxu0 0.0
    %710 = vmatpush1.msra.mxu0 0.0
    %711 = vmatprep.subr.mxu0 0.0
    %712 = vmatpush1.msra.mxu0 0.0
    %713 = vmatprep.subr.mxu0 0.0
    %714 = vmatpush1.msra.mxu0 0.0
    %715 = vmatprep.subr.mxu0 0.0
    %716 = vmatpush1.msra.mxu0 0.0
    %717 = vmatprep.subr.mxu0 0.0
    %718 = vmatpush1.msra.mxu0 0.0
    %719 = vmatprep.subr.mxu0 0.0
    %720 = vmatpush1.msra.mxu0 0.0
    %721 = vmatprep.subr.mxu0 0.0
    %722 = vmatpush1.msra.mxu0 0.0
    %723 = vmatprep.subr.mxu0 0.0
    %724 = vmatpush1.msra.mxu0 0.0
    %725 = vmatprep.subr.mxu0 0.0
    %726 = vmatpush1.msra.mxu0 0.0
    %727 = vmatprep.subr.mxu0 0.0
    %728 = vmatpush1.msra.mxu0 0.0
    %729 = vmatprep.subr.mxu0 0.0
    %730 = vmatpush1.msra.mxu0 0.0
    %731 = vmatprep.subr.mxu0 0.0
    %732 = vmatpush1.msra.mxu0 0.0
    %733 = vmatprep.subr.mxu0 0.0
    %734 = vmatpush1.msra.mxu0 0.0
    %735 = vmatprep.subr.mxu0 0.0
    %736 = vmatpush1.msra.mxu0 0.0
    %737 = vmatprep.subr.mxu0 0.0
    %738 = vmatpush1.msra.mxu0 0.0
    %739 = vmatprep.subr.mxu0 0.0
    %740 = vmatpush1.msra.mxu0 0.0
    %741 = vmatprep.subr.mxu0 0.0
    %742 = vmatpush1.msra.mxu0 0.0
    %743 = vmatprep.subr.mxu0 0.0
    %744 = vmatpush1.msra.mxu0 0.0
    %745 = vmatprep.subr.mxu0 0.0
    %746 = vmatpush1.msra.mxu0 0.0
    %747 = vmatprep.subr.mxu0 0.0
    %748 = vmatpush1.msra.mxu0 0.0
    %749 = vmatprep.subr.mxu0 0.0
    %750 = vmatpush1.msra.mxu0 0.0
    %751 = vmatprep.subr.mxu0 0.0
    %752 = vmatpush1.msra.mxu0 0.0
    %753 = vmatprep.subr.mxu0 0.0
    %754 = vmatpush1.msra.mxu0 0.0
    %755 = vmatprep.mubr.f32.mxu0 0.0
    %756 = vmatmul.mubr.f32.gmra.mrb[0].mxu0 %v680
    %v757 = vpop.f32.mrb[0].mxu0
    %v758 = vadd.f32 %v676, %v757
    %v759 = vpop.f32.mrb[0].mxu0
    %760 = vmatprep.mubr.f32.mxu0 0.0
    %761 = vmatmul.mubr.f32.gmra.mrb[0].mxu0 %v683
    %v762 = vpop.f32.mrb[0].mxu0
    %v763 = vadd.f32 %v676, %v762
    %v764 = vpop.f32.mrb[0].mxu0
    %765 = vmatprep.mubr.f32.mxu0 0.0
    %766 = vmatmul.mubr.f32.gmra.mrb[0].mxu0 %v686
    %v767 = vpop.f32.mrb[0].mxu0
    %v768 = vadd.f32 %v676, %v767
    %v769 = vpop.f32.mrb[0].mxu0
    %770 = vdwg.mxu0
    %vm771 = vcmask 785408
    %772 = vst.msk [vmem:[#allocation2] sm:$0xff] %vm771, %v758
    %773 = vst.msk [vmem:[#allocation2 + $0x8] sm:$0xff] %vm771, %v763
    %vm774 = vcmask 781312
    %775 = vst.msk [vmem:[#allocation2 + $0x10] sm:$0xf] %vm774, %v768
    %v776 = vld [vmem:[#allocation2] sm:$0x3]
    %vm777 = vcmask 261120
    %v779 = vsel %vm777, 0.0, 0
    %781 = vmatprep.subr.mxu0 0.0
    %782 = vmatpush1.msra.mxu0 %v444
    %783 = vmatprep.subr.mxu0 0.0
    %784 = vmatpush1.msra.mxu0 %v445
    %785 = vmatprep.subr.mxu0 0.0
    %786 = vmatpush1.msra.mxu0 %v446
    %787 = vmatprep.subr.mxu0 0.0
    %788 = vmatpush1.msra.mxu0 %v447
    %789 = vmatprep.subr.mxu0 0.0
    %790 = vmatpush1.msra.mxu0 0.0
    %791 = vmatprep.subr.mxu0 0.0
    %792 = vmatpush1.msra.mxu0 0.0
    %793 = vmatprep.subr.mxu0 0.0
    %794 = vmatpush1.msra.mxu0 0.0
    %795 = vmatprep.subr.mxu0 0.0
    %796 = vmatpush1.msra.mxu0 0.0
    %797 = vmatprep.subr.mxu0 0.0
    %798 = vmatpush1.msra.mxu0 0.0
    %799 = vmatprep.subr.mxu0 0.0
    %800 = vmatpush1.msra.mxu0 0.0
    %801 = vmatprep.subr.mxu0 0.0
    %802 = vmatpush1.msra.mxu0 0.0
    %803 = vmatprep.subr.mxu0 0.0
    %804 = vmatpush1.msra.mxu0 0.0
    %805 = vmatprep.subr.mxu0 0.0
    %806 = vmatpush1.msra.mxu0 0.0
    %807 = vmatprep.subr.mxu0 0.0
    %808 = vmatpush1.msra.mxu0 0.0
    %809 = vmatprep.subr.mxu0 0.0
    %810 = vmatpush1.msra.mxu0 0.0
    %811 = vmatprep.subr.mxu0 0.0
    %812 = vmatpush1.msra.mxu0 0.0
    %813 = vmatprep.subr.mxu0 0.0
    %814 = vmatpush1.msra.mxu0 0.0
    %815 = vmatprep.subr.mxu0 0.0
    %816 = vmatpush1.msra.mxu0 0.0
    %817 = vmatprep.subr.mxu0 0.0
    %818 = vmatpush1.msra.mxu0 0.0
    %819 = vmatprep.subr.mxu0 0.0
    %820 = vmatpush1.msra.mxu0 0.0
    %821 = vmatprep.subr.mxu0 0.0
    %822 = vmatpush1.msra.mxu0 0.0
    %823 = vmatprep.subr.mxu0 0.0
    %824 = vmatpush1.msra.mxu0 0.0
    %825 = vmatprep.subr.mxu0 0.0
    %826 = vmatpush1.msra.mxu0 0.0
    %827 = vmatprep.subr.mxu0 0.0
    %828 = vmatpush1.msra.mxu0 0.0
    %829 = vmatprep.subr.mxu0 0.0
    %830 = vmatpush1.msra.mxu0 0.0
    %831 = vmatprep.subr.mxu0 0.0
    %832 = vmatpush1.msra.mxu0 0.0
    %833 = vmatprep.subr.mxu0 0.0
    %834 = vmatpush1.msra.mxu0 0.0
    %835 = vmatprep.subr.mxu0 0.0
    %836 = vmatpush1.msra.mxu0 0.0
    %837 = vmatprep.subr.mxu0 0.0
    %838 = vmatpush1.msra.mxu0 0.0
    %839 = vmatprep.subr.mxu0 0.0
    %840 = vmatpush1.msra.mxu0 0.0
    %841 = vmatprep.subr.mxu0 0.0
    %842 = vmatpush1.msra.mxu0 0.0
    %843 = vmatprep.subr.mxu0 0.0
    %844 = vmatpush1.msra.mxu0 0.0
    %845 = vmatprep.mubr.f32.mxu0 0.0
    %846 = vmatmul.mubr.f32.gmra.mrb[0].mxu0 %v779
    %v847 = vpop.f32.mrb[0].mxu0
    %v848 = vadd.f32 %v464, %v847
    %v849 = vpop.f32.mrb[0].mxu0
    %850 = vdwg.mxu0
    %v851 = vadd.f32 %v776, %v848
    %v852 = vxor.u32 %v851, 2147483648
    %v853 = vmul.f32 %v852, 1.442695
    %v854 = vpow.pop %v853
    %v855 = vadd.f32 %v854, 1.0
    %v856 = vrcp.pop %v855
    %v857 = vmul.f32 1.0, %v856
    %859 = vrot.lane.b32.xlu0 %v848, 64
    %v860 = vpop.permute.xlu0 %859
    %v862 = vmul.f32 %v857, %v860
    %864 = vrot.lane.b32.xlu0 %v862, 64
    %v865 = vpop.permute.xlu0 %864
    %v867 = vadd.f32 %v776, %v865
    %v868 = vtanh.pop %v867
    %v869 = vsub.f32 1.0, %v857
    %871 = vrot.lane.b32.xlu0 %v868, 96
    %v872 = vpop.permute.xlu0 %871
    %v874 = vmul.f32 %v869, %v872
    %v875 = vmul.f32 %v857, 0.0
    %v876 = vadd.f32 %v874, %v875
    %878 = vrot.lane.b32.xlu0 %v876, 96
    %v879 = vpop.permute.xlu0 %878
    %v880 = vsel %vm777, %v879, 0
    %882 = vmatprep.subr.mxu0 0.0
    %883 = vmatpush1.msra.mxu0 %v440
    %884 = vmatprep.subr.mxu0 0.0
    %885 = vmatpush1.msra.mxu0 %v441
    %886 = vmatprep.subr.mxu0 0.0
    %887 = vmatpush1.msra.mxu0 %v442
    %888 = vmatprep.subr.mxu0 0.0
    %889 = vmatpush1.msra.mxu0 %v443
    %890 = vmatprep.subr.mxu0 0.0
    %891 = vmatpush1.msra.mxu0 0.0
    %892 = vmatprep.subr.mxu0 0.0
    %893 = vmatpush1.msra.mxu0 0.0
    %894 = vmatprep.subr.mxu0 0.0
    %895 = vmatpush1.msra.mxu0 0.0
    %896 = vmatprep.subr.mxu0 0.0
    %897 = vmatpush1.msra.mxu0 0.0
    %898 = vmatprep.subr.mxu0 0.0
    %899 = vmatpush1.msra.mxu0 0.0
    %900 = vmatprep.subr.mxu0 0.0
    %901 = vmatpush1.msra.mxu0 0.0
    %902 = vmatprep.subr.mxu0 0.0
    %903 = vmatpush1.msra.mxu0 0.0
    %904 = vmatprep.subr.mxu0 0.0
    %905 = vmatpush1.msra.mxu0 0.0
    %906 = vmatprep.subr.mxu0 0.0
    %907 = vmatpush1.msra.mxu0 0.0
    %908 = vmatprep.subr.mxu0 0.0
    %909 = vmatpush1.msra.mxu0 0.0
    %910 = vmatprep.subr.mxu0 0.0
    %911 = vmatpush1.msra.mxu0 0.0
    %912 = vmatprep.subr.mxu0 0.0
    %913 = vmatpush1.msra.mxu0 0.0
    %914 = vmatprep.subr.mxu0 0.0
    %915 = vmatpush1.msra.mxu0 0.0
    %916 = vmatprep.subr.mxu0 0.0
    %917 = vmatpush1.msra.mxu0 0.0
    %918 = vmatprep.subr.mxu0 0.0
    %919 = vmatpush1.msra.mxu0 0.0
    %920 = vmatprep.subr.mxu0 0.0
    %921 = vmatpush1.msra.mxu0 0.0
    %922 = vmatprep.subr.mxu0 0.0
    %923 = vmatpush1.msra.mxu0 0.0
    %924 = vmatprep.subr.mxu0 0.0
    %925 = vmatpush1.msra.mxu0 0.0
    %926 = vmatprep.subr.mxu0 0.0
    %927 = vmatpush1.msra.mxu0 0.0
    %928 = vmatprep.subr.mxu0 0.0
    %929 = vmatpush1.msra.mxu0 0.0
    %930 = vmatprep.subr.mxu0 0.0
    %931 = vmatpush1.msra.mxu0 0.0
    %932 = vmatprep.subr.mxu0 0.0
    %933 = vmatpush1.msra.mxu0 0.0
    %934 = vmatprep.subr.mxu0 0.0
    %935 = vmatpush1.msra.mxu0 0.0
    %936 = vmatprep.subr.mxu0 0.0
    %937 = vmatpush1.msra.mxu0 0.0
    %938 = vmatprep.subr.mxu0 0.0
    %939 = vmatpush1.msra.mxu0 0.0
    %940 = vmatprep.subr.mxu0 0.0
    %941 = vmatpush1.msra.mxu0 0.0
    %942 = vmatprep.subr.mxu0 0.0
    %943 = vmatpush1.msra.mxu0 0.0
    %944 = vmatprep.subr.mxu0 0.0
    %945 = vmatpush1.msra.mxu0 0.0
    %946 = vmatprep.mubr.f32.mxu0 0.0
    %947 = vmatmul.mubr.f32.gmra.mrb[0].mxu0 %v880
    %v948 = vpop.f32.mrb[0].mxu0
    %v949 = vadd.f32 %v457, %v948
    %v950 = vpop.f32.mrb[0].mxu0
    %951 = vdwg.mxu0
    %952 = vmatprep.subr.mxu0 0.0
    %953 = vmatpush1.msra.mxu0 %v448
    %954 = vmatprep.subr.mxu0 0.0
    %955 = vmatpush1.msra.mxu0 %v449
    %956 = vmatprep.subr.mxu0 0.0
    %957 = vmatpush1.msra.mxu0 %v450
    %958 = vmatprep.subr.mxu0 0.0
    %959 = vmatpush1.msra.mxu0 %v451
    %960 = vmatprep.subr.mxu0 0.0
    %961 = vmatpush1.msra.mxu0 0.0
    %962 = vmatprep.subr.mxu0 0.0
    %963 = vmatpush1.msra.mxu0 0.0
    %964 = vmatprep.subr.mxu0 0.0
    %965 = vmatpush1.msra.mxu0 0.0
    %966 = vmatprep.subr.mxu0 0.0
    %967 = vmatpush1.msra.mxu0 0.0
    %968 = vmatprep.subr.mxu0 0.0
    %969 = vmatpush1.msra.mxu0 0.0
    %970 = vmatprep.subr.mxu0 0.0
    %971 = vmatpush1.msra.mxu0 0.0
    %972 = vmatprep.subr.mxu0 0.0
    %973 = vmatpush1.msra.mxu0 0.0
    %974 = vmatprep.subr.mxu0 0.0
    %975 = vmatpush1.msra.mxu0 0.0
    %976 = vmatprep.subr.mxu0 0.0
    %977 = vmatpush1.msra.mxu0 0.0
    %978 = vmatprep.subr.mxu0 0.0
    %979 = vmatpush1.msra.mxu0 0.0
    %980 = vmatprep.subr.mxu0 0.0
    %981 = vmatpush1.msra.mxu0 0.0
    %982 = vmatprep.subr.mxu0 0.0
    %983 = vmatpush1.msra.mxu0 0.0
    %984 = vmatprep.subr.mxu0 0.0
    %985 = vmatpush1.msra.mxu0 0.0
    %986 = vmatprep.subr.mxu0 0.0
    %987 = vmatpush1.msra.mxu0 0.0
    %988 = vmatprep.subr.mxu0 0.0
    %989 = vmatpush1.msra.mxu0 0.0
    %990 = vmatprep.subr.mxu0 0.0
    %991 = vmatpush1.msra.mxu0 0.0
    %992 = vmatprep.subr.mxu0 0.0
    %993 = vmatpush1.msra.mxu0 0.0
    %994 = vmatprep.subr.mxu0 0.0
    %995 = vmatpush1.msra.mxu0 0.0
    %996 = vmatprep.subr.mxu0 0.0
    %997 = vmatpush1.msra.mxu0 0.0
    %998 = vmatprep.subr.mxu0 0.0
    %999 = vmatpush1.msra.mxu0 0.0
    %1000 = vmatprep.subr.mxu0 0.0
    %1001 = vmatpush1.msra.mxu0 0.0
    %1002 = vmatprep.subr.mxu0 0.0
    %1003 = vmatpush1.msra.mxu0 0.0
    %1004 = vmatprep.subr.mxu0 0.0
    %1005 = vmatpush1.msra.mxu0 0.0
    %1006 = vmatprep.subr.mxu0 0.0
    %1007 = vmatpush1.msra.mxu0 0.0
    %1008 = vmatprep.subr.mxu0 0.0
    %1009 = vmatpush1.msra.mxu0 0.0
    %1010 = vmatprep.subr.mxu0 0.0
    %1011 = vmatpush1.msra.mxu0 0.0
    %1012 = vmatprep.subr.mxu0 0.0
    %1013 = vmatpush1.msra.mxu0 0.0
    %1014 = vmatprep.subr.mxu0 0.0
    %1015 = vmatpush1.msra.mxu0 0.0
    %1016 = vmatprep.mubr.f32.mxu0 0.0
    %1017 = vmatmul.mubr.f32.gmra.mrb[0].mxu0 %v779
    %v1018 = vpop.f32.mrb[0].mxu0
    %v1019 = vadd.f32 %v471, %v1018
    %v1020 = vpop.f32.mrb[0].mxu0
    %1021 = vdwg.mxu0
    %v1022 = vadd.f32 %v949, %v1019
    %v1023 = vxor.u32 %v1022, 2147483648
    %v1024 = vmul.f32 %v1023, 1.442695
    %v1025 = vpow.pop %v1024
    %v1026 = vadd.f32 %v1025, 1.0
    %v1027 = vrcp.pop %v1026
    %v1028 = vmul.f32 1.0, %v1027
    %1030 = vrot.lane.b32.xlu0 %v1019, 64
    %v1031 = vpop.permute.xlu0 %1030
    %v1033 = vmul.f32 %v1028, %v1031
    %1035 = vrot.lane.b32.xlu0 %v1033, 64
    %v1036 = vpop.permute.xlu0 %1035
    %v1038 = vadd.f32 %v949, %v1036
    %v1039 = vtanh.pop %v1038
    %v1040 = vsub.f32 1.0, %v1028
    %1042 = vrot.lane.b32.xlu0 %v1039, 96
    %v1043 = vpop.permute.xlu0 %1042
    %v1045 = vmul.f32 %v1040, %v1043
    %v1046 = vmul.f32 %v1028, 0.0
    %v1047 = vadd.f32 %v1045, %v1046
    %v1048 = vld [vmem:[#allocation2 + $0x2] sm:$0x3]
    %1049 = vmatprep.subr.mxu0 0.0
    %1050 = vmatpush1.msra.mxu0 %v444
    %1051 = vmatprep.subr.mxu0 0.0
    %1052 = vmatpush1.msra.mxu0 %v445
    %1053 = vmatprep.subr.mxu0 0.0
    %1054 = vmatpush1.msra.mxu0 %v446
    %1055 = vmatprep.subr.mxu0 0.0
    %1056 = vmatpush1.msra.mxu0 %v447
    %1057 = vmatprep.subr.mxu0 0.0
    %1058 = vmatpush1.msra.mxu0 0.0
    %1059 = vmatprep.subr.mxu0 0.0
    %1060 = vmatpush1.msra.mxu0 0.0
    %1061 = vmatprep.subr.mxu0 0.0
    %1062 = vmatpush1.msra.mxu0 0.0
    %1063 = vmatprep.subr.mxu0 0.0
    %1064 = vmatpush1.msra.mxu0 0.0
    %1065 = vmatprep.subr.mxu0 0.0
    %1066 = vmatpush1.msra.mxu0 0.0
    %1067 = vmatprep.subr.mxu0 0.0
    %1068 = vmatpush1.msra.mxu0 0.0
    %1069 = vmatprep.subr.mxu0 0.0
    %1070 = vmatpush1.msra.mxu0 0.0
    %1071 = vmatprep.subr.mxu0 0.0
    %1072 = vmatpush1.msra.mxu0 0.0
    %1073 = vmatprep.subr.mxu0 0.0
    %1074 = vmatpush1.msra.mxu0 0.0
    %1075 = vmatprep.subr.mxu0 0.0
    %1076 = vmatpush1.msra.mxu0 0.0
    %1077 = vmatprep.subr.mxu0 0.0
    %1078 = vmatpush1.msra.mxu0 0.0
    %1079 = vmatprep.subr.mxu0 0.0
    %1080 = vmatpush1.msra.mxu0 0.0
    %1081 = vmatprep.subr.mxu0 0.0
    %1082 = vmatpush1.msra.mxu0 0.0
    %1083 = vmatprep.subr.mxu0 0.0
    %1084 = vmatpush1.msra.mxu0 0.0
    %1085 = vmatprep.subr.mxu0 0.0
    %1086 = vmatpush1.msra.mxu0 0.0
    %1087 = vmatprep.subr.mxu0 0.0
    %1088 = vmatpush1.msra.mxu0 0.0
    %1089 = vmatprep.subr.mxu0 0.0
    %1090 = vmatpush1.msra.mxu0 0.0
    %1091 = vmatprep.subr.mxu0 0.0
    %1092 = vmatpush1.msra.mxu0 0.0
    %1093 = vmatprep.subr.mxu0 0.0
    %1094 = vmatpush1.msra.mxu0 0.0
    %1095 = vmatprep.subr.mxu0 0.0
    %1096 = vmatpush1.msra.mxu0 0.0
    %1097 = vmatprep.subr.mxu0 0.0
    %1098 = vmatpush1.msra.mxu0 0.0
    %1099 = vmatprep.subr.mxu0 0.0
    %1100 = vmatpush1.msra.mxu0 0.0
    %1101 = vmatprep.subr.mxu0 0.0
    %1102 = vmatpush1.msra.mxu0 0.0
    %1103 = vmatprep.subr.mxu0 0.0
    %1104 = vmatpush1.msra.mxu0 0.0
    %1105 = vmatprep.subr.mxu0 0.0
    %1106 = vmatpush1.msra.mxu0 0.0
    %1107 = vmatprep.subr.mxu0 0.0
    %1108 = vmatpush1.msra.mxu0 0.0
    %1109 = vmatprep.subr.mxu0 0.0
    %1110 = vmatpush1.msra.mxu0 0.0
    %1111 = vmatprep.subr.mxu0 0.0
    %1112 = vmatpush1.msra.mxu0 0.0
    %1113 = vmatprep.mubr.f32.mxu0 0.0
    %1114 = vmatmul.mubr.f32.gmra.mrb[0].mxu0 %v880
    %v1115 = vpop.f32.mrb[0].mxu0
    %v1116 = vadd.f32 %v464, %v1115
    %v1117 = vpop.f32.mrb[0].mxu0
    %1118 = vdwg.mxu0
    %v1119 = vadd.f32 %v1048, %v1116
    %v1120 = vxor.u32 %v1119, 2147483648
    %v1121 = vmul.f32 %v1120, 1.442695
    %v1122 = vpow.pop %v1121
    %v1123 = vadd.f32 %v1122, 1.0
    %v1124 = vrcp.pop %v1123
    %v1125 = vmul.f32 1.0, %v1124
    %1127 = vrot.lane.b32.xlu0 %v1116, 64
    %v1128 = vpop.permute.xlu0 %1127
    %v1130 = vmul.f32 %v1125, %v1128
    %1132 = vrot.lane.b32.xlu0 %v1130, 64
    %v1133 = vpop.permute.xlu0 %1132
    %v1135 = vadd.f32 %v1048, %v1133
    %v1136 = vtanh.pop %v1135
    %v1137 = vsub.f32 1.0, %v1125
    %1139 = vrot.lane.b32.xlu0 %v1136, 96
    %v1140 = vpop.permute.xlu0 %1139
    %v1142 = vmul.f32 %v1137, %v1140
    %v1143 = vmul.f32 %v1125, %v876
    %v1144 = vadd.f32 %v1142, %v1143
    %1146 = vrot.lane.b32.xlu0 %v1144, 96
    %v1147 = vpop.permute.xlu0 %1146
    %v1148 = vsel %vm777, %v1147, 0
    %1150 = vmatprep.subr.mxu0 0.0
    %1151 = vmatpush1.msra.mxu0 %v440
    %1152 = vmatprep.subr.mxu0 0.0
    %1153 = vmatpush1.msra.mxu0 %v441
    %1154 = vmatprep.subr.mxu0 0.0
    %1155 = vmatpush1.msra.mxu0 %v442
    %1156 = vmatprep.subr.mxu0 0.0
    %1157 = vmatpush1.msra.mxu0 %v443
    %1158 = vmatprep.subr.mxu0 0.0
    %1159 = vmatpush1.msra.mxu0 0.0
    %1160 = vmatprep.subr.mxu0 0.0
    %1161 = vmatpush1.msra.mxu0 0.0
    %1162 = vmatprep.subr.mxu0 0.0
    %1163 = vmatpush1.msra.mxu0 0.0
    %1164 = vmatprep.subr.mxu0 0.0
    %1165 = vmatpush1.msra.mxu0 0.0
    %1166 = vmatprep.subr.mxu0 0.0
    %1167 = vmatpush1.msra.mxu0 0.0
    %1168 = vmatprep.subr.mxu0 0.0
    %1169 = vmatpush1.msra.mxu0 0.0
    %1170 = vmatprep.subr.mxu0 0.0
    %1171 = vmatpush1.msra.mxu0 0.0
    %1172 = vmatprep.subr.mxu0 0.0
    %1173 = vmatpush1.msra.mxu0 0.0
    %1174 = vmatprep.subr.mxu0 0.0
    %1175 = vmatpush1.msra.mxu0 0.0
    %1176 = vmatprep.subr.mxu0 0.0
    %1177 = vmatpush1.msra.mxu0 0.0
    %1178 = vmatprep.subr.mxu0 0.0
    %1179 = vmatpush1.msra.mxu0 0.0
    %1180 = vmatprep.subr.mxu0 0.0
    %1181 = vmatpush1.msra.mxu0 0.0
    %1182 = vmatprep.subr.mxu0 0.0
    %1183 = vmatpush1.msra.mxu0 0.0
    %1184 = vmatprep.subr.mxu0 0.0
    %1185 = vmatpush1.msra.mxu0 0.0
    %1186 = vmatprep.subr.mxu0 0.0
    %1187 = vmatpush1.msra.mxu0 0.0
    %1188 = vmatprep.subr.mxu0 0.0
    %1189 = vmatpush1.msra.mxu0 0.0
    %1190 = vmatprep.subr.mxu0 0.0
    %1191 = vmatpush1.msra.mxu0 0.0
    %1192 = vmatprep.subr.mxu0 0.0
    %1193 = vmatpush1.msra.mxu0 0.0
    %1194 = vmatprep.subr.mxu0 0.0
    %1195 = vmatpush1.msra.mxu0 0.0
    %1196 = vmatprep.subr.mxu0 0.0
    %1197 = vmatpush1.msra.mxu0 0.0
    %1198 = vmatprep.subr.mxu0 0.0
    %1199 = vmatpush1.msra.mxu0 0.0
    %1200 = vmatprep.subr.mxu0 0.0
    %1201 = vmatpush1.msra.mxu0 0.0
    %1202 = vmatprep.subr.mxu0 0.0
    %1203 = vmatpush1.msra.mxu0 0.0
    %1204 = vmatprep.subr.mxu0 0.0
    %1205 = vmatpush1.msra.mxu0 0.0
    %1206 = vmatprep.subr.mxu0 0.0
    %1207 = vmatpush1.msra.mxu0 0.0
    %1208 = vmatprep.subr.mxu0 0.0
    %1209 = vmatpush1.msra.mxu0 0.0
    %1210 = vmatprep.subr.mxu0 0.0
    %1211 = vmatpush1.msra.mxu0 0.0
    %1212 = vmatprep.subr.mxu0 0.0
    %1213 = vmatpush1.msra.mxu0 0.0
    %1214 = vmatprep.mubr.f32.mxu0 0.0
    %1215 = vmatmul.mubr.f32.gmra.mrb[0].mxu0 %v1148
    %v1216 = vpop.f32.mrb[0].mxu0
    %v1217 = vadd.f32 %v457, %v1216
    %v1218 = vpop.f32.mrb[0].mxu0
    %1219 = vdwg.mxu0
    %1221 = vrot.lane.b32.xlu0 %v1047, 96
    %v1222 = vpop.permute.xlu0 %1221
    %v1223 = vsel %vm777, %v1222, 0
    %1225 = vmatprep.subr.mxu0 0.0
    %1226 = vmatpush1.msra.mxu0 %v448
    %1227 = vmatprep.subr.mxu0 0.0
    %1228 = vmatpush1.msra.mxu0 %v449
    %1229 = vmatprep.subr.mxu0 0.0
    %1230 = vmatpush1.msra.mxu0 %v450
    %1231 = vmatprep.subr.mxu0 0.0
    %1232 = vmatpush1.msra.mxu0 %v451
    %1233 = vmatprep.subr.mxu0 0.0
    %1234 = vmatpush1.msra.mxu0 0.0
    %1235 = vmatprep.subr.mxu0 0.0
    %1236 = vmatpush1.msra.mxu0 0.0
    %1237 = vmatprep.subr.mxu0 0.0
    %1238 = vmatpush1.msra.mxu0 0.0
    %1239 = vmatprep.subr.mxu0 0.0
    %1240 = vmatpush1.msra.mxu0 0.0
    %1241 = vmatprep.subr.mxu0 0.0
    %1242 = vmatpush1.msra.mxu0 0.0
    %1243 = vmatprep.subr.mxu0 0.0
    %1244 = vmatpush1.msra.mxu0 0.0
    %1245 = vmatprep.subr.mxu0 0.0
    %1246 = vmatpush1.msra.mxu0 0.0
    %1247 = vmatprep.subr.mxu0 0.0
    %1248 = vmatpush1.msra.mxu0 0.0
    %1249 = vmatprep.subr.mxu0 0.0
    %1250 = vmatpush1.msra.mxu0 0.0
    %1251 = vmatprep.subr.mxu0 0.0
    %1252 = vmatpush1.msra.mxu0 0.0
    %1253 = vmatprep.subr.mxu0 0.0
    %1254 = vmatpush1.msra.mxu0 0.0
    %1255 = vmatprep.subr.mxu0 0.0
    %1256 = vmatpush1.msra.mxu0 0.0
    %1257 = vmatprep.subr.mxu0 0.0
    %1258 = vmatpush1.msra.mxu0 0.0
    %1259 = vmatprep.subr.mxu0 0.0
    %1260 = vmatpush1.msra.mxu0 0.0
    %1261 = vmatprep.subr.mxu0 0.0
    %1262 = vmatpush1.msra.mxu0 0.0
    %1263 = vmatprep.subr.mxu0 0.0
    %1264 = vmatpush1.msra.mxu0 0.0
    %1265 = vmatprep.subr.mxu0 0.0
    %1266 = vmatpush1.msra.mxu0 0.0
    %1267 = vmatprep.subr.mxu0 0.0
    %1268 = vmatpush1.msra.mxu0 0.0
    %1269 = vmatprep.subr.mxu0 0.0
    %1270 = vmatpush1.msra.mxu0 0.0
    %1271 = vmatprep.subr.mxu0 0.0
    %1272 = vmatpush1.msra.mxu0 0.0
    %1273 = vmatprep.subr.mxu0 0.0
    %1274 = vmatpush1.msra.mxu0 0.0
    %1275 = vmatprep.subr.mxu0 0.0
    %1276 = vmatpush1.msra.mxu0 0.0
    %1277 = vmatprep.subr.mxu0 0.0
    %1278 = vmatpush1.msra.mxu0 0.0
    %1279 = vmatprep.subr.mxu0 0.0
    %1280 = vmatpush1.msra.mxu0 0.0
    %1281 = vmatprep.subr.mxu0 0.0
    %1282 = vmatpush1.msra.mxu0 0.0
    %1283 = vmatprep.subr.mxu0 0.0
    %1284 = vmatpush1.msra.mxu0 0.0
    %1285 = vmatprep.subr.mxu0 0.0
    %1286 = vmatpush1.msra.mxu0 0.0
    %1287 = vmatprep.subr.mxu0 0.0
    %1288 = vmatpush1.msra.mxu0 0.0
    %1289 = vmatprep.mubr.f32.mxu0 0.0
    %1290 = vmatmul.mubr.f32.gmra.mrb[0].mxu0 %v1223
    %v1291 = vpop.f32.mrb[0].mxu0
    %v1292 = vadd.f32 %v471, %v1291
    %v1293 = vpop.f32.mrb[0].mxu0
    %1294 = vdwg.mxu0
    %v1295 = vadd.f32 %v1217, %v1292
    %v1296 = vxor.u32 %v1295, 2147483648
    %v1297 = vmul.f32 %v1296, 1.442695
    %v1298 = vpow.pop %v1297
    %v1299 = vadd.f32 %v1298, 1.0
    %v1300 = vrcp.pop %v1299
    %v1301 = vmul.f32 1.0, %v1300
    %1303 = vrot.lane.b32.xlu0 %v1292, 64
    %v1304 = vpop.permute.xlu0 %1303
    %v1306 = vmul.f32 %v1301, %v1304
    %1308 = vrot.lane.b32.xlu0 %v1306, 64
    %v1309 = vpop.permute.xlu0 %1308
    %v1311 = vadd.f32 %v1217, %v1309
    %v1312 = vtanh.pop %v1311
    %v1313 = vsub.f32 1.0, %v1301
    %1315 = vrot.lane.b32.xlu0 %v1312, 96
    %v1316 = vpop.permute.xlu0 %1315
    %v1318 = vmul.f32 %v1313, %v1316
    %v1319 = vmul.f32 %v1301, %v1047
    %v1320 = vadd.f32 %v1318, %v1319
    %v1321 = vld [vmem:[#allocation2 + $0x4] sm:$0x3]
    %1322 = vmatprep.subr.mxu0 0.0
    %1323 = vmatpush1.msra.mxu0 %v444
    %1324 = vmatprep.subr.mxu0 0.0
    %1325 = vmatpush1.msra.mxu0 %v445
    %1326 = vmatprep.subr.mxu0 0.0
    %1327 = vmatpush1.msra.mxu0 %v446
    %1328 = vmatprep.subr.mxu0 0.0
    %1329 = vmatpush1.msra.mxu0 %v447
    %1330 = vmatprep.subr.mxu0 0.0
    %1331 = vmatpush1.msra.mxu0 0.0
    %1332 = vmatprep.subr.mxu0 0.0
    %1333 = vmatpush1.msra.mxu0 0.0
    %1334 = vmatprep.subr.mxu0 0.0
    %1335 = vmatpush1.msra.mxu0 0.0
    %1336 = vmatprep.subr.mxu0 0.0
    %1337 = vmatpush1.msra.mxu0 0.0
    %1338 = vmatprep.subr.mxu0 0.0
    %1339 = vmatpush1.msra.mxu0 0.0
    %1340 = vmatprep.subr.mxu0 0.0
    %1341 = vmatpush1.msra.mxu0 0.0
    %1342 = vmatprep.subr.mxu0 0.0
    %1343 = vmatpush1.msra.mxu0 0.0
    %1344 = vmatprep.subr.mxu0 0.0
    %1345 = vmatpush1.msra.mxu0 0.0
    %1346 = vmatprep.subr.mxu0 0.0
    %1347 = vmatpush1.msra.mxu0 0.0
    %1348 = vmatprep.subr.mxu0 0.0
    %1349 = vmatpush1.msra.mxu0 0.0
    %1350 = vmatprep.subr.mxu0 0.0
    %1351 = vmatpush1.msra.mxu0 0.0
    %1352 = vmatprep.subr.mxu0 0.0
    %1353 = vmatpush1.msra.mxu0 0.0
    %1354 = vmatprep.subr.mxu0 0.0
    %1355 = vmatpush1.msra.mxu0 0.0
    %1356 = vmatprep.subr.mxu0 0.0
    %1357 = vmatpush1.msra.mxu0 0.0
    %1358 = vmatprep.subr.mxu0 0.0
    %1359 = vmatpush1.msra.mxu0 0.0
    %1360 = vmatprep.subr.mxu0 0.0
    %1361 = vmatpush1.msra.mxu0 0.0
    %1362 = vmatprep.subr.mxu0 0.0
    %1363 = vmatpush1.msra.mxu0 0.0
    %1364 = vmatprep.subr.mxu0 0.0
    %1365 = vmatpush1.msra.mxu0 0.0
    %1366 = vmatprep.subr.mxu0 0.0
    %1367 = vmatpush1.msra.mxu0 0.0
    %1368 = vmatprep.subr.mxu0 0.0
    %1369 = vmatpush1.msra.mxu0 0.0
    %1370 = vmatprep.subr.mxu0 0.0
    %1371 = vmatpush1.msra.mxu0 0.0
    %1372 = vmatprep.subr.mxu0 0.0
    %1373 = vmatpush1.msra.mxu0 0.0
    %1374 = vmatprep.subr.mxu0 0.0
    %1375 = vmatpush1.msra.mxu0 0.0
    %1376 = vmatprep.subr.mxu0 0.0
    %1377 = vmatpush1.msra.mxu0 0.0
    %1378 = vmatprep.subr.mxu0 0.0
    %1379 = vmatpush1.msra.mxu0 0.0
    %1380 = vmatprep.subr.mxu0 0.0
    %1381 = vmatpush1.msra.mxu0 0.0
    %1382 = vmatprep.subr.mxu0 0.0
    %1383 = vmatpush1.msra.mxu0 0.0
    %1384 = vmatprep.subr.mxu0 0.0
    %1385 = vmatpush1.msra.mxu0 0.0
    %1386 = vmatprep.mubr.f32.mxu0 0.0
    %1387 = vmatmul.mubr.f32.gmra.mrb[0].mxu0 %v1148
    %v1388 = vpop.f32.mrb[0].mxu0
    %v1389 = vadd.f32 %v464, %v1388
    %v1390 = vpop.f32.mrb[0].mxu0
    %1391 = vdwg.mxu0
    %v1392 = vadd.f32 %v1321, %v1389
    %v1393 = vxor.u32 %v1392, 2147483648
    %v1394 = vmul.f32 %v1393, 1.442695
    %v1395 = vpow.pop %v1394
    %v1396 = vadd.f32 %v1395, 1.0
    %v1397 = vrcp.pop %v1396
    %v1398 = vmul.f32 1.0, %v1397
    %1400 = vrot.lane.b32.xlu0 %v1389, 64
    %v1401 = vpop.permute.xlu0 %1400
    %v1403 = vmul.f32 %v1398, %v1401
    %1405 = vrot.lane.b32.xlu0 %v1403, 64
    %v1406 = vpop.permute.xlu0 %1405
    %v1408 = vadd.f32 %v1321, %v1406
    %v1409 = vtanh.pop %v1408
    %v1410 = vsub.f32 1.0, %v1398
    %1412 = vrot.lane.b32.xlu0 %v1409, 96
    %v1413 = vpop.permute.xlu0 %1412
    %v1415 = vmul.f32 %v1410, %v1413
    %v1416 = vmul.f32 %v1398, %v1144
    %v1417 = vadd.f32 %v1415, %v1416
    %1419 = vrot.lane.b32.xlu0 %v1417, 96
    %v1420 = vpop.permute.xlu0 %1419
    %v1421 = vsel %vm777, %v1420, 0
    %1423 = vmatprep.subr.mxu0 0.0
    %1424 = vmatpush1.msra.mxu0 %v440
    %1425 = vmatprep.subr.mxu0 0.0
    %1426 = vmatpush1.msra.mxu0 %v441
    %1427 = vmatprep.subr.mxu0 0.0
    %1428 = vmatpush1.msra.mxu0 %v442
    %1429 = vmatprep.subr.mxu0 0.0
    %1430 = vmatpush1.msra.mxu0 %v443
    %1431 = vmatprep.subr.mxu0 0.0
    %1432 = vmatpush1.msra.mxu0 0.0
    %1433 = vmatprep.subr.mxu0 0.0
    %1434 = vmatpush1.msra.mxu0 0.0
    %1435 = vmatprep.subr.mxu0 0.0
    %1436 = vmatpush1.msra.mxu0 0.0
    %1437 = vmatprep.subr.mxu0 0.0
    %1438 = vmatpush1.msra.mxu0 0.0
    %1439 = vmatprep.subr.mxu0 0.0
    %1440 = vmatpush1.msra.mxu0 0.0
    %1441 = vmatprep.subr.mxu0 0.0
    %1442 = vmatpush1.msra.mxu0 0.0
    %1443 = vmatprep.subr.mxu0 0.0
    %1444 = vmatpush1.msra.mxu0 0.0
    %1445 = vmatprep.subr.mxu0 0.0
    %1446 = vmatpush1.msra.mxu0 0.0
    %1447 = vmatprep.subr.mxu0 0.0
    %1448 = vmatpush1.msra.mxu0 0.0
    %1449 = vmatprep.subr.mxu0 0.0
    %1450 = vmatpush1.msra.mxu0 0.0
    %1451 = vmatprep.subr.mxu0 0.0
    %1452 = vmatpush1.msra.mxu0 0.0
    %1453 = vmatprep.subr.mxu0 0.0
    %1454 = vmatpush1.msra.mxu0 0.0
    %1455 = vmatprep.subr.mxu0 0.0
    %1456 = vmatpush1.msra.mxu0 0.0
    %1457 = vmatprep.subr.mxu0 0.0
    %1458 = vmatpush1.msra.mxu0 0.0
    %1459 = vmatprep.subr.mxu0 0.0
    %1460 = vmatpush1.msra.mxu0 0.0
    %1461 = vmatprep.subr.mxu0 0.0
    %1462 = vmatpush1.msra.mxu0 0.0
    %1463 = vmatprep.subr.mxu0 0.0
    %1464 = vmatpush1.msra.mxu0 0.0
    %1465 = vmatprep.subr.mxu0 0.0
    %1466 = vmatpush1.msra.mxu0 0.0
    %1467 = vmatprep.subr.mxu0 0.0
    %1468 = vmatpush1.msra.mxu0 0.0
    %1469 = vmatprep.subr.mxu0 0.0
    %1470 = vmatpush1.msra.mxu0 0.0
    %1471 = vmatprep.subr.mxu0 0.0
    %1472 = vmatpush1.msra.mxu0 0.0
    %1473 = vmatprep.subr.mxu0 0.0
    %1474 = vmatpush1.msra.mxu0 0.0
    %1475 = vmatprep.subr.mxu0 0.0
    %1476 = vmatpush1.msra.mxu0 0.0
    %1477 = vmatprep.subr.mxu0 0.0
    %1478 = vmatpush1.msra.mxu0 0.0
    %1479 = vmatprep.subr.mxu0 0.0
    %1480 = vmatpush1.msra.mxu0 0.0
    %1481 = vmatprep.subr.mxu0 0.0
    %1482 = vmatpush1.msra.mxu0 0.0
    %1483 = vmatprep.subr.mxu0 0.0
    %1484 = vmatpush1.msra.mxu0 0.0
    %1485 = vmatprep.subr.mxu0 0.0
    %1486 = vmatpush1.msra.mxu0 0.0
    %1487 = vmatprep.mubr.f32.mxu0 0.0
    %1488 = vmatmul.mubr.f32.gmra.mrb[0].mxu0 %v1421
    %v1489 = vpop.f32.mrb[0].mxu0
    %v1490 = vadd.f32 %v457, %v1489
    %v1491 = vpop.f32.mrb[0].mxu0
    %1492 = vdwg.mxu0
    %1494 = vrot.lane.b32.xlu0 %v1320, 96
    %v1495 = vpop.permute.xlu0 %1494
    %v1496 = vsel %vm777, %v1495, 0
    %1498 = vmatprep.subr.mxu0 0.0
    %1499 = vmatpush1.msra.mxu0 %v448
    %1500 = vmatprep.subr.mxu0 0.0
    %1501 = vmatpush1.msra.mxu0 %v449
    %1502 = vmatprep.subr.mxu0 0.0
    %1503 = vmatpush1.msra.mxu0 %v450
    %1504 = vmatprep.subr.mxu0 0.0
    %1505 = vmatpush1.msra.mxu0 %v451
    %1506 = vmatprep.subr.mxu0 0.0
    %1507 = vmatpush1.msra.mxu0 0.0
    %1508 = vmatprep.subr.mxu0 0.0
    %1509 = vmatpush1.msra.mxu0 0.0
    %1510 = vmatprep.subr.mxu0 0.0
    %1511 = vmatpush1.msra.mxu0 0.0
    %1512 = vmatprep.subr.mxu0 0.0
    %1513 = vmatpush1.msra.mxu0 0.0
    %1514 = vmatprep.subr.mxu0 0.0
    %1515 = vmatpush1.msra.mxu0 0.0
    %1516 = vmatprep.subr.mxu0 0.0
    %1517 = vmatpush1.msra.mxu0 0.0
    %1518 = vmatprep.subr.mxu0 0.0
    %1519 = vmatpush1.msra.mxu0 0.0
    %1520 = vmatprep.subr.mxu0 0.0
    %1521 = vmatpush1.msra.mxu0 0.0
    %1522 = vmatprep.subr.mxu0 0.0
    %1523 = vmatpush1.msra.mxu0 0.0
    %1524 = vmatprep.subr.mxu0 0.0
    %1525 = vmatpush1.msra.mxu0 0.0
    %1526 = vmatprep.subr.mxu0 0.0
    %1527 = vmatpush1.msra.mxu0 0.0
    %1528 = vmatprep.subr.mxu0 0.0
    %1529 = vmatpush1.msra.mxu0 0.0
    %1530 = vmatprep.subr.mxu0 0.0
    %1531 = vmatpush1.msra.mxu0 0.0
    %1532 = vmatprep.subr.mxu0 0.0
    %1533 = vmatpush1.msra.mxu0 0.0
    %1534 = vmatprep.subr.mxu0 0.0
    %1535 = vmatpush1.msra.mxu0 0.0
    %1536 = vmatprep.subr.mxu0 0.0
    %1537 = vmatpush1.msra.mxu0 0.0
    %1538 = vmatprep.subr.mxu0 0.0
    %1539 = vmatpush1.msra.mxu0 0.0
    %1540 = vmatprep.subr.mxu0 0.0
    %1541 = vmatpush1.msra.mxu0 0.0
    %1542 = vmatprep.subr.mxu0 0.0
    %1543 = vmatpush1.msra.mxu0 0.0
    %1544 = vmatprep.subr.mxu0 0.0
    %1545 = vmatpush1.msra.mxu0 0.0
    %1546 = vmatprep.subr.mxu0 0.0
    %1547 = vmatpush1.msra.mxu0 0.0
    %1548 = vmatprep.subr.mxu0 0.0
    %1549 = vmatpush1.msra.mxu0 0.0
    %1550 = vmatprep.subr.mxu0 0.0
    %1551 = vmatpush1.msra.mxu0 0.0
    %1552 = vmatprep.subr.mxu0 0.0
    %1553 = vmatpush1.msra.mxu0 0.0
    %1554 = vmatprep.subr.mxu0 0.0
    %1555 = vmatpush1.msra.mxu0 0.0
    %1556 = vmatprep.subr.mxu0 0.0
    %1557 = vmatpush1.msra.mxu0 0.0
    %1558 = vmatprep.subr.mxu0 0.0
    %1559 = vmatpush1.msra.mxu0 0.0
    %1560 = vmatprep.subr.mxu0 0.0
    %1561 = vmatpush1.msra.mxu0 0.0
    %1562 = vmatprep.mubr.f32.mxu0 0.0
    %1563 = vmatmul.mubr.f32.gmra.mrb[0].mxu0 %v1496
    %v1564 = vpop.f32.mrb[0].mxu0
    %v1565 = vadd.f32 %v471, %v1564
    %v1566 = vpop.f32.mrb[0].mxu0
    %1567 = vdwg.mxu0
    %v1568 = vadd.f32 %v1490, %v1565
    %v1569 = vxor.u32 %v1568, 2147483648
    %v1570 = vmul.f32 %v1569, 1.442695
    %v1571 = vpow.pop %v1570
    %v1572 = vadd.f32 %v1571, 1.0
    %v1573 = vrcp.pop %v1572
    %v1574 = vmul.f32 1.0, %v1573
    %1576 = vrot.lane.b32.xlu0 %v1565, 64
    %v1577 = vpop.permute.xlu0 %1576
    %v1579 = vmul.f32 %v1574, %v1577
    %1581 = vrot.lane.b32.xlu0 %v1579, 64
    %v1582 = vpop.permute.xlu0 %1581
    %v1584 = vadd.f32 %v1490, %v1582
    %v1585 = vtanh.pop %v1584
    %v1586 = vsub.f32 1.0, %v1574
    %1588 = vrot.lane.b32.xlu0 %v1585, 96
    %v1589 = vpop.permute.xlu0 %1588
    %v1591 = vmul.f32 %v1586, %v1589
    %v1592 = vmul.f32 %v1574, %v1320
    %v1593 = vadd.f32 %v1591, %v1592
    %v1594 = vld [vmem:[#allocation2 + $0x6] sm:$0x3]
    %1595 = vmatprep.subr.mxu0 0.0
    %1596 = vmatpush1.msra.mxu0 %v444
    %1597 = vmatprep.subr.mxu0 0.0
    %1598 = vmatpush1.msra.mxu0 %v445
    %1599 = vmatprep.subr.mxu0 0.0
    %1600 = vmatpush1.msra.mxu0 %v446
    %1601 = vmatprep.subr.mxu0 0.0
    %1602 = vmatpush1.msra.mxu0 %v447
    %1603 = vmatprep.subr.mxu0 0.0
    %1604 = vmatpush1.msra.mxu0 0.0
    %1605 = vmatprep.subr.mxu0 0.0
    %1606 = vmatpush1.msra.mxu0 0.0
    %1607 = vmatprep.subr.mxu0 0.0
    %1608 = vmatpush1.msra.mxu0 0.0
    %1609 = vmatprep.subr.mxu0 0.0
    %1610 = vmatpush1.msra.mxu0 0.0
    %1611 = vmatprep.subr.mxu0 0.0
    %1612 = vmatpush1.msra.mxu0 0.0
    %1613 = vmatprep.subr.mxu0 0.0
    %1614 = vmatpush1.msra.mxu0 0.0
    %1615 = vmatprep.subr.mxu0 0.0
    %1616 = vmatpush1.msra.mxu0 0.0
    %1617 = vmatprep.subr.mxu0 0.0
    %1618 = vmatpush1.msra.mxu0 0.0
    %1619 = vmatprep.subr.mxu0 0.0
    %1620 = vmatpush1.msra.mxu0 0.0
    %1621 = vmatprep.subr.mxu0 0.0
    %1622 = vmatpush1.msra.mxu0 0.0
    %1623 = vmatprep.subr.mxu0 0.0
    %1624 = vmatpush1.msra.mxu0 0.0
    %1625 = vmatprep.subr.mxu0 0.0
    %1626 = vmatpush1.msra.mxu0 0.0
    %1627 = vmatprep.subr.mxu0 0.0
    %1628 = vmatpush1.msra.mxu0 0.0
    %1629 = vmatprep.subr.mxu0 0.0
    %1630 = vmatpush1.msra.mxu0 0.0
    %1631 = vmatprep.subr.mxu0 0.0
    %1632 = vmatpush1.msra.mxu0 0.0
    %1633 = vmatprep.subr.mxu0 0.0
    %1634 = vmatpush1.msra.mxu0 0.0
    %1635 = vmatprep.subr.mxu0 0.0
    %1636 = vmatpush1.msra.mxu0 0.0
    %1637 = vmatprep.subr.mxu0 0.0
    %1638 = vmatpush1.msra.mxu0 0.0
    %1639 = vmatprep.subr.mxu0 0.0
    %1640 = vmatpush1.msra.mxu0 0.0
    %1641 = vmatprep.subr.mxu0 0.0
    %1642 = vmatpush1.msra.mxu0 0.0
    %1643 = vmatprep.subr.mxu0 0.0
    %1644 = vmatpush1.msra.mxu0 0.0
    %1645 = vmatprep.subr.mxu0 0.0
    %1646 = vmatpush1.msra.mxu0 0.0
    %1647 = vmatprep.subr.mxu0 0.0
    %1648 = vmatpush1.msra.mxu0 0.0
    %1649 = vmatprep.subr.mxu0 0.0
    %1650 = vmatpush1.msra.mxu0 0.0
    %1651 = vmatprep.subr.mxu0 0.0
    %1652 = vmatpush1.msra.mxu0 0.0
    %1653 = vmatprep.subr.mxu0 0.0
    %1654 = vmatpush1.msra.mxu0 0.0
    %1655 = vmatprep.subr.mxu0 0.0
    %1656 = vmatpush1.msra.mxu0 0.0
    %1657 = vmatprep.subr.mxu0 0.0
    %1658 = vmatpush1.msra.mxu0 0.0
    %1659 = vmatprep.mubr.f32.mxu0 0.0
    %1660 = vmatmul.mubr.f32.gmra.mrb[0].mxu0 %v1421
    %v1661 = vpop.f32.mrb[0].mxu0
    %v1662 = vadd.f32 %v464, %v1661
    %v1663 = vpop.f32.mrb[0].mxu0
    %1664 = vdwg.mxu0
    %v1665 = vadd.f32 %v1594, %v1662
    %v1666 = vxor.u32 %v1665, 2147483648
    %v1667 = vmul.f32 %v1666, 1.442695
    %v1668 = vpow.pop %v1667
    %v1669 = vadd.f32 %v1668, 1.0
    %v1670 = vrcp.pop %v1669
    %v1671 = vmul.f32 1.0, %v1670
    %1673 = vrot.lane.b32.xlu0 %v1662, 64
    %v1674 = vpop.permute.xlu0 %1673
    %v1676 = vmul.f32 %v1671, %v1674
    %1678 = vrot.lane.b32.xlu0 %v1676, 64
    %v1679 = vpop.permute.xlu0 %1678
    %v1681 = vadd.f32 %v1594, %v1679
    %v1682 = vtanh.pop %v1681
    %v1683 = vsub.f32 1.0, %v1671
    %1685 = vrot.lane.b32.xlu0 %v1682, 96
    %v1686 = vpop.permute.xlu0 %1685
    %v1688 = vmul.f32 %v1683, %v1686
    %v1689 = vmul.f32 %v1671, %v1417
    %v1690 = vadd.f32 %v1688, %v1689
    %1692 = vrot.lane.b32.xlu0 %v1690, 96
    %v1693 = vpop.permute.xlu0 %1692
    %v1694 = vsel %vm777, %v1693, 0
    %1696 = vmatprep.subr.mxu0 0.0
    %1697 = vmatpush1.msra.mxu0 %v440
    %1698 = vmatprep.subr.mxu0 0.0
    %1699 = vmatpush1.msra.mxu0 %v441
    %1700 = vmatprep.subr.mxu0 0.0
    %1701 = vmatpush1.msra.mxu0 %v442
    %1702 = vmatprep.subr.mxu0 0.0
    %1703 = vmatpush1.msra.mxu0 %v443
    %1704 = vmatprep.subr.mxu0 0.0
    %1705 = vmatpush1.msra.mxu0 0.0
    %1706 = vmatprep.subr.mxu0 0.0
    %1707 = vmatpush1.msra.mxu0 0.0
    %1708 = vmatprep.subr.mxu0 0.0
    %1709 = vmatpush1.msra.mxu0 0.0
    %1710 = vmatprep.subr.mxu0 0.0
    %1711 = vmatpush1.msra.mxu0 0.0
    %1712 = vmatprep.subr.mxu0 0.0
    %1713 = vmatpush1.msra.mxu0 0.0
    %1714 = vmatprep.subr.mxu0 0.0
    %1715 = vmatpush1.msra.mxu0 0.0
    %1716 = vmatprep.subr.mxu0 0.0
    %1717 = vmatpush1.msra.mxu0 0.0
    %1718 = vmatprep.subr.mxu0 0.0
    %1719 = vmatpush1.msra.mxu0 0.0
    %1720 = vmatprep.subr.mxu0 0.0
    %1721 = vmatpush1.msra.mxu0 0.0
    %1722 = vmatprep.subr.mxu0 0.0
    %1723 = vmatpush1.msra.mxu0 0.0
    %1724 = vmatprep.subr.mxu0 0.0
    %1725 = vmatpush1.msra.mxu0 0.0
    %1726 = vmatprep.subr.mxu0 0.0
    %1727 = vmatpush1.msra.mxu0 0.0
    %1728 = vmatprep.subr.mxu0 0.0
    %1729 = vmatpush1.msra.mxu0 0.0
    %1730 = vmatprep.subr.mxu0 0.0
    %1731 = vmatpush1.msra.mxu0 0.0
    %1732 = vmatprep.subr.mxu0 0.0
    %1733 = vmatpush1.msra.mxu0 0.0
    %1734 = vmatprep.subr.mxu0 0.0
    %1735 = vmatpush1.msra.mxu0 0.0
    %1736 = vmatprep.subr.mxu0 0.0
    %1737 = vmatpush1.msra.mxu0 0.0
    %1738 = vmatprep.subr.mxu0 0.0
    %1739 = vmatpush1.msra.mxu0 0.0
    %1740 = vmatprep.subr.mxu0 0.0
    %1741 = vmatpush1.msra.mxu0 0.0
    %1742 = vmatprep.subr.mxu0 0.0
    %1743 = vmatpush1.msra.mxu0 0.0
    %1744 = vmatprep.subr.mxu0 0.0
    %1745 = vmatpush1.msra.mxu0 0.0
    %1746 = vmatprep.subr.mxu0 0.0
    %1747 = vmatpush1.msra.mxu0 0.0
    %1748 = vmatprep.subr.mxu0 0.0
    %1749 = vmatpush1.msra.mxu0 0.0
    %1750 = vmatprep.subr.mxu0 0.0
    %1751 = vmatpush1.msra.mxu0 0.0
    %1752 = vmatprep.subr.mxu0 0.0
    %1753 = vmatpush1.msra.mxu0 0.0
    %1754 = vmatprep.subr.mxu0 0.0
    %1755 = vmatpush1.msra.mxu0 0.0
    %1756 = vmatprep.subr.mxu0 0.0
    %1757 = vmatpush1.msra.mxu0 0.0
    %1758 = vmatprep.subr.mxu0 0.0
    %1759 = vmatpush1.msra.mxu0 0.0
    %1760 = vmatprep.mubr.f32.mxu0 0.0
    %1761 = vmatmul.mubr.f32.gmra.mrb[0].mxu0 %v1694
    %v1762 = vpop.f32.mrb[0].mxu0
    %v1763 = vadd.f32 %v457, %v1762
    %v1764 = vpop.f32.mrb[0].mxu0
    %1765 = vdwg.mxu0
    %1767 = vrot.lane.b32.xlu0 %v1593, 96
    %v1768 = vpop.permute.xlu0 %1767
    %v1769 = vsel %vm777, %v1768, 0
    %1771 = vmatprep.subr.mxu0 0.0
    %1772 = vmatpush1.msra.mxu0 %v448
    %1773 = vmatprep.subr.mxu0 0.0
    %1774 = vmatpush1.msra.mxu0 %v449
    %1775 = vmatprep.subr.mxu0 0.0
    %1776 = vmatpush1.msra.mxu0 %v450
    %1777 = vmatprep.subr.mxu0 0.0
    %1778 = vmatpush1.msra.mxu0 %v451
    %1779 = vmatprep.subr.mxu0 0.0
    %1780 = vmatpush1.msra.mxu0 0.0
    %1781 = vmatprep.subr.mxu0 0.0
    %1782 = vmatpush1.msra.mxu0 0.0
    %1783 = vmatprep.subr.mxu0 0.0
    %1784 = vmatpush1.msra.mxu0 0.0
    %1785 = vmatprep.subr.mxu0 0.0
    %1786 = vmatpush1.msra.mxu0 0.0
    %1787 = vmatprep.subr.mxu0 0.0
    %1788 = vmatpush1.msra.mxu0 0.0
    %1789 = vmatprep.subr.mxu0 0.0
    %1790 = vmatpush1.msra.mxu0 0.0
    %1791 = vmatprep.subr.mxu0 0.0
    %1792 = vmatpush1.msra.mxu0 0.0
    %1793 = vmatprep.subr.mxu0 0.0
    %1794 = vmatpush1.msra.mxu0 0.0
    %1795 = vmatprep.subr.mxu0 0.0
    %1796 = vmatpush1.msra.mxu0 0.0
    %1797 = vmatprep.subr.mxu0 0.0
    %1798 = vmatpush1.msra.mxu0 0.0
    %1799 = vmatprep.subr.mxu0 0.0
    %1800 = vmatpush1.msra.mxu0 0.0
    %1801 = vmatprep.subr.mxu0 0.0
    %1802 = vmatpush1.msra.mxu0 0.0
    %1803 = vmatprep.subr.mxu0 0.0
    %1804 = vmatpush1.msra.mxu0 0.0
    %1805 = vmatprep.subr.mxu0 0.0
    %1806 = vmatpush1.msra.mxu0 0.0
    %1807 = vmatprep.subr.mxu0 0.0
    %1808 = vmatpush1.msra.mxu0 0.0
    %1809 = vmatprep.subr.mxu0 0.0
    %1810 = vmatpush1.msra.mxu0 0.0
    %1811 = vmatprep.subr.mxu0 0.0
    %1812 = vmatpush1.msra.mxu0 0.0
    %1813 = vmatprep.subr.mxu0 0.0
    %1814 = vmatpush1.msra.mxu0 0.0
    %1815 = vmatprep.subr.mxu0 0.0
    %1816 = vmatpush1.msra.mxu0 0.0
    %1817 = vmatprep.subr.mxu0 0.0
    %1818 = vmatpush1.msra.mxu0 0.0
    %1819 = vmatprep.subr.mxu0 0.0
    %1820 = vmatpush1.msra.mxu0 0.0
    %1821 = vmatprep.subr.mxu0 0.0
    %1822 = vmatpush1.msra.mxu0 0.0
    %1823 = vmatprep.subr.mxu0 0.0
    %1824 = vmatpush1.msra.mxu0 0.0
    %1825 = vmatprep.subr.mxu0 0.0
    %1826 = vmatpush1.msra.mxu0 0.0
    %1827 = vmatprep.subr.mxu0 0.0
    %1828 = vmatpush1.msra.mxu0 0.0
    %1829 = vmatprep.subr.mxu0 0.0
    %1830 = vmatpush1.msra.mxu0 0.0
    %1831 = vmatprep.subr.mxu0 0.0
    %1832 = vmatpush1.msra.mxu0 0.0
    %1833 = vmatprep.subr.mxu0 0.0
    %1834 = vmatpush1.msra.mxu0 0.0
    %1835 = vmatprep.mubr.f32.mxu0 0.0
    %1836 = vmatmul.mubr.f32.gmra.mrb[0].mxu0 %v1769
    %v1837 = vpop.f32.mrb[0].mxu0
    %v1838 = vadd.f32 %v471, %v1837
    %v1839 = vpop.f32.mrb[0].mxu0
    %1840 = vdwg.mxu0
    %v1841 = vadd.f32 %v1763, %v1838
    %v1842 = vxor.u32 %v1841, 2147483648
    %v1843 = vmul.f32 %v1842, 1.442695
    %v1844 = vpow.pop %v1843
    %v1845 = vadd.f32 %v1844, 1.0
    %v1846 = vrcp.pop %v1845
    %v1847 = vmul.f32 1.0, %v1846
    %1849 = vrot.lane.b32.xlu0 %v1838, 64
    %v1850 = vpop.permute.xlu0 %1849
    %v1852 = vmul.f32 %v1847, %v1850
    %1854 = vrot.lane.b32.xlu0 %v1852, 64
    %v1855 = vpop.permute.xlu0 %1854
    %v1857 = vadd.f32 %v1763, %v1855
    %v1858 = vtanh.pop %v1857
    %v1859 = vsub.f32 1.0, %v1847
    %1861 = vrot.lane.b32.xlu0 %v1858, 96
    %v1862 = vpop.permute.xlu0 %1861
    %v1864 = vmul.f32 %v1859, %v1862
    %v1865 = vmul.f32 %v1847, %v1593
    %v1866 = vadd.f32 %v1864, %v1865
    %v1867 = vld [vmem:[#allocation2 + $0x8] sm:$0x3]
    %1868 = vmatprep.subr.mxu0 0.0
    %1869 = vmatpush1.msra.mxu0 %v444
    %1870 = vmatprep.subr.mxu0 0.0
    %1871 = vmatpush1.msra.mxu0 %v445
    %1872 = vmatprep.subr.mxu0 0.0
    %1873 = vmatpush1.msra.mxu0 %v446
    %1874 = vmatprep.subr.mxu0 0.0
    %1875 = vmatpush1.msra.mxu0 %v447
    %1876 = vmatprep.subr.mxu0 0.0
    %1877 = vmatpush1.msra.mxu0 0.0
    %1878 = vmatprep.subr.mxu0 0.0
    %1879 = vmatpush1.msra.mxu0 0.0
    %1880 = vmatprep.subr.mxu0 0.0
    %1881 = vmatpush1.msra.mxu0 0.0
    %1882 = vmatprep.subr.mxu0 0.0
    %1883 = vmatpush1.msra.mxu0 0.0
    %1884 = vmatprep.subr.mxu0 0.0
    %1885 = vmatpush1.msra.mxu0 0.0
    %1886 = vmatprep.subr.mxu0 0.0
    %1887 = vmatpush1.msra.mxu0 0.0
    %1888 = vmatprep.subr.mxu0 0.0
    %1889 = vmatpush1.msra.mxu0 0.0
    %1890 = vmatprep.subr.mxu0 0.0
    %1891 = vmatpush1.msra.mxu0 0.0
    %1892 = vmatprep.subr.mxu0 0.0
    %1893 = vmatpush1.msra.mxu0 0.0
    %1894 = vmatprep.subr.mxu0 0.0
    %1895 = vmatpush1.msra.mxu0 0.0
    %1896 = vmatprep.subr.mxu0 0.0
    %1897 = vmatpush1.msra.mxu0 0.0
    %1898 = vmatprep.subr.mxu0 0.0
    %1899 = vmatpush1.msra.mxu0 0.0
    %1900 = vmatprep.subr.mxu0 0.0
    %1901 = vmatpush1.msra.mxu0 0.0
    %1902 = vmatprep.subr.mxu0 0.0
    %1903 = vmatpush1.msra.mxu0 0.0
    %1904 = vmatprep.subr.mxu0 0.0
    %1905 = vmatpush1.msra.mxu0 0.0
    %1906 = vmatprep.subr.mxu0 0.0
    %1907 = vmatpush1.msra.mxu0 0.0
    %1908 = vmatprep.subr.mxu0 0.0
    %1909 = vmatpush1.msra.mxu0 0.0
    %1910 = vmatprep.subr.mxu0 0.0
    %1911 = vmatpush1.msra.mxu0 0.0
    %1912 = vmatprep.subr.mxu0 0.0
    %1913 = vmatpush1.msra.mxu0 0.0
    %1914 = vmatprep.subr.mxu0 0.0
    %1915 = vmatpush1.msra.mxu0 0.0
    %1916 = vmatprep.subr.mxu0 0.0
    %1917 = vmatpush1.msra.mxu0 0.0
    %1918 = vmatprep.subr.mxu0 0.0
    %1919 = vmatpush1.msra.mxu0 0.0
    %1920 = vmatprep.subr.mxu0 0.0
    %1921 = vmatpush1.msra.mxu0 0.0
    %1922 = vmatprep.subr.mxu0 0.0
    %1923 = vmatpush1.msra.mxu0 0.0
    %1924 = vmatprep.subr.mxu0 0.0
    %1925 = vmatpush1.msra.mxu0 0.0
    %1926 = vmatprep.subr.mxu0 0.0
    %1927 = vmatpush1.msra.mxu0 0.0
    %1928 = vmatprep.subr.mxu0 0.0
    %1929 = vmatpush1.msra.mxu0 0.0
    %1930 = vmatprep.subr.mxu0 0.0
    %1931 = vmatpush1.msra.mxu0 0.0
    %1932 = vmatprep.mubr.f32.mxu0 0.0
    %1933 = vmatmul.mubr.f32.gmra.mrb[0].mxu0 %v1694
    %v1934 = vpop.f32.mrb[0].mxu0
    %v1935 = vadd.f32 %v464, %v1934
    %v1936 = vpop.f32.mrb[0].mxu0
    %1937 = vdwg.mxu0
    %v1938 = vadd.f32 %v1867, %v1935
    %v1939 = vxor.u32 %v1938, 2147483648
    %v1940 = vmul.f32 %v1939, 1.442695
    %v1941 = vpow.pop %v1940
    %v1942 = vadd.f32 %v1941, 1.0
    %v1943 = vrcp.pop %v1942
    %v1944 = vmul.f32 1.0, %v1943
    %1946 = vrot.lane.b32.xlu0 %v1935, 64
    %v1947 = vpop.permute.xlu0 %1946
    %v1949 = vmul.f32 %v1944, %v1947
    %1951 = vrot.lane.b32.xlu0 %v1949, 64
    %v1952 = vpop.permute.xlu0 %1951
    %v1954 = vadd.f32 %v1867, %v1952
    %v1955 = vtanh.pop %v1954
    %v1956 = vsub.f32 1.0, %v1944
    %1958 = vrot.lane.b32.xlu0 %v1955, 96
    %v1959 = vpop.permute.xlu0 %1958
    %v1961 = vmul.f32 %v1956, %v1959
    %v1962 = vmul.f32 %v1944, %v1690
    %v1963 = vadd.f32 %v1961, %v1962
    %1965 = vrot.lane.b32.xlu0 %v1963, 96
    %v1966 = vpop.permute.xlu0 %1965
    %v1967 = vsel %vm777, %v1966, 0
    %1969 = vmatprep.subr.mxu0 0.0
    %1970 = vmatpush1.msra.mxu0 %v440
    %1971 = vmatprep.subr.mxu0 0.0
    %1972 = vmatpush1.msra.mxu0 %v441
    %1973 = vmatprep.subr.mxu0 0.0
    %1974 = vmatpush1.msra.mxu0 %v442
    %1975 = vmatprep.subr.mxu0 0.0
    %1976 = vmatpush1.msra.mxu0 %v443
    %1977 = vmatprep.subr.mxu0 0.0
    %1978 = vmatpush1.msra.mxu0 0.0
    %1979 = vmatprep.subr.mxu0 0.0
    %1980 = vmatpush1.msra.mxu0 0.0
    %1981 = vmatprep.subr.mxu0 0.0
    %1982 = vmatpush1.msra.mxu0 0.0
    %1983 = vmatprep.subr.mxu0 0.0
    %1984 = vmatpush1.msra.mxu0 0.0
    %1985 = vmatprep.subr.mxu0 0.0
    %1986 = vmatpush1.msra.mxu0 0.0
    %1987 = vmatprep.subr.mxu0 0.0
    %1988 = vmatpush1.msra.mxu0 0.0
    %1989 = vmatprep.subr.mxu0 0.0
    %1990 = vmatpush1.msra.mxu0 0.0
    %1991 = vmatprep.subr.mxu0 0.0
    %1992 = vmatpush1.msra.mxu0 0.0
    %1993 = vmatprep.subr.mxu0 0.0
    %1994 = vmatpush1.msra.mxu0 0.0
    %1995 = vmatprep.subr.mxu0 0.0
    %1996 = vmatpush1.msra.mxu0 0.0
    %1997 = vmatprep.subr.mxu0 0.0
    %1998 = vmatpush1.msra.mxu0 0.0
    %1999 = vmatprep.subr.mxu0 0.0
    %2000 = vmatpush1.msra.mxu0 0.0
    %2001 = vmatprep.subr.mxu0 0.0
    %2002 = vmatpush1.msra.mxu0 0.0
    %2003 = vmatprep.subr.mxu0 0.0
    %2004 = vmatpush1.msra.mxu0 0.0
    %2005 = vmatprep.subr.mxu0 0.0
    %2006 = vmatpush1.msra.mxu0 0.0
    %2007 = vmatprep.subr.mxu0 0.0
    %2008 = vmatpush1.msra.mxu0 0.0
    %2009 = vmatprep.subr.mxu0 0.0
    %2010 = vmatpush1.msra.mxu0 0.0
    %2011 = vmatprep.subr.mxu0 0.0
    %2012 = vmatpush1.msra.mxu0 0.0
    %2013 = vmatprep.subr.mxu0 0.0
    %2014 = vmatpush1.msra.mxu0 0.0
    %2015 = vmatprep.subr.mxu0 0.0
    %2016 = vmatpush1.msra.mxu0 0.0
    %2017 = vmatprep.subr.mxu0 0.0
    %2018 = vmatpush1.msra.mxu0 0.0
    %2019 = vmatprep.subr.mxu0 0.0
    %2020 = vmatpush1.msra.mxu0 0.0
    %2021 = vmatprep.subr.mxu0 0.0
    %2022 = vmatpush1.msra.mxu0 0.0
    %2023 = vmatprep.subr.mxu0 0.0
    %2024 = vmatpush1.msra.mxu0 0.0
    %2025 = vmatprep.subr.mxu0 0.0
    %2026 = vmatpush1.msra.mxu0 0.0
    %2027 = vmatprep.subr.mxu0 0.0
    %2028 = vmatpush1.msra.mxu0 0.0
    %2029 = vmatprep.subr.mxu0 0.0
    %2030 = vmatpush1.msra.mxu0 0.0
    %2031 = vmatprep.subr.mxu0 0.0
    %2032 = vmatpush1.msra.mxu0 0.0
    %2033 = vmatprep.mubr.f32.mxu0 0.0
    %2034 = vmatmul.mubr.f32.gmra.mrb[0].mxu0 %v1967
    %v2035 = vpop.f32.mrb[0].mxu0
    %v2036 = vadd.f32 %v457, %v2035
    %v2037 = vpop.f32.mrb[0].mxu0
    %2038 = vdwg.mxu0
    %2040 = vrot.lane.b32.xlu0 %v1866, 96
    %v2041 = vpop.permute.xlu0 %2040
    %v2042 = vsel %vm777, %v2041, 0
    %2044 = vmatprep.subr.mxu0 0.0
    %2045 = vmatpush1.msra.mxu0 %v448
    %2046 = vmatprep.subr.mxu0 0.0
    %2047 = vmatpush1.msra.mxu0 %v449
    %2048 = vmatprep.subr.mxu0 0.0
    %2049 = vmatpush1.msra.mxu0 %v450
    %2050 = vmatprep.subr.mxu0 0.0
    %2051 = vmatpush1.msra.mxu0 %v451
    %2052 = vmatprep.subr.mxu0 0.0
    %2053 = vmatpush1.msra.mxu0 0.0
    %2054 = vmatprep.subr.mxu0 0.0
    %2055 = vmatpush1.msra.mxu0 0.0
    %2056 = vmatprep.subr.mxu0 0.0
    %2057 = vmatpush1.msra.mxu0 0.0
    %2058 = vmatprep.subr.mxu0 0.0
    %2059 = vmatpush1.msra.mxu0 0.0
    %2060 = vmatprep.subr.mxu0 0.0
    %2061 = vmatpush1.msra.mxu0 0.0
    %2062 = vmatprep.subr.mxu0 0.0
    %2063 = vmatpush1.msra.mxu0 0.0
    %2064 = vmatprep.subr.mxu0 0.0
    %2065 = vmatpush1.msra.mxu0 0.0
    %2066 = vmatprep.subr.mxu0 0.0
    %2067 = vmatpush1.msra.mxu0 0.0
    %2068 = vmatprep.subr.mxu0 0.0
    %2069 = vmatpush1.msra.mxu0 0.0
    %2070 = vmatprep.subr.mxu0 0.0
    %2071 = vmatpush1.msra.mxu0 0.0
    %2072 = vmatprep.subr.mxu0 0.0
    %2073 = vmatpush1.msra.mxu0 0.0
    %2074 = vmatprep.subr.mxu0 0.0
    %2075 = vmatpush1.msra.mxu0 0.0
    %2076 = vmatprep.subr.mxu0 0.0
    %2077 = vmatpush1.msra.mxu0 0.0
    %2078 = vmatprep.subr.mxu0 0.0
    %2079 = vmatpush1.msra.mxu0 0.0
    %2080 = vmatprep.subr.mxu0 0.0
    %2081 = vmatpush1.msra.mxu0 0.0
    %2082 = vmatprep.subr.mxu0 0.0
    %2083 = vmatpush1.msra.mxu0 0.0
    %2084 = vmatprep.subr.mxu0 0.0
    %2085 = vmatpush1.msra.mxu0 0.0
    %2086 = vmatprep.subr.mxu0 0.0
    %2087 = vmatpush1.msra.mxu0 0.0
    %2088 = vmatprep.subr.mxu0 0.0
    %2089 = vmatpush1.msra.mxu0 0.0
    %2090 = vmatprep.subr.mxu0 0.0
    %2091 = vmatpush1.msra.mxu0 0.0
    %2092 = vmatprep.subr.mxu0 0.0
    %2093 = vmatpush1.msra.mxu0 0.0
    %2094 = vmatprep.subr.mxu0 0.0
    %2095 = vmatpush1.msra.mxu0 0.0
    %2096 = vmatprep.subr.mxu0 0.0
    %2097 = vmatpush1.msra.mxu0 0.0
    %2098 = vmatprep.subr.mxu0 0.0
    %2099 = vmatpush1.msra.mxu0 0.0
    %2100 = vmatprep.subr.mxu0 0.0
    %2101 = vmatpush1.msra.mxu0 0.0
    %2102 = vmatprep.subr.mxu0 0.0
    %2103 = vmatpush1.msra.mxu0 0.0
    %2104 = vmatprep.subr.mxu0 0.0
    %2105 = vmatpush1.msra.mxu0 0.0
    %2106 = vmatprep.subr.mxu0 0.0
    %2107 = vmatpush1.msra.mxu0 0.0
    %2108 = vmatprep.mubr.f32.mxu0 0.0
    %2109 = vmatmul.mubr.f32.gmra.mrb[0].mxu0 %v2042
    %v2110 = vpop.f32.mrb[0].mxu0
    %v2111 = vadd.f32 %v471, %v2110
    %v2112 = vpop.f32.mrb[0].mxu0
    %2113 = vdwg.mxu0
    %v2114 = vadd.f32 %v2036, %v2111
    %v2115 = vxor.u32 %v2114, 2147483648
    %v2116 = vmul.f32 %v2115, 1.442695
    %v2117 = vpow.pop %v2116
    %v2118 = vadd.f32 %v2117, 1.0
    %v2119 = vrcp.pop %v2118
    %v2120 = vmul.f32 1.0, %v2119
    %2122 = vrot.lane.b32.xlu0 %v2111, 64
    %v2123 = vpop.permute.xlu0 %2122
    %v2125 = vmul.f32 %v2120, %v2123
    %2127 = vrot.lane.b32.xlu0 %v2125, 64
    %v2128 = vpop.permute.xlu0 %2127
    %v2130 = vadd.f32 %v2036, %v2128
    %v2131 = vtanh.pop %v2130
    %v2132 = vsub.f32 1.0, %v2120
    %2134 = vrot.lane.b32.xlu0 %v2131, 96
    %v2135 = vpop.permute.xlu0 %2134
    %v2137 = vmul.f32 %v2132, %v2135
    %v2138 = vmul.f32 %v2120, %v1866
    %v2139 = vadd.f32 %v2137, %v2138
    %v2140 = vld [vmem:[#allocation2 + $0xa] sm:$0x3]
    %2141 = vmatprep.subr.mxu0 0.0
    %2142 = vmatpush1.msra.mxu0 %v444
    %2143 = vmatprep.subr.mxu0 0.0
    %2144 = vmatpush1.msra.mxu0 %v445
    %2145 = vmatprep.subr.mxu0 0.0
    %2146 = vmatpush1.msra.mxu0 %v446
    %2147 = vmatprep.subr.mxu0 0.0
    %2148 = vmatpush1.msra.mxu0 %v447
    %2149 = vmatprep.subr.mxu0 0.0
    %2150 = vmatpush1.msra.mxu0 0.0
    %2151 = vmatprep.subr.mxu0 0.0
    %2152 = vmatpush1.msra.mxu0 0.0
    %2153 = vmatprep.subr.mxu0 0.0
    %2154 = vmatpush1.msra.mxu0 0.0
    %2155 = vmatprep.subr.mxu0 0.0
    %2156 = vmatpush1.msra.mxu0 0.0
    %2157 = vmatprep.subr.mxu0 0.0
    %2158 = vmatpush1.msra.mxu0 0.0
    %2159 = vmatprep.subr.mxu0 0.0
    %2160 = vmatpush1.msra.mxu0 0.0
    %2161 = vmatprep.subr.mxu0 0.0
    %2162 = vmatpush1.msra.mxu0 0.0
    %2163 = vmatprep.subr.mxu0 0.0
    %2164 = vmatpush1.msra.mxu0 0.0
    %2165 = vmatprep.subr.mxu0 0.0
    %2166 = vmatpush1.msra.mxu0 0.0
    %2167 = vmatprep.subr.mxu0 0.0
    %2168 = vmatpush1.msra.mxu0 0.0
    %2169 = vmatprep.subr.mxu0 0.0
    %2170 = vmatpush1.msra.mxu0 0.0
    %2171 = vmatprep.subr.mxu0 0.0
    %2172 = vmatpush1.msra.mxu0 0.0
    %2173 = vmatprep.subr.mxu0 0.0
    %2174 = vmatpush1.msra.mxu0 0.0
    %2175 = vmatprep.subr.mxu0 0.0
    %2176 = vmatpush1.msra.mxu0 0.0
    %2177 = vmatprep.subr.mxu0 0.0
    %2178 = vmatpush1.msra.mxu0 0.0
    %2179 = vmatprep.subr.mxu0 0.0
    %2180 = vmatpush1.msra.mxu0 0.0
    %2181 = vmatprep.subr.mxu0 0.0
    %2182 = vmatpush1.msra.mxu0 0.0
    %2183 = vmatprep.subr.mxu0 0.0
    %2184 = vmatpush1.msra.mxu0 0.0
    %2185 = vmatprep.subr.mxu0 0.0
    %2186 = vmatpush1.msra.mxu0 0.0
    %2187 = vmatprep.subr.mxu0 0.0
    %2188 = vmatpush1.msra.mxu0 0.0
    %2189 = vmatprep.subr.mxu0 0.0
    %2190 = vmatpush1.msra.mxu0 0.0
    %2191 = vmatprep.subr.mxu0 0.0
    %2192 = vmatpush1.msra.mxu0 0.0
    %2193 = vmatprep.subr.mxu0 0.0
    %2194 = vmatpush1.msra.mxu0 0.0
    %2195 = vmatprep.subr.mxu0 0.0
    %2196 = vmatpush1.msra.mxu0 0.0
    %2197 = vmatprep.subr.mxu0 0.0
    %2198 = vmatpush1.msra.mxu0 0.0
    %2199 = vmatprep.subr.mxu0 0.0
    %2200 = vmatpush1.msra.mxu0 0.0
    %2201 = vmatprep.subr.mxu0 0.0
    %2202 = vmatpush1.msra.mxu0 0.0
    %2203 = vmatprep.subr.mxu0 0.0
    %2204 = vmatpush1.msra.mxu0 0.0
    %2205 = vmatprep.mubr.f32.mxu0 0.0
    %2206 = vmatmul.mubr.f32.gmra.mrb[0].mxu0 %v1967
    %v2207 = vpop.f32.mrb[0].mxu0
    %v2208 = vadd.f32 %v464, %v2207
    %v2209 = vpop.f32.mrb[0].mxu0
    %2210 = vdwg.mxu0
    %v2211 = vadd.f32 %v2140, %v2208
    %v2212 = vxor.u32 %v2211, 2147483648
    %v2213 = vmul.f32 %v2212, 1.442695
    %v2214 = vpow.pop %v2213
    %v2215 = vadd.f32 %v2214, 1.0
    %v2216 = vrcp.pop %v2215
    %v2217 = vmul.f32 1.0, %v2216
    %2219 = vrot.lane.b32.xlu0 %v2208, 64
    %v2220 = vpop.permute.xlu0 %2219
    %v2222 = vmul.f32 %v2217, %v2220
    %2224 = vrot.lane.b32.xlu0 %v2222, 64
    %v2225 = vpop.permute.xlu0 %2224
    %v2227 = vadd.f32 %v2140, %v2225
    %v2228 = vtanh.pop %v2227
    %v2229 = vsub.f32 1.0, %v2217
    %2231 = vrot.lane.b32.xlu0 %v2228, 96
    %v2232 = vpop.permute.xlu0 %2231
    %v2234 = vmul.f32 %v2229, %v2232
    %v2235 = vmul.f32 %v2217, %v1963
    %v2236 = vadd.f32 %v2234, %v2235
    %2238 = vrot.lane.b32.xlu0 %v2236, 96
    %v2239 = vpop.permute.xlu0 %2238
    %v2240 = vsel %vm777, %v2239, 0
    %2242 = vmatprep.subr.mxu0 0.0
    %2243 = vmatpush1.msra.mxu0 %v440
    %2244 = vmatprep.subr.mxu0 0.0
    %2245 = vmatpush1.msra.mxu0 %v441
    %2246 = vmatprep.subr.mxu0 0.0
    %2247 = vmatpush1.msra.mxu0 %v442
    %2248 = vmatprep.subr.mxu0 0.0
    %2249 = vmatpush1.msra.mxu0 %v443
    %2250 = vmatprep.subr.mxu0 0.0
    %2251 = vmatpush1.msra.mxu0 0.0
    %2252 = vmatprep.subr.mxu0 0.0
    %2253 = vmatpush1.msra.mxu0 0.0
    %2254 = vmatprep.subr.mxu0 0.0
    %2255 = vmatpush1.msra.mxu0 0.0
    %2256 = vmatprep.subr.mxu0 0.0
    %2257 = vmatpush1.msra.mxu0 0.0
    %2258 = vmatprep.subr.mxu0 0.0
    %2259 = vmatpush1.msra.mxu0 0.0
    %2260 = vmatprep.subr.mxu0 0.0
    %2261 = vmatpush1.msra.mxu0 0.0
    %2262 = vmatprep.subr.mxu0 0.0
    %2263 = vmatpush1.msra.mxu0 0.0
    %2264 = vmatprep.subr.mxu0 0.0
    %2265 = vmatpush1.msra.mxu0 0.0
    %2266 = vmatprep.subr.mxu0 0.0
    %2267 = vmatpush1.msra.mxu0 0.0
    %2268 = vmatprep.subr.mxu0 0.0
    %2269 = vmatpush1.msra.mxu0 0.0
    %2270 = vmatprep.subr.mxu0 0.0
    %2271 = vmatpush1.msra.mxu0 0.0
    %2272 = vmatprep.subr.mxu0 0.0
    %2273 = vmatpush1.msra.mxu0 0.0
    %2274 = vmatprep.subr.mxu0 0.0
    %2275 = vmatpush1.msra.mxu0 0.0
    %2276 = vmatprep.subr.mxu0 0.0
    %2277 = vmatpush1.msra.mxu0 0.0
    %2278 = vmatprep.subr.mxu0 0.0
    %2279 = vmatpush1.msra.mxu0 0.0
    %2280 = vmatprep.subr.mxu0 0.0
    %2281 = vmatpush1.msra.mxu0 0.0
    %2282 = vmatprep.subr.mxu0 0.0
    %2283 = vmatpush1.msra.mxu0 0.0
    %2284 = vmatprep.subr.mxu0 0.0
    %2285 = vmatpush1.msra.mxu0 0.0
    %2286 = vmatprep.subr.mxu0 0.0
    %2287 = vmatpush1.msra.mxu0 0.0
    %2288 = vmatprep.subr.mxu0 0.0
    %2289 = vmatpush1.msra.mxu0 0.0
    %2290 = vmatprep.subr.mxu0 0.0
    %2291 = vmatpush1.msra.mxu0 0.0
    %2292 = vmatprep.subr.mxu0 0.0
    %2293 = vmatpush1.msra.mxu0 0.0
    %2294 = vmatprep.subr.mxu0 0.0
    %2295 = vmatpush1.msra.mxu0 0.0
    %2296 = vmatprep.subr.mxu0 0.0
    %2297 = vmatpush1.msra.mxu0 0.0
    %2298 = vmatprep.subr.mxu0 0.0
    %2299 = vmatpush1.msra.mxu0 0.0
    %2300 = vmatprep.subr.mxu0 0.0
    %2301 = vmatpush1.msra.mxu0 0.0
    %2302 = vmatprep.subr.mxu0 0.0
    %2303 = vmatpush1.msra.mxu0 0.0
    %2304 = vmatprep.subr.mxu0 0.0
    %2305 = vmatpush1.msra.mxu0 0.0
    %2306 = vmatprep.mubr.f32.mxu0 0.0
    %2307 = vmatmul.mubr.f32.gmra.mrb[0].mxu0 %v2240
    %v2308 = vpop.f32.mrb[0].mxu0
    %v2309 = vadd.f32 %v457, %v2308
    %v2310 = vpop.f32.mrb[0].mxu0
    %2311 = vdwg.mxu0
    %2313 = vrot.lane.b32.xlu0 %v2139, 96
    %v2314 = vpop.permute.xlu0 %2313
    %v2315 = vsel %vm777, %v2314, 0
    %2317 = vmatprep.subr.mxu0 0.0
    %2318 = vmatpush1.msra.mxu0 %v448
    %2319 = vmatprep.subr.mxu0 0.0
    %2320 = vmatpush1.msra.mxu0 %v449
    %2321 = vmatprep.subr.mxu0 0.0
    %2322 = vmatpush1.msra.mxu0 %v450
    %2323 = vmatprep.subr.mxu0 0.0
    %2324 = vmatpush1.msra.mxu0 %v451
    %2325 = vmatprep.subr.mxu0 0.0
    %2326 = vmatpush1.msra.mxu0 0.0
    %2327 = vmatprep.subr.mxu0 0.0
    %2328 = vmatpush1.msra.mxu0 0.0
    %2329 = vmatprep.subr.mxu0 0.0
    %2330 = vmatpush1.msra.mxu0 0.0
    %2331 = vmatprep.subr.mxu0 0.0
    %2332 = vmatpush1.msra.mxu0 0.0
    %2333 = vmatprep.subr.mxu0 0.0
    %2334 = vmatpush1.msra.mxu0 0.0
    %2335 = vmatprep.subr.mxu0 0.0
    %2336 = vmatpush1.msra.mxu0 0.0
    %2337 = vmatprep.subr.mxu0 0.0
    %2338 = vmatpush1.msra.mxu0 0.0
    %2339 = vmatprep.subr.mxu0 0.0
    %2340 = vmatpush1.msra.mxu0 0.0
    %2341 = vmatprep.subr.mxu0 0.0
    %2342 = vmatpush1.msra.mxu0 0.0
    %2343 = vmatprep.subr.mxu0 0.0
    %2344 = vmatpush1.msra.mxu0 0.0
    %2345 = vmatprep.subr.mxu0 0.0
    %2346 = vmatpush1.msra.mxu0 0.0
    %2347 = vmatprep.subr.mxu0 0.0
    %2348 = vmatpush1.msra.mxu0 0.0
    %2349 = vmatprep.subr.mxu0 0.0
    %2350 = vmatpush1.msra.mxu0 0.0
    %2351 = vmatprep.subr.mxu0 0.0
    %2352 = vmatpush1.msra.mxu0 0.0
    %2353 = vmatprep.subr.mxu0 0.0
    %2354 = vmatpush1.msra.mxu0 0.0
    %2355 = vmatprep.subr.mxu0 0.0
    %2356 = vmatpush1.msra.mxu0 0.0
    %2357 = vmatprep.subr.mxu0 0.0
    %2358 = vmatpush1.msra.mxu0 0.0
    %2359 = vmatprep.subr.mxu0 0.0
    %2360 = vmatpush1.msra.mxu0 0.0
    %2361 = vmatprep.subr.mxu0 0.0
    %2362 = vmatpush1.msra.mxu0 0.0
    %2363 = vmatprep.subr.mxu0 0.0
    %2364 = vmatpush1.msra.mxu0 0.0
    %2365 = vmatprep.subr.mxu0 0.0
    %2366 = vmatpush1.msra.mxu0 0.0
    %2367 = vmatprep.subr.mxu0 0.0
    %2368 = vmatpush1.msra.mxu0 0.0
    %2369 = vmatprep.subr.mxu0 0.0
    %2370 = vmatpush1.msra.mxu0 0.0
    %2371 = vmatprep.subr.mxu0 0.0
    %2372 = vmatpush1.msra.mxu0 0.0
    %2373 = vmatprep.subr.mxu0 0.0
    %2374 = vmatpush1.msra.mxu0 0.0
    %2375 = vmatprep.subr.mxu0 0.0
    %2376 = vmatpush1.msra.mxu0 0.0
    %2377 = vmatprep.subr.mxu0 0.0
    %2378 = vmatpush1.msra.mxu0 0.0
    %2379 = vmatprep.subr.mxu0 0.0
    %2380 = vmatpush1.msra.mxu0 0.0
    %2381 = vmatprep.mubr.f32.mxu0 0.0
    %2382 = vmatmul.mubr.f32.gmra.mrb[0].mxu0 %v2315
    %v2383 = vpop.f32.mrb[0].mxu0
    %v2384 = vadd.f32 %v471, %v2383
    %v2385 = vpop.f32.mrb[0].mxu0
    %2386 = vdwg.mxu0
    %v2387 = vadd.f32 %v2309, %v2384
    %v2388 = vxor.u32 %v2387, 2147483648
    %v2389 = vmul.f32 %v2388, 1.442695
    %v2390 = vpow.pop %v2389
    %v2391 = vadd.f32 %v2390, 1.0
    %v2392 = vrcp.pop %v2391
    %v2393 = vmul.f32 1.0, %v2392
    %2395 = vrot.lane.b32.xlu0 %v2384, 64
    %v2396 = vpop.permute.xlu0 %2395
    %v2398 = vmul.f32 %v2393, %v2396
    %2400 = vrot.lane.b32.xlu0 %v2398, 64
    %v2401 = vpop.permute.xlu0 %2400
    %v2403 = vadd.f32 %v2309, %v2401
    %v2404 = vtanh.pop %v2403
    %v2405 = vsub.f32 1.0, %v2393
    %2407 = vrot.lane.b32.xlu0 %v2404, 96
    %v2408 = vpop.permute.xlu0 %2407
    %v2410 = vmul.f32 %v2405, %v2408
    %v2411 = vmul.f32 %v2393, %v2139
    %v2412 = vadd.f32 %v2410, %v2411
    %v2413 = vld [vmem:[#allocation2 + $0xc] sm:$0x3]
    %2414 = vmatprep.subr.mxu0 0.0
    %2415 = vmatpush1.msra.mxu0 %v444
    %2416 = vmatprep.subr.mxu0 0.0
    %2417 = vmatpush1.msra.mxu0 %v445
    %2418 = vmatprep.subr.mxu0 0.0
    %2419 = vmatpush1.msra.mxu0 %v446
    %2420 = vmatprep.subr.mxu0 0.0
    %2421 = vmatpush1.msra.mxu0 %v447
    %2422 = vmatprep.subr.mxu0 0.0
    %2423 = vmatpush1.msra.mxu0 0.0
    %2424 = vmatprep.subr.mxu0 0.0
    %2425 = vmatpush1.msra.mxu0 0.0
    %2426 = vmatprep.subr.mxu0 0.0
    %2427 = vmatpush1.msra.mxu0 0.0
    %2428 = vmatprep.subr.mxu0 0.0
    %2429 = vmatpush1.msra.mxu0 0.0
    %2430 = vmatprep.subr.mxu0 0.0
    %2431 = vmatpush1.msra.mxu0 0.0
    %2432 = vmatprep.subr.mxu0 0.0
    %2433 = vmatpush1.msra.mxu0 0.0
    %2434 = vmatprep.subr.mxu0 0.0
    %2435 = vmatpush1.msra.mxu0 0.0
    %2436 = vmatprep.subr.mxu0 0.0
    %2437 = vmatpush1.msra.mxu0 0.0
    %2438 = vmatprep.subr.mxu0 0.0
    %2439 = vmatpush1.msra.mxu0 0.0
    %2440 = vmatprep.subr.mxu0 0.0
    %2441 = vmatpush1.msra.mxu0 0.0
    %2442 = vmatprep.subr.mxu0 0.0
    %2443 = vmatpush1.msra.mxu0 0.0
    %2444 = vmatprep.subr.mxu0 0.0
    %2445 = vmatpush1.msra.mxu0 0.0
    %2446 = vmatprep.subr.mxu0 0.0
    %2447 = vmatpush1.msra.mxu0 0.0
    %2448 = vmatprep.subr.mxu0 0.0
    %2449 = vmatpush1.msra.mxu0 0.0
    %2450 = vmatprep.subr.mxu0 0.0
    %2451 = vmatpush1.msra.mxu0 0.0
    %2452 = vmatprep.subr.mxu0 0.0
    %2453 = vmatpush1.msra.mxu0 0.0
    %2454 = vmatprep.subr.mxu0 0.0
    %2455 = vmatpush1.msra.mxu0 0.0
    %2456 = vmatprep.subr.mxu0 0.0
    %2457 = vmatpush1.msra.mxu0 0.0
    %2458 = vmatprep.subr.mxu0 0.0
    %2459 = vmatpush1.msra.mxu0 0.0
    %2460 = vmatprep.subr.mxu0 0.0
    %2461 = vmatpush1.msra.mxu0 0.0
    %2462 = vmatprep.subr.mxu0 0.0
    %2463 = vmatpush1.msra.mxu0 0.0
    %2464 = vmatprep.subr.mxu0 0.0
    %2465 = vmatpush1.msra.mxu0 0.0
    %2466 = vmatprep.subr.mxu0 0.0
    %2467 = vmatpush1.msra.mxu0 0.0
    %2468 = vmatprep.subr.mxu0 0.0
    %2469 = vmatpush1.msra.mxu0 0.0
    %2470 = vmatprep.subr.mxu0 0.0
    %2471 = vmatpush1.msra.mxu0 0.0
    %2472 = vmatprep.subr.mxu0 0.0
    %2473 = vmatpush1.msra.mxu0 0.0
    %2474 = vmatprep.subr.mxu0 0.0
    %2475 = vmatpush1.msra.mxu0 0.0
    %2476 = vmatprep.subr.mxu0 0.0
    %2477 = vmatpush1.msra.mxu0 0.0
    %2478 = vmatprep.mubr.f32.mxu0 0.0
    %2479 = vmatmul.mubr.f32.gmra.mrb[0].mxu0 %v2240
    %v2480 = vpop.f32.mrb[0].mxu0
    %v2481 = vadd.f32 %v464, %v2480
    %v2482 = vpop.f32.mrb[0].mxu0
    %2483 = vdwg.mxu0
    %v2484 = vadd.f32 %v2413, %v2481
    %v2485 = vxor.u32 %v2484, 2147483648
    %v2486 = vmul.f32 %v2485, 1.442695
    %v2487 = vpow.pop %v2486
    %v2488 = vadd.f32 %v2487, 1.0
    %v2489 = vrcp.pop %v2488
    %v2490 = vmul.f32 1.0, %v2489
    %2492 = vrot.lane.b32.xlu0 %v2481, 64
    %v2493 = vpop.permute.xlu0 %2492
    %v2495 = vmul.f32 %v2490, %v2493
    %2497 = vrot.lane.b32.xlu0 %v2495, 64
    %v2498 = vpop.permute.xlu0 %2497
    %v2500 = vadd.f32 %v2413, %v2498
    %v2501 = vtanh.pop %v2500
    %v2502 = vsub.f32 1.0, %v2490
    %2504 = vrot.lane.b32.xlu0 %v2501, 96
    %v2505 = vpop.permute.xlu0 %2504
    %v2507 = vmul.f32 %v2502, %v2505
    %v2508 = vmul.f32 %v2490, %v2236
    %v2509 = vadd.f32 %v2507, %v2508
    %2511 = vrot.lane.b32.xlu0 %v2509, 96
    %v2512 = vpop.permute.xlu0 %2511
    %v2513 = vsel %vm777, %v2512, 0
    %2515 = vmatprep.subr.mxu0 0.0
    %2516 = vmatpush1.msra.mxu0 %v440
    %2517 = vmatprep.subr.mxu0 0.0
    %2518 = vmatpush1.msra.mxu0 %v441
    %2519 = vmatprep.subr.mxu0 0.0
    %2520 = vmatpush1.msra.mxu0 %v442
    %2521 = vmatprep.subr.mxu0 0.0
    %2522 = vmatpush1.msra.mxu0 %v443
    %2523 = vmatprep.subr.mxu0 0.0
    %2524 = vmatpush1.msra.mxu0 0.0
    %2525 = vmatprep.subr.mxu0 0.0
    %2526 = vmatpush1.msra.mxu0 0.0
    %2527 = vmatprep.subr.mxu0 0.0
    %2528 = vmatpush1.msra.mxu0 0.0
    %2529 = vmatprep.subr.mxu0 0.0
    %2530 = vmatpush1.msra.mxu0 0.0
    %2531 = vmatprep.subr.mxu0 0.0
    %2532 = vmatpush1.msra.mxu0 0.0
    %2533 = vmatprep.subr.mxu0 0.0
    %2534 = vmatpush1.msra.mxu0 0.0
    %2535 = vmatprep.subr.mxu0 0.0
    %2536 = vmatpush1.msra.mxu0 0.0
    %2537 = vmatprep.subr.mxu0 0.0
    %2538 = vmatpush1.msra.mxu0 0.0
    %2539 = vmatprep.subr.mxu0 0.0
    %2540 = vmatpush1.msra.mxu0 0.0
    %2541 = vmatprep.subr.mxu0 0.0
    %2542 = vmatpush1.msra.mxu0 0.0
    %2543 = vmatprep.subr.mxu0 0.0
    %2544 = vmatpush1.msra.mxu0 0.0
    %2545 = vmatprep.subr.mxu0 0.0
    %2546 = vmatpush1.msra.mxu0 0.0
    %2547 = vmatprep.subr.mxu0 0.0
    %2548 = vmatpush1.msra.mxu0 0.0
    %2549 = vmatprep.subr.mxu0 0.0
    %2550 = vmatpush1.msra.mxu0 0.0
    %2551 = vmatprep.subr.mxu0 0.0
    %2552 = vmatpush1.msra.mxu0 0.0
    %2553 = vmatprep.subr.mxu0 0.0
    %2554 = vmatpush1.msra.mxu0 0.0
    %2555 = vmatprep.subr.mxu0 0.0
    %2556 = vmatpush1.msra.mxu0 0.0
    %2557 = vmatprep.subr.mxu0 0.0
    %2558 = vmatpush1.msra.mxu0 0.0
    %2559 = vmatprep.subr.mxu0 0.0
    %2560 = vmatpush1.msra.mxu0 0.0
    %2561 = vmatprep.subr.mxu0 0.0
    %2562 = vmatpush1.msra.mxu0 0.0
    %2563 = vmatprep.subr.mxu0 0.0
    %2564 = vmatpush1.msra.mxu0 0.0
    %2565 = vmatprep.subr.mxu0 0.0
    %2566 = vmatpush1.msra.mxu0 0.0
    %2567 = vmatprep.subr.mxu0 0.0
    %2568 = vmatpush1.msra.mxu0 0.0
    %2569 = vmatprep.subr.mxu0 0.0
    %2570 = vmatpush1.msra.mxu0 0.0
    %2571 = vmatprep.subr.mxu0 0.0
    %2572 = vmatpush1.msra.mxu0 0.0
    %2573 = vmatprep.subr.mxu0 0.0
    %2574 = vmatpush1.msra.mxu0 0.0
    %2575 = vmatprep.subr.mxu0 0.0
    %2576 = vmatpush1.msra.mxu0 0.0
    %2577 = vmatprep.subr.mxu0 0.0
    %2578 = vmatpush1.msra.mxu0 0.0
    %2579 = vmatprep.mubr.f32.mxu0 0.0
    %2580 = vmatmul.mubr.f32.gmra.mrb[0].mxu0 %v2513
    %v2581 = vpop.f32.mrb[0].mxu0
    %v2582 = vadd.f32 %v457, %v2581
    %v2583 = vpop.f32.mrb[0].mxu0
    %2584 = vdwg.mxu0
    %2586 = vrot.lane.b32.xlu0 %v2412, 96
    %v2587 = vpop.permute.xlu0 %2586
    %v2588 = vsel %vm777, %v2587, 0
    %2590 = vmatprep.subr.mxu0 0.0
    %2591 = vmatpush1.msra.mxu0 %v448
    %2592 = vmatprep.subr.mxu0 0.0
    %2593 = vmatpush1.msra.mxu0 %v449
    %2594 = vmatprep.subr.mxu0 0.0
    %2595 = vmatpush1.msra.mxu0 %v450
    %2596 = vmatprep.subr.mxu0 0.0
    %2597 = vmatpush1.msra.mxu0 %v451
    %2598 = vmatprep.subr.mxu0 0.0
    %2599 = vmatpush1.msra.mxu0 0.0
    %2600 = vmatprep.subr.mxu0 0.0
    %2601 = vmatpush1.msra.mxu0 0.0
    %2602 = vmatprep.subr.mxu0 0.0
    %2603 = vmatpush1.msra.mxu0 0.0
    %2604 = vmatprep.subr.mxu0 0.0
    %2605 = vmatpush1.msra.mxu0 0.0
    %2606 = vmatprep.subr.mxu0 0.0
    %2607 = vmatpush1.msra.mxu0 0.0
    %2608 = vmatprep.subr.mxu0 0.0
    %2609 = vmatpush1.msra.mxu0 0.0
    %2610 = vmatprep.subr.mxu0 0.0
    %2611 = vmatpush1.msra.mxu0 0.0
    %2612 = vmatprep.subr.mxu0 0.0
    %2613 = vmatpush1.msra.mxu0 0.0
    %2614 = vmatprep.subr.mxu0 0.0
    %2615 = vmatpush1.msra.mxu0 0.0
    %2616 = vmatprep.subr.mxu0 0.0
    %2617 = vmatpush1.msra.mxu0 0.0
    %2618 = vmatprep.subr.mxu0 0.0
    %2619 = vmatpush1.msra.mxu0 0.0
    %2620 = vmatprep.subr.mxu0 0.0
    %2621 = vmatpush1.msra.mxu0 0.0
    %2622 = vmatprep.subr.mxu0 0.0
    %2623 = vmatpush1.msra.mxu0 0.0
    %2624 = vmatprep.subr.mxu0 0.0
    %2625 = vmatpush1.msra.mxu0 0.0
    %2626 = vmatprep.subr.mxu0 0.0
    %2627 = vmatpush1.msra.mxu0 0.0
    %2628 = vmatprep.subr.mxu0 0.0
    %2629 = vmatpush1.msra.mxu0 0.0
    %2630 = vmatprep.subr.mxu0 0.0
    %2631 = vmatpush1.msra.mxu0 0.0
    %2632 = vmatprep.subr.mxu0 0.0
    %2633 = vmatpush1.msra.mxu0 0.0
    %2634 = vmatprep.subr.mxu0 0.0
    %2635 = vmatpush1.msra.mxu0 0.0
    %2636 = vmatprep.subr.mxu0 0.0
    %2637 = vmatpush1.msra.mxu0 0.0
    %2638 = vmatprep.subr.mxu0 0.0
    %2639 = vmatpush1.msra.mxu0 0.0
    %2640 = vmatprep.subr.mxu0 0.0
    %2641 = vmatpush1.msra.mxu0 0.0
    %2642 = vmatprep.subr.mxu0 0.0
    %2643 = vmatpush1.msra.mxu0 0.0
    %2644 = vmatprep.subr.mxu0 0.0
    %2645 = vmatpush1.msra.mxu0 0.0
    %2646 = vmatprep.subr.mxu0 0.0
    %2647 = vmatpush1.msra.mxu0 0.0
    %2648 = vmatprep.subr.mxu0 0.0
    %2649 = vmatpush1.msra.mxu0 0.0
    %2650 = vmatprep.subr.mxu0 0.0
    %2651 = vmatpush1.msra.mxu0 0.0
    %2652 = vmatprep.subr.mxu0 0.0
    %2653 = vmatpush1.msra.mxu0 0.0
    %2654 = vmatprep.mubr.f32.mxu0 0.0
    %2655 = vmatmul.mubr.f32.gmra.mrb[0].mxu0 %v2588
    %v2656 = vpop.f32.mrb[0].mxu0
    %v2657 = vadd.f32 %v471, %v2656
    %v2658 = vpop.f32.mrb[0].mxu0
    %2659 = vdwg.mxu0
    %v2660 = vadd.f32 %v2582, %v2657
    %v2661 = vxor.u32 %v2660, 2147483648
    %v2662 = vmul.f32 %v2661, 1.442695
    %v2663 = vpow.pop %v2662
    %v2664 = vadd.f32 %v2663, 1.0
    %v2665 = vrcp.pop %v2664
    %v2666 = vmul.f32 1.0, %v2665
    %2668 = vrot.lane.b32.xlu0 %v2657, 64
    %v2669 = vpop.permute.xlu0 %2668
    %v2671 = vmul.f32 %v2666, %v2669
    %2673 = vrot.lane.b32.xlu0 %v2671, 64
    %v2674 = vpop.permute.xlu0 %2673
    %v2676 = vadd.f32 %v2582, %v2674
    %v2677 = vtanh.pop %v2676
    %v2678 = vsub.f32 1.0, %v2666
    %2680 = vrot.lane.b32.xlu0 %v2677, 96
    %v2681 = vpop.permute.xlu0 %2680
    %v2683 = vmul.f32 %v2678, %v2681
    %v2684 = vmul.f32 %v2666, %v2412
    %v2685 = vadd.f32 %v2683, %v2684
    %v2686 = vld [vmem:[#allocation2 + $0xe] sm:$0x3]
    %2687 = vmatprep.subr.mxu0 0.0
    %2688 = vmatpush1.msra.mxu0 %v444
    %2689 = vmatprep.subr.mxu0 0.0
    %2690 = vmatpush1.msra.mxu0 %v445
    %2691 = vmatprep.subr.mxu0 0.0
    %2692 = vmatpush1.msra.mxu0 %v446
    %2693 = vmatprep.subr.mxu0 0.0
    %2694 = vmatpush1.msra.mxu0 %v447
    %2695 = vmatprep.subr.mxu0 0.0
    %2696 = vmatpush1.msra.mxu0 0.0
    %2697 = vmatprep.subr.mxu0 0.0
    %2698 = vmatpush1.msra.mxu0 0.0
    %2699 = vmatprep.subr.mxu0 0.0
    %2700 = vmatpush1.msra.mxu0 0.0
    %2701 = vmatprep.subr.mxu0 0.0
    %2702 = vmatpush1.msra.mxu0 0.0
    %2703 = vmatprep.subr.mxu0 0.0
    %2704 = vmatpush1.msra.mxu0 0.0
    %2705 = vmatprep.subr.mxu0 0.0
    %2706 = vmatpush1.msra.mxu0 0.0
    %2707 = vmatprep.subr.mxu0 0.0
    %2708 = vmatpush1.msra.mxu0 0.0
    %2709 = vmatprep.subr.mxu0 0.0
    %2710 = vmatpush1.msra.mxu0 0.0
    %2711 = vmatprep.subr.mxu0 0.0
    %2712 = vmatpush1.msra.mxu0 0.0
    %2713 = vmatprep.subr.mxu0 0.0
    %2714 = vmatpush1.msra.mxu0 0.0
    %2715 = vmatprep.subr.mxu0 0.0
    %2716 = vmatpush1.msra.mxu0 0.0
    %2717 = vmatprep.subr.mxu0 0.0
    %2718 = vmatpush1.msra.mxu0 0.0
    %2719 = vmatprep.subr.mxu0 0.0
    %2720 = vmatpush1.msra.mxu0 0.0
    %2721 = vmatprep.subr.mxu0 0.0
    %2722 = vmatpush1.msra.mxu0 0.0
    %2723 = vmatprep.subr.mxu0 0.0
    %2724 = vmatpush1.msra.mxu0 0.0
    %2725 = vmatprep.subr.mxu0 0.0
    %2726 = vmatpush1.msra.mxu0 0.0
    %2727 = vmatprep.subr.mxu0 0.0
    %2728 = vmatpush1.msra.mxu0 0.0
    %2729 = vmatprep.subr.mxu0 0.0
    %2730 = vmatpush1.msra.mxu0 0.0
    %2731 = vmatprep.subr.mxu0 0.0
    %2732 = vmatpush1.msra.mxu0 0.0
    %2733 = vmatprep.subr.mxu0 0.0
    %2734 = vmatpush1.msra.mxu0 0.0
    %2735 = vmatprep.subr.mxu0 0.0
    %2736 = vmatpush1.msra.mxu0 0.0
    %2737 = vmatprep.subr.mxu0 0.0
    %2738 = vmatpush1.msra.mxu0 0.0
    %2739 = vmatprep.subr.mxu0 0.0
    %2740 = vmatpush1.msra.mxu0 0.0
    %2741 = vmatprep.subr.mxu0 0.0
    %2742 = vmatpush1.msra.mxu0 0.0
    %2743 = vmatprep.subr.mxu0 0.0
    %2744 = vmatpush1.msra.mxu0 0.0
    %2745 = vmatprep.subr.mxu0 0.0
    %2746 = vmatpush1.msra.mxu0 0.0
    %2747 = vmatprep.subr.mxu0 0.0
    %2748 = vmatpush1.msra.mxu0 0.0
    %2749 = vmatprep.subr.mxu0 0.0
    %2750 = vmatpush1.msra.mxu0 0.0
    %2751 = vmatprep.mubr.f32.mxu0 0.0
    %2752 = vmatmul.mubr.f32.gmra.mrb[0].mxu0 %v2513
    %v2753 = vpop.f32.mrb[0].mxu0
    %v2754 = vadd.f32 %v464, %v2753
    %v2755 = vpop.f32.mrb[0].mxu0
    %2756 = vdwg.mxu0
    %v2757 = vadd.f32 %v2686, %v2754
    %v2758 = vxor.u32 %v2757, 2147483648
    %v2759 = vmul.f32 %v2758, 1.442695
    %v2760 = vpow.pop %v2759
    %v2761 = vadd.f32 %v2760, 1.0
    %v2762 = vrcp.pop %v2761
    %v2763 = vmul.f32 1.0, %v2762
    %2765 = vrot.lane.b32.xlu0 %v2754, 64
    %v2766 = vpop.permute.xlu0 %2765
    %v2768 = vmul.f32 %v2763, %v2766
    %2770 = vrot.lane.b32.xlu0 %v2768, 64
    %v2771 = vpop.permute.xlu0 %2770
    %v2773 = vadd.f32 %v2686, %v2771
    %v2774 = vtanh.pop %v2773
    %v2775 = vsub.f32 1.0, %v2763
    %2777 = vrot.lane.b32.xlu0 %v2774, 96
    %v2778 = vpop.permute.xlu0 %2777
    %v2780 = vmul.f32 %v2775, %v2778
    %v2781 = vmul.f32 %v2763, %v2509
    %v2782 = vadd.f32 %v2780, %v2781
    %2784 = vrot.lane.b32.xlu0 %v2782, 96
    %v2785 = vpop.permute.xlu0 %2784
    %v2786 = vsel %vm777, %v2785, 0
    %2788 = vmatprep.subr.mxu0 0.0
    %2789 = vmatpush1.msra.mxu0 %v440
    %2790 = vmatprep.subr.mxu0 0.0
    %2791 = vmatpush1.msra.mxu0 %v441
    %2792 = vmatprep.subr.mxu0 0.0
    %2793 = vmatpush1.msra.mxu0 %v442
    %2794 = vmatprep.subr.mxu0 0.0
    %2795 = vmatpush1.msra.mxu0 %v443
    %2796 = vmatprep.subr.mxu0 0.0
    %2797 = vmatpush1.msra.mxu0 0.0
    %2798 = vmatprep.subr.mxu0 0.0
    %2799 = vmatpush1.msra.mxu0 0.0
    %2800 = vmatprep.subr.mxu0 0.0
    %2801 = vmatpush1.msra.mxu0 0.0
    %2802 = vmatprep.subr.mxu0 0.0
    %2803 = vmatpush1.msra.mxu0 0.0
    %2804 = vmatprep.subr.mxu0 0.0
    %2805 = vmatpush1.msra.mxu0 0.0
    %2806 = vmatprep.subr.mxu0 0.0
    %2807 = vmatpush1.msra.mxu0 0.0
    %2808 = vmatprep.subr.mxu0 0.0
    %2809 = vmatpush1.msra.mxu0 0.0
    %2810 = vmatprep.subr.mxu0 0.0
    %2811 = vmatpush1.msra.mxu0 0.0
    %2812 = vmatprep.subr.mxu0 0.0
    %2813 = vmatpush1.msra.mxu0 0.0
    %2814 = vmatprep.subr.mxu0 0.0
    %2815 = vmatpush1.msra.mxu0 0.0
    %2816 = vmatprep.subr.mxu0 0.0
    %2817 = vmatpush1.msra.mxu0 0.0
    %2818 = vmatprep.subr.mxu0 0.0
    %2819 = vmatpush1.msra.mxu0 0.0
    %2820 = vmatprep.subr.mxu0 0.0
    %2821 = vmatpush1.msra.mxu0 0.0
    %2822 = vmatprep.subr.mxu0 0.0
    %2823 = vmatpush1.msra.mxu0 0.0
    %2824 = vmatprep.subr.mxu0 0.0
    %2825 = vmatpush1.msra.mxu0 0.0
    %2826 = vmatprep.subr.mxu0 0.0
    %2827 = vmatpush1.msra.mxu0 0.0
    %2828 = vmatprep.subr.mxu0 0.0
    %2829 = vmatpush1.msra.mxu0 0.0
    %2830 = vmatprep.subr.mxu0 0.0
    %2831 = vmatpush1.msra.mxu0 0.0
    %2832 = vmatprep.subr.mxu0 0.0
    %2833 = vmatpush1.msra.mxu0 0.0
    %2834 = vmatprep.subr.mxu0 0.0
    %2835 = vmatpush1.msra.mxu0 0.0
    %2836 = vmatprep.subr.mxu0 0.0
    %2837 = vmatpush1.msra.mxu0 0.0
    %2838 = vmatprep.subr.mxu0 0.0
    %2839 = vmatpush1.msra.mxu0 0.0
    %2840 = vmatprep.subr.mxu0 0.0
    %2841 = vmatpush1.msra.mxu0 0.0
    %2842 = vmatprep.subr.mxu0 0.0
    %2843 = vmatpush1.msra.mxu0 0.0
    %2844 = vmatprep.subr.mxu0 0.0
    %2845 = vmatpush1.msra.mxu0 0.0
    %2846 = vmatprep.subr.mxu0 0.0
    %2847 = vmatpush1.msra.mxu0 0.0
    %2848 = vmatprep.subr.mxu0 0.0
    %2849 = vmatpush1.msra.mxu0 0.0
    %2850 = vmatprep.subr.mxu0 0.0
    %2851 = vmatpush1.msra.mxu0 0.0
    %2852 = vmatprep.mubr.f32.mxu0 0.0
    %2853 = vmatmul.mubr.f32.gmra.mrb[0].mxu0 %v2786
    %v2854 = vpop.f32.mrb[0].mxu0
    %v2855 = vadd.f32 %v457, %v2854
    %v2856 = vpop.f32.mrb[0].mxu0
    %2857 = vdwg.mxu0
    %2859 = vrot.lane.b32.xlu0 %v2685, 96
    %v2860 = vpop.permute.xlu0 %2859
    %v2861 = vsel %vm777, %v2860, 0
    %2863 = vmatprep.subr.mxu0 0.0
    %2864 = vmatpush1.msra.mxu0 %v448
    %2865 = vmatprep.subr.mxu0 0.0
    %2866 = vmatpush1.msra.mxu0 %v449
    %2867 = vmatprep.subr.mxu0 0.0
    %2868 = vmatpush1.msra.mxu0 %v450
    %2869 = vmatprep.subr.mxu0 0.0
    %2870 = vmatpush1.msra.mxu0 %v451
    %2871 = vmatprep.subr.mxu0 0.0
    %2872 = vmatpush1.msra.mxu0 0.0
    %2873 = vmatprep.subr.mxu0 0.0
    %2874 = vmatpush1.msra.mxu0 0.0
    %2875 = vmatprep.subr.mxu0 0.0
    %2876 = vmatpush1.msra.mxu0 0.0
    %2877 = vmatprep.subr.mxu0 0.0
    %2878 = vmatpush1.msra.mxu0 0.0
    %2879 = vmatprep.subr.mxu0 0.0
    %2880 = vmatpush1.msra.mxu0 0.0
    %2881 = vmatprep.subr.mxu0 0.0
    %2882 = vmatpush1.msra.mxu0 0.0
    %2883 = vmatprep.subr.mxu0 0.0
    %2884 = vmatpush1.msra.mxu0 0.0
    %2885 = vmatprep.subr.mxu0 0.0
    %2886 = vmatpush1.msra.mxu0 0.0
    %2887 = vmatprep.subr.mxu0 0.0
    %2888 = vmatpush1.msra.mxu0 0.0
    %2889 = vmatprep.subr.mxu0 0.0
    %2890 = vmatpush1.msra.mxu0 0.0
    %2891 = vmatprep.subr.mxu0 0.0
    %2892 = vmatpush1.msra.mxu0 0.0
    %2893 = vmatprep.subr.mxu0 0.0
    %2894 = vmatpush1.msra.mxu0 0.0
    %2895 = vmatprep.subr.mxu0 0.0
    %2896 = vmatpush1.msra.mxu0 0.0
    %2897 = vmatprep.subr.mxu0 0.0
    %2898 = vmatpush1.msra.mxu0 0.0
    %2899 = vmatprep.subr.mxu0 0.0
    %2900 = vmatpush1.msra.mxu0 0.0
    %2901 = vmatprep.subr.mxu0 0.0
    %2902 = vmatpush1.msra.mxu0 0.0
    %2903 = vmatprep.subr.mxu0 0.0
    %2904 = vmatpush1.msra.mxu0 0.0
    %2905 = vmatprep.subr.mxu0 0.0
    %2906 = vmatpush1.msra.mxu0 0.0
    %2907 = vmatprep.subr.mxu0 0.0
    %2908 = vmatpush1.msra.mxu0 0.0
    %2909 = vmatprep.subr.mxu0 0.0
    %2910 = vmatpush1.msra.mxu0 0.0
    %2911 = vmatprep.subr.mxu0 0.0
    %2912 = vmatpush1.msra.mxu0 0.0
    %2913 = vmatprep.subr.mxu0 0.0
    %2914 = vmatpush1.msra.mxu0 0.0
    %2915 = vmatprep.subr.mxu0 0.0
    %2916 = vmatpush1.msra.mxu0 0.0
    %2917 = vmatprep.subr.mxu0 0.0
    %2918 = vmatpush1.msra.mxu0 0.0
    %2919 = vmatprep.subr.mxu0 0.0
    %2920 = vmatpush1.msra.mxu0 0.0
    %2921 = vmatprep.subr.mxu0 0.0
    %2922 = vmatpush1.msra.mxu0 0.0
    %2923 = vmatprep.subr.mxu0 0.0
    %2924 = vmatpush1.msra.mxu0 0.0
    %2925 = vmatprep.subr.mxu0 0.0
    %2926 = vmatpush1.msra.mxu0 0.0
    %2927 = vmatprep.mubr.f32.mxu0 0.0
    %2928 = vmatmul.mubr.f32.gmra.mrb[0].mxu0 %v2861
    %v2929 = vpop.f32.mrb[0].mxu0
    %v2930 = vadd.f32 %v471, %v2929
    %v2931 = vpop.f32.mrb[0].mxu0
    %2932 = vdwg.mxu0
    %v2933 = vadd.f32 %v2855, %v2930
    %v2934 = vxor.u32 %v2933, 2147483648
    %v2935 = vmul.f32 %v2934, 1.442695
    %v2936 = vpow.pop %v2935
    %v2937 = vadd.f32 %v2936, 1.0
    %v2938 = vrcp.pop %v2937
    %v2939 = vmul.f32 1.0, %v2938
    %2941 = vrot.lane.b32.xlu0 %v2930, 64
    %v2942 = vpop.permute.xlu0 %2941
    %v2944 = vmul.f32 %v2939, %v2942
    %2946 = vrot.lane.b32.xlu0 %v2944, 64
    %v2947 = vpop.permute.xlu0 %2946
    %v2949 = vadd.f32 %v2855, %v2947
    %v2950 = vtanh.pop %v2949
    %v2951 = vsub.f32 1.0, %v2939
    %2953 = vrot.lane.b32.xlu0 %v2950, 96
    %v2954 = vpop.permute.xlu0 %2953
    %v2956 = vmul.f32 %v2951, %v2954
    %v2957 = vmul.f32 %v2939, %v2685
    %v2958 = vadd.f32 %v2956, %v2957
    %v2959 = vld [vmem:[#allocation2 + $0x10] sm:$0x3]
    %2960 = vmatprep.subr.mxu0 0.0
    %2961 = vmatpush1.msra.mxu0 %v444
    %2962 = vmatprep.subr.mxu0 0.0
    %2963 = vmatpush1.msra.mxu0 %v445
    %2964 = vmatprep.subr.mxu0 0.0
    %2965 = vmatpush1.msra.mxu0 %v446
    %2966 = vmatprep.subr.mxu0 0.0
    %2967 = vmatpush1.msra.mxu0 %v447
    %2968 = vmatprep.subr.mxu0 0.0
    %2969 = vmatpush1.msra.mxu0 0.0
    %2970 = vmatprep.subr.mxu0 0.0
    %2971 = vmatpush1.msra.mxu0 0.0
    %2972 = vmatprep.subr.mxu0 0.0
    %2973 = vmatpush1.msra.mxu0 0.0
    %2974 = vmatprep.subr.mxu0 0.0
    %2975 = vmatpush1.msra.mxu0 0.0
    %2976 = vmatprep.subr.mxu0 0.0
    %2977 = vmatpush1.msra.mxu0 0.0
    %2978 = vmatprep.subr.mxu0 0.0
    %2979 = vmatpush1.msra.mxu0 0.0
    %2980 = vmatprep.subr.mxu0 0.0
    %2981 = vmatpush1.msra.mxu0 0.0
    %2982 = vmatprep.subr.mxu0 0.0
    %2983 = vmatpush1.msra.mxu0 0.0
    %2984 = vmatprep.subr.mxu0 0.0
    %2985 = vmatpush1.msra.mxu0 0.0
    %2986 = vmatprep.subr.mxu0 0.0
    %2987 = vmatpush1.msra.mxu0 0.0
    %2988 = vmatprep.subr.mxu0 0.0
    %2989 = vmatpush1.msra.mxu0 0.0
    %2990 = vmatprep.subr.mxu0 0.0
    %2991 = vmatpush1.msra.mxu0 0.0
    %2992 = vmatprep.subr.mxu0 0.0
    %2993 = vmatpush1.msra.mxu0 0.0
    %2994 = vmatprep.subr.mxu0 0.0
    %2995 = vmatpush1.msra.mxu0 0.0
    %2996 = vmatprep.subr.mxu0 0.0
    %2997 = vmatpush1.msra.mxu0 0.0
    %2998 = vmatprep.subr.mxu0 0.0
    %2999 = vmatpush1.msra.mxu0 0.0
    %3000 = vmatprep.subr.mxu0 0.0
    %3001 = vmatpush1.msra.mxu0 0.0
    %3002 = vmatprep.subr.mxu0 0.0
    %3003 = vmatpush1.msra.mxu0 0.0
    %3004 = vmatprep.subr.mxu0 0.0
    %3005 = vmatpush1.msra.mxu0 0.0
    %3006 = vmatprep.subr.mxu0 0.0
    %3007 = vmatpush1.msra.mxu0 0.0
    %3008 = vmatprep.subr.mxu0 0.0
    %3009 = vmatpush1.msra.mxu0 0.0
    %3010 = vmatprep.subr.mxu0 0.0
    %3011 = vmatpush1.msra.mxu0 0.0
    %3012 = vmatprep.subr.mxu0 0.0
    %3013 = vmatpush1.msra.mxu0 0.0
    %3014 = vmatprep.subr.mxu0 0.0
    %3015 = vmatpush1.msra.mxu0 0.0
    %3016 = vmatprep.subr.mxu0 0.0
    %3017 = vmatpush1.msra.mxu0 0.0
    %3018 = vmatprep.subr.mxu0 0.0
    %3019 = vmatpush1.msra.mxu0 0.0
    %3020 = vmatprep.subr.mxu0 0.0
    %3021 = vmatpush1.msra.mxu0 0.0
    %3022 = vmatprep.subr.mxu0 0.0
    %3023 = vmatpush1.msra.mxu0 0.0
    %3024 = vmatprep.mubr.f32.mxu0 0.0
    %3025 = vmatmul.mubr.f32.gmra.mrb[0].mxu0 %v2786
    %v3026 = vpop.f32.mrb[0].mxu0
    %v3027 = vadd.f32 %v464, %v3026
    %v3028 = vpop.f32.mrb[0].mxu0
    %3029 = vdwg.mxu0
    %v3030 = vadd.f32 %v2959, %v3027
    %v3031 = vxor.u32 %v3030, 2147483648
    %v3032 = vmul.f32 %v3031, 1.442695
    %v3033 = vpow.pop %v3032
    %v3034 = vadd.f32 %v3033, 1.0
    %v3035 = vrcp.pop %v3034
    %v3036 = vmul.f32 1.0, %v3035
    %3038 = vrot.lane.b32.xlu0 %v3027, 64
    %v3039 = vpop.permute.xlu0 %3038
    %v3041 = vmul.f32 %v3036, %v3039
    %3043 = vrot.lane.b32.xlu0 %v3041, 64
    %v3044 = vpop.permute.xlu0 %3043
    %v3046 = vadd.f32 %v2959, %v3044
    %v3047 = vtanh.pop %v3046
    %v3048 = vsub.f32 1.0, %v3036
    %3050 = vrot.lane.b32.xlu0 %v3047, 96
    %v3051 = vpop.permute.xlu0 %3050
    %v3053 = vmul.f32 %v3048, %v3051
    %v3054 = vmul.f32 %v3036, %v2782
    %v3055 = vadd.f32 %v3053, %v3054
    %3057 = vrot.lane.b32.xlu0 %v3055, 96
    %v3058 = vpop.permute.xlu0 %3057
    %v3059 = vsel %vm777, %v3058, 0
    %3061 = vmatprep.subr.mxu0 0.0
    %3062 = vmatpush1.msra.mxu0 %v440
    %3063 = vmatprep.subr.mxu0 0.0
    %3064 = vmatpush1.msra.mxu0 %v441
    %3065 = vmatprep.subr.mxu0 0.0
    %3066 = vmatpush1.msra.mxu0 %v442
    %3067 = vmatprep.subr.mxu0 0.0
    %3068 = vmatpush1.msra.mxu0 %v443
    %3069 = vmatprep.subr.mxu0 0.0
    %3070 = vmatpush1.msra.mxu0 0.0
    %3071 = vmatprep.subr.mxu0 0.0
    %3072 = vmatpush1.msra.mxu0 0.0
    %3073 = vmatprep.subr.mxu0 0.0
    %3074 = vmatpush1.msra.mxu0 0.0
    %3075 = vmatprep.subr.mxu0 0.0
    %3076 = vmatpush1.msra.mxu0 0.0
    %3077 = vmatprep.subr.mxu0 0.0
    %3078 = vmatpush1.msra.mxu0 0.0
    %3079 = vmatprep.subr.mxu0 0.0
    %3080 = vmatpush1.msra.mxu0 0.0
    %3081 = vmatprep.subr.mxu0 0.0
    %3082 = vmatpush1.msra.mxu0 0.0
    %3083 = vmatprep.subr.mxu0 0.0
    %3084 = vmatpush1.msra.mxu0 0.0
    %3085 = vmatprep.subr.mxu0 0.0
    %3086 = vmatpush1.msra.mxu0 0.0
    %3087 = vmatprep.subr.mxu0 0.0
    %3088 = vmatpush1.msra.mxu0 0.0
    %3089 = vmatprep.subr.mxu0 0.0
    %3090 = vmatpush1.msra.mxu0 0.0
    %3091 = vmatprep.subr.mxu0 0.0
    %3092 = vmatpush1.msra.mxu0 0.0
    %3093 = vmatprep.subr.mxu0 0.0
    %3094 = vmatpush1.msra.mxu0 0.0
    %3095 = vmatprep.subr.mxu0 0.0
    %3096 = vmatpush1.msra.mxu0 0.0
    %3097 = vmatprep.subr.mxu0 0.0
    %3098 = vmatpush1.msra.mxu0 0.0
    %3099 = vmatprep.subr.mxu0 0.0
    %3100 = vmatpush1.msra.mxu0 0.0
    %3101 = vmatprep.subr.mxu0 0.0
    %3102 = vmatpush1.msra.mxu0 0.0
    %3103 = vmatprep.subr.mxu0 0.0
    %3104 = vmatpush1.msra.mxu0 0.0
    %3105 = vmatprep.subr.mxu0 0.0
    %3106 = vmatpush1.msra.mxu0 0.0
    %3107 = vmatprep.subr.mxu0 0.0
    %3108 = vmatpush1.msra.mxu0 0.0
    %3109 = vmatprep.subr.mxu0 0.0
    %3110 = vmatpush1.msra.mxu0 0.0
    %3111 = vmatprep.subr.mxu0 0.0
    %3112 = vmatpush1.msra.mxu0 0.0
    %3113 = vmatprep.subr.mxu0 0.0
    %3114 = vmatpush1.msra.mxu0 0.0
    %3115 = vmatprep.subr.mxu0 0.0
    %3116 = vmatpush1.msra.mxu0 0.0
    %3117 = vmatprep.subr.mxu0 0.0
    %3118 = vmatpush1.msra.mxu0 0.0
    %3119 = vmatprep.subr.mxu0 0.0
    %3120 = vmatpush1.msra.mxu0 0.0
    %3121 = vmatprep.subr.mxu0 0.0
    %3122 = vmatpush1.msra.mxu0 0.0
    %3123 = vmatprep.subr.mxu0 0.0
    %3124 = vmatpush1.msra.mxu0 0.0
    %3125 = vmatprep.mubr.f32.mxu0 0.0
    %3126 = vmatmul.mubr.f32.gmra.mrb[0].mxu0 %v3059
    %v3127 = vpop.f32.mrb[0].mxu0
    %v3128 = vadd.f32 %v457, %v3127
    %v3129 = vpop.f32.mrb[0].mxu0
    %3130 = vdwg.mxu0
    %3132 = vrot.lane.b32.xlu0 %v2958, 96
    %v3133 = vpop.permute.xlu0 %3132
    %v3134 = vsel %vm777, %v3133, 0
    %3136 = vmatprep.subr.mxu0 0.0
    %3137 = vmatpush1.msra.mxu0 %v448
    %3138 = vmatprep.subr.mxu0 0.0
    %3139 = vmatpush1.msra.mxu0 %v449
    %3140 = vmatprep.subr.mxu0 0.0
    %3141 = vmatpush1.msra.mxu0 %v450
    %3142 = vmatprep.subr.mxu0 0.0
    %3143 = vmatpush1.msra.mxu0 %v451
    %3144 = vmatprep.subr.mxu0 0.0
    %3145 = vmatpush1.msra.mxu0 0.0
    %3146 = vmatprep.subr.mxu0 0.0
    %3147 = vmatpush1.msra.mxu0 0.0
    %3148 = vmatprep.subr.mxu0 0.0
    %3149 = vmatpush1.msra.mxu0 0.0
    %3150 = vmatprep.subr.mxu0 0.0
    %3151 = vmatpush1.msra.mxu0 0.0
    %3152 = vmatprep.subr.mxu0 0.0
    %3153 = vmatpush1.msra.mxu0 0.0
    %3154 = vmatprep.subr.mxu0 0.0
    %3155 = vmatpush1.msra.mxu0 0.0
    %3156 = vmatprep.subr.mxu0 0.0
    %3157 = vmatpush1.msra.mxu0 0.0
    %3158 = vmatprep.subr.mxu0 0.0
    %3159 = vmatpush1.msra.mxu0 0.0
    %3160 = vmatprep.subr.mxu0 0.0
    %3161 = vmatpush1.msra.mxu0 0.0
    %3162 = vmatprep.subr.mxu0 0.0
    %3163 = vmatpush1.msra.mxu0 0.0
    %3164 = vmatprep.subr.mxu0 0.0
    %3165 = vmatpush1.msra.mxu0 0.0
    %3166 = vmatprep.subr.mxu0 0.0
    %3167 = vmatpush1.msra.mxu0 0.0
    %3168 = vmatprep.subr.mxu0 0.0
    %3169 = vmatpush1.msra.mxu0 0.0
    %3170 = vmatprep.subr.mxu0 0.0
    %3171 = vmatpush1.msra.mxu0 0.0
    %3172 = vmatprep.subr.mxu0 0.0
    %3173 = vmatpush1.msra.mxu0 0.0
    %3174 = vmatprep.subr.mxu0 0.0
    %3175 = vmatpush1.msra.mxu0 0.0
    %3176 = vmatprep.subr.mxu0 0.0
    %3177 = vmatpush1.msra.mxu0 0.0
    %3178 = vmatprep.subr.mxu0 0.0
    %3179 = vmatpush1.msra.mxu0 0.0
    %3180 = vmatprep.subr.mxu0 0.0
    %3181 = vmatpush1.msra.mxu0 0.0
    %3182 = vmatprep.subr.mxu0 0.0
    %3183 = vmatpush1.msra.mxu0 0.0
    %3184 = vmatprep.subr.mxu0 0.0
    %3185 = vmatpush1.msra.mxu0 0.0
    %3186 = vmatprep.subr.mxu0 0.0
    %3187 = vmatpush1.msra.mxu0 0.0
    %3188 = vmatprep.subr.mxu0 0.0
    %3189 = vmatpush1.msra.mxu0 0.0
    %3190 = vmatprep.subr.mxu0 0.0
    %3191 = vmatpush1.msra.mxu0 0.0
    %3192 = vmatprep.subr.mxu0 0.0
    %3193 = vmatpush1.msra.mxu0 0.0
    %3194 = vmatprep.subr.mxu0 0.0
    %3195 = vmatpush1.msra.mxu0 0.0
    %3196 = vmatprep.subr.mxu0 0.0
    %3197 = vmatpush1.msra.mxu0 0.0
    %3198 = vmatprep.subr.mxu0 0.0
    %3199 = vmatpush1.msra.mxu0 0.0
    %3200 = vmatprep.mubr.f32.mxu0 0.0
    %3201 = vmatmul.mubr.f32.gmra.mrb[0].mxu0 %v3134
    %v3202 = vpop.f32.mrb[0].mxu0
    %v3203 = vadd.f32 %v471, %v3202
    %v3204 = vpop.f32.mrb[0].mxu0
    %3205 = vdwg.mxu0
    %v3206 = vadd.f32 %v3128, %v3203
    %v3207 = vxor.u32 %v3206, 2147483648
    %v3208 = vmul.f32 %v3207, 1.442695
    %v3209 = vpow.pop %v3208
    %v3210 = vadd.f32 %v3209, 1.0
    %v3211 = vrcp.pop %v3210
    %v3212 = vmul.f32 1.0, %v3211
    %3214 = vrot.lane.b32.xlu0 %v3203, 64
    %v3215 = vpop.permute.xlu0 %3214
    %v3217 = vmul.f32 %v3212, %v3215
    %3219 = vrot.lane.b32.xlu0 %v3217, 64
    %v3220 = vpop.permute.xlu0 %3219
    %v3222 = vadd.f32 %v3128, %v3220
    %v3223 = vtanh.pop %v3222
    %v3224 = vsub.f32 1.0, %v3212
    %3226 = vrot.lane.b32.xlu0 %v3223, 96
    %v3227 = vpop.permute.xlu0 %3226
    %v3229 = vmul.f32 %v3224, %v3227
    %v3230 = vmul.f32 %v3212, %v2958
    %v3231 = vadd.f32 %v3229, %v3230
    %v3232 = vld [vmem:[#allocation2 + $0x12] sm:$0x3]
    %3233 = vmatprep.subr.mxu0 0.0
    %3234 = vmatpush1.msra.mxu0 %v444
    %3235 = vmatprep.subr.mxu0 0.0
    %3236 = vmatpush1.msra.mxu0 %v445
    %3237 = vmatprep.subr.mxu0 0.0
    %3238 = vmatpush1.msra.mxu0 %v446
    %3239 = vmatprep.subr.mxu0 0.0
    %3240 = vmatpush1.msra.mxu0 %v447
    %3241 = vmatprep.subr.mxu0 0.0
    %3242 = vmatpush1.msra.mxu0 0.0
    %3243 = vmatprep.subr.mxu0 0.0
    %3244 = vmatpush1.msra.mxu0 0.0
    %3245 = vmatprep.subr.mxu0 0.0
    %3246 = vmatpush1.msra.mxu0 0.0
    %3247 = vmatprep.subr.mxu0 0.0
    %3248 = vmatpush1.msra.mxu0 0.0
    %3249 = vmatprep.subr.mxu0 0.0
    %3250 = vmatpush1.msra.mxu0 0.0
    %3251 = vmatprep.subr.mxu0 0.0
    %3252 = vmatpush1.msra.mxu0 0.0
    %3253 = vmatprep.subr.mxu0 0.0
    %3254 = vmatpush1.msra.mxu0 0.0
    %3255 = vmatprep.subr.mxu0 0.0
    %3256 = vmatpush1.msra.mxu0 0.0
    %3257 = vmatprep.subr.mxu0 0.0
    %3258 = vmatpush1.msra.mxu0 0.0
    %3259 = vmatprep.subr.mxu0 0.0
    %3260 = vmatpush1.msra.mxu0 0.0
    %3261 = vmatprep.subr.mxu0 0.0
    %3262 = vmatpush1.msra.mxu0 0.0
    %3263 = vmatprep.subr.mxu0 0.0
    %3264 = vmatpush1.msra.mxu0 0.0
    %3265 = vmatprep.subr.mxu0 0.0
    %3266 = vmatpush1.msra.mxu0 0.0
    %3267 = vmatprep.subr.mxu0 0.0
    %3268 = vmatpush1.msra.mxu0 0.0
    %3269 = vmatprep.subr.mxu0 0.0
    %3270 = vmatpush1.msra.mxu0 0.0
    %3271 = vmatprep.subr.mxu0 0.0
    %3272 = vmatpush1.msra.mxu0 0.0
    %3273 = vmatprep.subr.mxu0 0.0
    %3274 = vmatpush1.msra.mxu0 0.0
    %3275 = vmatprep.subr.mxu0 0.0
    %3276 = vmatpush1.msra.mxu0 0.0
    %3277 = vmatprep.subr.mxu0 0.0
    %3278 = vmatpush1.msra.mxu0 0.0
    %3279 = vmatprep.subr.mxu0 0.0
    %3280 = vmatpush1.msra.mxu0 0.0
    %3281 = vmatprep.subr.mxu0 0.0
    %3282 = vmatpush1.msra.mxu0 0.0
    %3283 = vmatprep.subr.mxu0 0.0
    %3284 = vmatpush1.msra.mxu0 0.0
    %3285 = vmatprep.subr.mxu0 0.0
    %3286 = vmatpush1.msra.mxu0 0.0
    %3287 = vmatprep.subr.mxu0 0.0
    %3288 = vmatpush1.msra.mxu0 0.0
    %3289 = vmatprep.subr.mxu0 0.0
    %3290 = vmatpush1.msra.mxu0 0.0
    %3291 = vmatprep.subr.mxu0 0.0
    %3292 = vmatpush1.msra.mxu0 0.0
    %3293 = vmatprep.subr.mxu0 0.0
    %3294 = vmatpush1.msra.mxu0 0.0
    %3295 = vmatprep.subr.mxu0 0.0
    %3296 = vmatpush1.msra.mxu0 0.0
    %3297 = vmatprep.mubr.f32.mxu0 0.0
    %3298 = vmatmul.mubr.f32.gmra.mrb[0].mxu0 %v3059
    %v3299 = vpop.f32.mrb[0].mxu0
    %v3300 = vadd.f32 %v464, %v3299
    %v3301 = vpop.f32.mrb[0].mxu0
    %3302 = vdwg.mxu0
    %v3303 = vadd.f32 %v3232, %v3300
    %v3304 = vxor.u32 %v3303, 2147483648
    %v3305 = vmul.f32 %v3304, 1.442695
    %v3306 = vpow.pop %v3305
    %v3307 = vadd.f32 %v3306, 1.0
    %v3308 = vrcp.pop %v3307
    %v3309 = vmul.f32 1.0, %v3308
    %3311 = vrot.lane.b32.xlu0 %v3300, 64
    %v3312 = vpop.permute.xlu0 %3311
    %v3314 = vmul.f32 %v3309, %v3312
    %3316 = vrot.lane.b32.xlu0 %v3314, 64
    %v3317 = vpop.permute.xlu0 %3316
    %v3319 = vadd.f32 %v3232, %v3317
    %v3320 = vtanh.pop %v3319
    %v3321 = vsub.f32 1.0, %v3309
    %3323 = vrot.lane.b32.xlu0 %v3320, 96
    %v3324 = vpop.permute.xlu0 %3323
    %v3326 = vmul.f32 %v3321, %v3324
    %v3327 = vmul.f32 %v3309, %v3055
    %v3328 = vadd.f32 %v3326, %v3327
    %3330 = vrot.lane.b32.xlu0 %v3328, 96
    %v3331 = vpop.permute.xlu0 %3330
    %v3332 = vsel %vm777, %v3331, 0
    %3334 = vmatprep.subr.mxu0 0.0
    %3335 = vmatpush1.msra.mxu0 %v440
    %3336 = vmatprep.subr.mxu0 0.0
    %3337 = vmatpush1.msra.mxu0 %v441
    %3338 = vmatprep.subr.mxu0 0.0
    %3339 = vmatpush1.msra.mxu0 %v442
    %3340 = vmatprep.subr.mxu0 0.0
    %3341 = vmatpush1.msra.mxu0 %v443
    %3342 = vmatprep.subr.mxu0 0.0
    %3343 = vmatpush1.msra.mxu0 0.0
    %3344 = vmatprep.subr.mxu0 0.0
    %3345 = vmatpush1.msra.mxu0 0.0
    %3346 = vmatprep.subr.mxu0 0.0
    %3347 = vmatpush1.msra.mxu0 0.0
    %3348 = vmatprep.subr.mxu0 0.0
    %3349 = vmatpush1.msra.mxu0 0.0
    %3350 = vmatprep.subr.mxu0 0.0
    %3351 = vmatpush1.msra.mxu0 0.0
    %3352 = vmatprep.subr.mxu0 0.0
    %3353 = vmatpush1.msra.mxu0 0.0
    %3354 = vmatprep.subr.mxu0 0.0
    %3355 = vmatpush1.msra.mxu0 0.0
    %3356 = vmatprep.subr.mxu0 0.0
    %3357 = vmatpush1.msra.mxu0 0.0
    %3358 = vmatprep.subr.mxu0 0.0
    %3359 = vmatpush1.msra.mxu0 0.0
    %3360 = vmatprep.subr.mxu0 0.0
    %3361 = vmatpush1.msra.mxu0 0.0
    %3362 = vmatprep.subr.mxu0 0.0
    %3363 = vmatpush1.msra.mxu0 0.0
    %3364 = vmatprep.subr.mxu0 0.0
    %3365 = vmatpush1.msra.mxu0 0.0
    %3366 = vmatprep.subr.mxu0 0.0
    %3367 = vmatpush1.msra.mxu0 0.0
    %3368 = vmatprep.subr.mxu0 0.0
    %3369 = vmatpush1.msra.mxu0 0.0
    %3370 = vmatprep.subr.mxu0 0.0
    %3371 = vmatpush1.msra.mxu0 0.0
    %3372 = vmatprep.subr.mxu0 0.0
    %3373 = vmatpush1.msra.mxu0 0.0
    %3374 = vmatprep.subr.mxu0 0.0
    %3375 = vmatpush1.msra.mxu0 0.0
    %3376 = vmatprep.subr.mxu0 0.0
    %3377 = vmatpush1.msra.mxu0 0.0
    %3378 = vmatprep.subr.mxu0 0.0
    %3379 = vmatpush1.msra.mxu0 0.0
    %3380 = vmatprep.subr.mxu0 0.0
    %3381 = vmatpush1.msra.mxu0 0.0
    %3382 = vmatprep.subr.mxu0 0.0
    %3383 = vmatpush1.msra.mxu0 0.0
    %3384 = vmatprep.subr.mxu0 0.0
    %3385 = vmatpush1.msra.mxu0 0.0
    %3386 = vmatprep.subr.mxu0 0.0
    %3387 = vmatpush1.msra.mxu0 0.0
    %3388 = vmatprep.subr.mxu0 0.0
    %3389 = vmatpush1.msra.mxu0 0.0
    %3390 = vmatprep.subr.mxu0 0.0
    %3391 = vmatpush1.msra.mxu0 0.0
    %3392 = vmatprep.subr.mxu0 0.0
    %3393 = vmatpush1.msra.mxu0 0.0
    %3394 = vmatprep.subr.mxu0 0.0
    %3395 = vmatpush1.msra.mxu0 0.0
    %3396 = vmatprep.subr.mxu0 0.0
    %3397 = vmatpush1.msra.mxu0 0.0
    %3398 = vmatprep.mubr.f32.mxu0 0.0
    %3399 = vmatmul.mubr.f32.gmra.mrb[0].mxu0 %v3332
    %v3400 = vpop.f32.mrb[0].mxu0
    %v3401 = vadd.f32 %v457, %v3400
    %v3402 = vpop.f32.mrb[0].mxu0
    %3403 = vdwg.mxu0
    %3405 = vrot.lane.b32.xlu0 %v3231, 96
    %v3406 = vpop.permute.xlu0 %3405
    %v3407 = vsel %vm777, %v3406, 0
    %3409 = vmatprep.subr.mxu0 0.0
    %3410 = vmatpush1.msra.mxu0 %v448
    %3411 = vmatprep.subr.mxu0 0.0
    %3412 = vmatpush1.msra.mxu0 %v449
    %3413 = vmatprep.subr.mxu0 0.0
    %3414 = vmatpush1.msra.mxu0 %v450
    %3415 = vmatprep.subr.mxu0 0.0
    %3416 = vmatpush1.msra.mxu0 %v451
    %3417 = vmatprep.subr.mxu0 0.0
    %3418 = vmatpush1.msra.mxu0 0.0
    %3419 = vmatprep.subr.mxu0 0.0
    %3420 = vmatpush1.msra.mxu0 0.0
    %3421 = vmatprep.subr.mxu0 0.0
    %3422 = vmatpush1.msra.mxu0 0.0
    %3423 = vmatprep.subr.mxu0 0.0
    %3424 = vmatpush1.msra.mxu0 0.0
    %3425 = vmatprep.subr.mxu0 0.0
    %3426 = vmatpush1.msra.mxu0 0.0
    %3427 = vmatprep.subr.mxu0 0.0
    %3428 = vmatpush1.msra.mxu0 0.0
    %3429 = vmatprep.subr.mxu0 0.0
    %3430 = vmatpush1.msra.mxu0 0.0
    %3431 = vmatprep.subr.mxu0 0.0
    %3432 = vmatpush1.msra.mxu0 0.0
    %3433 = vmatprep.subr.mxu0 0.0
    %3434 = vmatpush1.msra.mxu0 0.0
    %3435 = vmatprep.subr.mxu0 0.0
    %3436 = vmatpush1.msra.mxu0 0.0
    %3437 = vmatprep.subr.mxu0 0.0
    %3438 = vmatpush1.msra.mxu0 0.0
    %3439 = vmatprep.subr.mxu0 0.0
    %3440 = vmatpush1.msra.mxu0 0.0
    %3441 = vmatprep.subr.mxu0 0.0
    %3442 = vmatpush1.msra.mxu0 0.0
    %3443 = vmatprep.subr.mxu0 0.0
    %3444 = vmatpush1.msra.mxu0 0.0
    %3445 = vmatprep.subr.mxu0 0.0
    %3446 = vmatpush1.msra.mxu0 0.0
    %3447 = vmatprep.subr.mxu0 0.0
    %3448 = vmatpush1.msra.mxu0 0.0
    %3449 = vmatprep.subr.mxu0 0.0
    %3450 = vmatpush1.msra.mxu0 0.0
    %3451 = vmatprep.subr.mxu0 0.0
    %3452 = vmatpush1.msra.mxu0 0.0
    %3453 = vmatprep.subr.mxu0 0.0
    %3454 = vmatpush1.msra.mxu0 0.0
    %3455 = vmatprep.subr.mxu0 0.0
    %3456 = vmatpush1.msra.mxu0 0.0
    %3457 = vmatprep.subr.mxu0 0.0
    %3458 = vmatpush1.msra.mxu0 0.0
    %3459 = vmatprep.subr.mxu0 0.0
    %3460 = vmatpush1.msra.mxu0 0.0
    %3461 = vmatprep.subr.mxu0 0.0
    %3462 = vmatpush1.msra.mxu0 0.0
    %3463 = vmatprep.subr.mxu0 0.0
    %3464 = vmatpush1.msra.mxu0 0.0
    %3465 = vmatprep.subr.mxu0 0.0
    %3466 = vmatpush1.msra.mxu0 0.0
    %3467 = vmatprep.subr.mxu0 0.0
    %3468 = vmatpush1.msra.mxu0 0.0
    %3469 = vmatprep.subr.mxu0 0.0
    %3470 = vmatpush1.msra.mxu0 0.0
    %3471 = vmatprep.subr.mxu0 0.0
    %3472 = vmatpush1.msra.mxu0 0.0
    %3473 = vmatprep.mubr.f32.mxu0 0.0
    %3474 = vmatmul.mubr.f32.gmra.mrb[0].mxu0 %v3407
    %v3475 = vpop.f32.mrb[0].mxu0
    %v3476 = vadd.f32 %v471, %v3475
    %v3477 = vpop.f32.mrb[0].mxu0
    %3478 = vdwg.mxu0
    %v3479 = vadd.f32 %v3401, %v3476
    %v3480 = vxor.u32 %v3479, 2147483648
    %v3481 = vmul.f32 %v3480, 1.442695
    %v3482 = vpow.pop %v3481
    %v3483 = vadd.f32 %v3482, 1.0
    %v3484 = vrcp.pop %v3483
    %v3485 = vmul.f32 1.0, %v3484
    %3487 = vrot.lane.b32.xlu0 %v3476, 64
    %v3488 = vpop.permute.xlu0 %3487
    %v3490 = vmul.f32 %v3485, %v3488
    %3492 = vrot.lane.b32.xlu0 %v3490, 64
    %v3493 = vpop.permute.xlu0 %3492
    %v3495 = vadd.f32 %v3401, %v3493
    %v3496 = vtanh.pop %v3495
    %v3497 = vsub.f32 1.0, %v3485
    %3499 = vrot.lane.b32.xlu0 %v3496, 96
    %v3500 = vpop.permute.xlu0 %3499
    %v3502 = vmul.f32 %v3497, %v3500
    %v3503 = vmul.f32 %v3485, %v3231
    %v3504 = vadd.f32 %v3502, %v3503
    %v3505 = vld [vmem:[%s12] sm:$0xff]
    %v3506 = vld [vmem:[%s12 + $0x8] sm:$0xff]
    %v3507 = vld [vmem:[%s12 + $0x10] sm:$0xff]
    %v3508 = vld [vmem:[%s12 + $0x18] sm:$0xff]
    %v3509 = vld [vmem:[%s13] sm:$0x1]
    %v3511 = vlaneseq
    %v3512 = vshrl.u32 %v3511, 7
    %v3513 = vsub.s32 0, %v3512
    %v3514 = vrot.slane %v3509, %v3513
    %3517 = vrot.lane.b32.xlu0 %v3504, 96
    %v3518 = vpop.permute.xlu0 %3517
    %v3519 = vsel %vm777, %v3518, 0
    %3521 = vmatprep.subr.mxu0 0.0
    %3522 = vmatpush1.msra.mxu0 %v3505
    %3523 = vmatprep.subr.mxu0 0.0
    %3524 = vmatpush1.msra.mxu0 %v3506
    %3525 = vmatprep.subr.mxu0 0.0
    %3526 = vmatpush1.msra.mxu0 %v3507
    %3527 = vmatprep.subr.mxu0 0.0
    %3528 = vmatpush1.msra.mxu0 %v3508
    %3529 = vmatprep.subr.mxu0 0.0
    %3530 = vmatpush1.msra.mxu0 0.0
    %3531 = vmatprep.subr.mxu0 0.0
    %3532 = vmatpush1.msra.mxu0 0.0
    %3533 = vmatprep.subr.mxu0 0.0
    %3534 = vmatpush1.msra.mxu0 0.0
    %3535 = vmatprep.subr.mxu0 0.0
    %3536 = vmatpush1.msra.mxu0 0.0
    %3537 = vmatprep.subr.mxu0 0.0
    %3538 = vmatpush1.msra.mxu0 0.0
    %3539 = vmatprep.subr.mxu0 0.0
    %3540 = vmatpush1.msra.mxu0 0.0
    %3541 = vmatprep.subr.mxu0 0.0
    %3542 = vmatpush1.msra.mxu0 0.0
    %3543 = vmatprep.subr.mxu0 0.0
    %3544 = vmatpush1.msra.mxu0 0.0
    %3545 = vmatprep.subr.mxu0 0.0
    %3546 = vmatpush1.msra.mxu0 0.0
    %3547 = vmatprep.subr.mxu0 0.0
    %3548 = vmatpush1.msra.mxu0 0.0
    %3549 = vmatprep.subr.mxu0 0.0
    %3550 = vmatpush1.msra.mxu0 0.0
    %3551 = vmatprep.subr.mxu0 0.0
    %3552 = vmatpush1.msra.mxu0 0.0
    %3553 = vmatprep.subr.mxu0 0.0
    %3554 = vmatpush1.msra.mxu0 0.0
    %3555 = vmatprep.subr.mxu0 0.0
    %3556 = vmatpush1.msra.mxu0 0.0
    %3557 = vmatprep.subr.mxu0 0.0
    %3558 = vmatpush1.msra.mxu0 0.0
    %3559 = vmatprep.subr.mxu0 0.0
    %3560 = vmatpush1.msra.mxu0 0.0
    %3561 = vmatprep.subr.mxu0 0.0
    %3562 = vmatpush1.msra.mxu0 0.0
    %3563 = vmatprep.subr.mxu0 0.0
    %3564 = vmatpush1.msra.mxu0 0.0
    %3565 = vmatprep.subr.mxu0 0.0
    %3566 = vmatpush1.msra.mxu0 0.0
    %3567 = vmatprep.subr.mxu0 0.0
    %3568 = vmatpush1.msra.mxu0 0.0
    %3569 = vmatprep.subr.mxu0 0.0
    %3570 = vmatpush1.msra.mxu0 0.0
    %3571 = vmatprep.subr.mxu0 0.0
    %3572 = vmatpush1.msra.mxu0 0.0
    %3573 = vmatprep.subr.mxu0 0.0
    %3574 = vmatpush1.msra.mxu0 0.0
    %3575 = vmatprep.subr.mxu0 0.0
    %3576 = vmatpush1.msra.mxu0 0.0
    %3577 = vmatprep.subr.mxu0 0.0
    %3578 = vmatpush1.msra.mxu0 0.0
    %3579 = vmatprep.subr.mxu0 0.0
    %3580 = vmatpush1.msra.mxu0 0.0
    %3581 = vmatprep.subr.mxu0 0.0
    %3582 = vmatpush1.msra.mxu0 0.0
    %3583 = vmatprep.subr.mxu0 0.0
    %3584 = vmatpush1.msra.mxu0 0.0
    %3585 = vmatprep.mubr.f32.mxu0 0.0
    %3586 = vmatmul.mubr.f32.gmra.mrb[0].mxu0 %v3519
    %v3587 = vpop.f32.mrb[0].mxu0
    %v3588 = vadd.f32 %v3514, %v3587
    %v3589 = vpop.f32.mrb[0].mxu0
    %3590 = vdwg.mxu0
    %vm3591 = vcmask 74752
    %3592 = vst.msk [vmem:[#allocation3] sm:$0x3] %vm3591, %v3588
    // Predicated region
    $region58: #{cnn_gru_forward.1} parent=1 // pred_check
      _
    $region59: #{cnn_gru_forward.1} parent=1 // pred_check_branch
      %3594 = sbr.rel (0) target = $region61
    $region60: #{cnn_gru_forward.1} parent=1 // pred_region
      %s3596 = ssub.s32 32, 32
      %3597 = vsyncadd [#allocation4], %s3596
      %s3599 = sshll.u32 [#allocation3], 4
      %s3600 = int_to_ptr.vmem [resolvable:$true] %s3599
      %3602 = dma.vmem_to_hbm [thread:$0]  %s3600, 32, %s14, [#allocation4]
    $region61: #{cnn_gru_forward.1} parent=1 // pred_fallthru
      _
    // Predicated region
    $region62: #{cnn_gru_forward.1} parent=1 // pred_check
      _
    $region63: #{cnn_gru_forward.1} parent=1 // pred_check_branch
      %3604 = sbr.rel (0) target = $region65
    $region64: #{cnn_gru_forward.1} parent=1 // pred_region
      %3605 = dma.done [#allocation4], 32
    $region65: #{cnn_gru_forward.1} parent=1 // pred_fallthru
      _
    %3606 = vsyncpa [#allocation4], 1

</llo_original>
